<compile_context>
chip_gen: v7x
topology: tpu7x:2x2x1
jax: 0.10.0
libtpu: 0.0.40
codegen_flags: <defaults>
</compile_context>

<pallas_src>
import jax
import jax.numpy as jnp
from jax import lax
from jax.experimental import pallas as pl
from jax.experimental.pallas import tpu as pltpu

# compat shim: newer jax exposes pltpu.CompilerParams, older pltpu.TPUCompilerParams
_CP = getattr(pltpu, "CompilerParams", None) or getattr(pltpu, "TPUCompilerParams", None)

_KH = _KW = 5


def _selector(n_out, n_in, parity):
    """(n_out, n_in) 0/1 matrix: row m selects column 2*m + parity (exact stride-2 compaction)."""
    r = lax.broadcasted_iota(jnp.int32, (n_out, n_in), 0)
    c = lax.broadcasted_iota(jnp.int32, (n_out, n_in), 1)
    return (c == 2 * r + parity).astype(jnp.float32)


def _lenet_kernel(x_ref, w1_ref, b1_ref, w2_ref, b2_ref,
                  wf1_ref, bf1_ref, wf2_ref, bf2_ref, wf3_ref, bf3_ref,
                  out_ref,
                  s1_ref, s2_ref, c1_ref, c2_ref, fl_ref):
    f32, bf16 = jnp.float32, jnp.bfloat16

    w1 = w1_ref[...]            # (75, 6)   bf16, rows ordered (i, j, c)
    b1 = b1_ref[...]            # (1, 6)    f32
    w2 = w2_ref[...]            # (150, 16) bf16
    b2 = b2_ref[...]            # (1, 16)   f32

    sel1_e, sel1_o = _selector(14, 28, 0), _selector(14, 28, 1)
    sel2_e, sel2_o = _selector(5, 10, 0), _selector(5, 10, 1)

    # ---- stage 1: conv1(5x5, 3->6) + ReLU + 2x2 maxpool, one pooled row per step
    def conv1_row(h):
        # im2col block for conv-output row h: (28, 75), built in a VMEM scratch
        for k in range(_KH * _KW):
            i, j = divmod(k, _KW)
            c1_ref[:, 3 * k:3 * k + 3] = x_ref[0, h + i, j:j + 28, :]
        lhs = c1_ref[...].astype(bf16)
        y = jnp.dot(lhs, w1, preferred_element_type=f32) + b1            # (28, 6)
        return jnp.maximum(y, 0.0)

    def body1(m, carry):
        yh = jnp.maximum(conv1_row(2 * m), conv1_row(2 * m + 1))          # max over h-pair
        p = jnp.maximum(jnp.dot(sel1_e, yh, preferred_element_type=f32),
                        jnp.dot(sel1_o, yh, preferred_element_type=f32))  # (14, 6) max over w-pair
        s1_ref[m] = p
        return carry

    lax.fori_loop(0, 14, body1, 0)

    # ---- stage 2: conv2(5x5, 6->16) + ReLU + 2x2 maxpool
    def conv2_row(h):
        for k in range(_KH * _KW):
            i, j = divmod(k, _KW)
            c2_ref[:, 6 * k:6 * k + 6] = s1_ref[h + i, j:j + 10, :]
        lhs = c2_ref[...].astype(bf16)                                    # (10, 150)
        y = jnp.dot(lhs, w2, preferred_element_type=f32) + b2             # (10, 16)
        return jnp.maximum(y, 0.0)

    def body2(m, carry):
        yh = jnp.maximum(conv2_row(2 * m), conv2_row(2 * m + 1))
        p = jnp.maximum(jnp.dot(sel2_e, yh, preferred_element_type=f32),
                        jnp.dot(sel2_o, yh, preferred_element_type=f32))  # (5, 16)
        s2_ref[m] = p
        return carry

    lax.fori_loop(0, 5, body2, 0)

    # ---- stage 3: flatten in (h, w, c) order (fc1 weights pre-permuted to match) + fc1/fc2/fc3
    for k in range(25):
        h, w = divmod(k, 5)
        fl_ref[:, 16 * k:16 * k + 16] = s2_ref[h, w:w + 1, :]
    flat = fl_ref[...]                                                    # (1, 400)

    z = jnp.dot(flat.astype(bf16), wf1_ref[...], preferred_element_type=f32) + bf1_ref[...]
    z = jnp.maximum(z, 0.0)                                               # (1, 128)
    z = jnp.dot(z.astype(bf16), wf2_ref[...], preferred_element_type=f32) + bf2_ref[...]
    z = jnp.maximum(z, 0.0)                                               # (1, 128)
    z = jnp.dot(z.astype(bf16), wf3_ref[...], preferred_element_type=f32) + bf3_ref[...]
    z = jnp.maximum(z, 0.0)                                               # (1, 10)  relu5 (per spec)
    out_ref[0] = z


def lenet_forward(x_nchw, prep):
    B = x_nchw.shape[0]
    x = jnp.transpose(x_nchw, (0, 2, 3, 1))   # NHWC: conv windows become contiguous VMEM slices
    zero2 = lambda b: (0, 0)
    out = pl.pallas_call(
        _lenet_kernel,
        out_shape=jax.ShapeDtypeStruct((B, 1, 10), jnp.float32),
        grid=(B,),
        in_specs=[
            pl.BlockSpec((1, 32, 32, 3), lambda b: (b, 0, 0, 0)),
            pl.BlockSpec((75, 6), zero2),
            pl.BlockSpec((1, 6), zero2),
            pl.BlockSpec((150, 16), zero2),
            pl.BlockSpec((1, 16), zero2),
            pl.BlockSpec((400, 128), zero2),
            pl.BlockSpec((1, 128), zero2),
            pl.BlockSpec((128, 128), zero2),
            pl.BlockSpec((1, 128), zero2),
            pl.BlockSpec((128, 10), zero2),
            pl.BlockSpec((1, 10), zero2),
        ],
        out_specs=pl.BlockSpec((1, 1, 10), lambda b: (b, 0, 0)),
        scratch_shapes=[
            pltpu.VMEM((14, 14, 6), jnp.float32),    # pool1 output (h', w', c)
            pltpu.VMEM((5, 5, 16), jnp.float32),     # pool2 output (h', w', c)
            pltpu.VMEM((28, 75), jnp.float32),       # conv1 im2col row block
            pltpu.VMEM((10, 150), jnp.float32),      # conv2 im2col row block
            pltpu.VMEM((1, 400), jnp.float32),       # flattened features for fc1
        ],
        compiler_params=(_CP(dimension_semantics=("parallel",),
                             vmem_limit_bytes=32 * 1024 * 1024)
                         if _CP is not None else None),
    )(x, prep["w1"], prep["b1"], prep["w2"], prep["b2"],
      prep["wf1"], prep["bf1"], prep["wf2"], prep["bf2"],
      prep["wf3"], prep["bf3"])
    return out[:, 0, :]


def prepare_params(p):
    """One-time weight prep: reorder to the kernel's im2col / flatten ordering,
    transpose, zero-pad FC dims to lane-dense 128, pre-cast GEMM weights to bf16."""
    def conv_w(w):                       # (O, C, kh, kw) -> (kh*kw*C, O), rows ordered (i, j, c)
        O, C, kh, kw = w.shape
        return w.transpose(2, 3, 1, 0).reshape(kh * kw * C, O).astype(jnp.bfloat16)

    # fc1 columns in torch are (c, h, w); kernel flattens pool2 as (h, w, c).
    wf1 = p["fc1_w"].reshape(120, 16, 5, 5).transpose(0, 2, 3, 1).reshape(120, 400).T
    wf1 = jnp.pad(wf1, ((0, 0), (0, 8))).astype(jnp.bfloat16)                 # (400, 128)
    wf2 = jnp.pad(p["fc2_w"].T, ((0, 8), (0, 44))).astype(jnp.bfloat16)        # (128, 128)
    wf3 = jnp.pad(p["fc3_w"].T, ((0, 44), (0, 0))).astype(jnp.bfloat16)        # (128, 10)
    return {
        "w1": conv_w(p["conv1_w"]),
        "b1": p["conv1_b"].reshape(1, 6).astype(jnp.float32),
        "w2": conv_w(p["conv2_w"]),
        "b2": p["conv2_b"].reshape(1, 16).astype(jnp.float32),
        "wf1": wf1,
        "bf1": jnp.pad(p["fc1_b"], (0, 8)).reshape(1, 128).astype(jnp.float32),
        "wf2": wf2,
        "bf2": jnp.pad(p["fc2_b"], (0, 44)).reshape(1, 128).astype(jnp.float32),
        "wf3": wf3,
        "bf3": p["fc3_b"].reshape(1, 10).astype(jnp.float32),
    }


def lenet_reference(x, p):
    """Pure-XLA f32 reference matching the PyTorch module (incl. the final ReLU)."""
    def conv(x, w, b):
        y = lax.conv_general_dilated(x, w, (1, 1), "VALID",
                                     dimension_numbers=("NCHW", "OIHW", "NCHW"))
        return jax.nn.relu(y + b[None, :, None, None])

    def pool(x):
        return lax.reduce_window(x, -jnp.inf, lax.max, (1, 1, 2, 2), (1, 1, 2, 2), "VALID")

    y = pool(conv(x, p["conv1_w"], p["conv1_b"]))
    y = pool(conv(y, p["conv2_w"], p["conv2_b"]))
    y = y.reshape(y.shape[0], -1)
    y = jax.nn.relu(y @ p["fc1_w"].T + p["fc1_b"])
    y = jax.nn.relu(y @ p["fc2_w"].T + p["fc2_b"])
    y = jax.nn.relu(y @ p["fc3_w"].T + p["fc3_b"])
    return y


def init_params(key):
    """Deterministic init mimicking PyTorch's uniform(-1/sqrt(fan_in), 1/sqrt(fan_in))."""
    def uniform(k, shape, fan_in):
        bound = 1.0 / jnp.sqrt(jnp.array(fan_in, jnp.float32))
        return jax.random.uniform(k, shape, jnp.float32, -bound, bound)

    keys = jax.random.split(key, 10)
    return {
        "conv1_w": uniform(keys[0], (6, 3, 5, 5), 3 * 5 * 5),
        "conv1_b": uniform(keys[1], (6,), 3 * 5 * 5),
        "conv2_w": uniform(keys[2], (16, 6, 5, 5), 6 * 5 * 5),
        "conv2_b": uniform(keys[3], (16,), 6 * 5 * 5),
        "fc1_w": uniform(keys[4], (120, 400), 400),
        "fc1_b": uniform(keys[5], (120,), 400),
        "fc2_w": uniform(keys[6], (84, 120), 120),
        "fc2_b": uniform(keys[7], (84,), 120),
        "fc3_w": uniform(keys[8], (10, 84), 84),
        "fc3_b": uniform(keys[9], (10,), 84),
    }


if __name__ == "__main__":
    key = jax.random.PRNGKey(0)
    k_x, k_p = jax.random.split(key)
    # fc1 expects 400 = 16*5*5 features -> 3-channel 32x32 input.
    x = jax.random.normal(k_x, (2, 3, 32, 32), jnp.float32)
    params = init_params(k_p)
    prep = prepare_params(params)

    fwd = jax.jit(lenet_forward)
    out = fwd(x, prep)
    jax.block_until_ready(out)
    assert out.shape == (2, 10) and out.dtype == jnp.float32

    ref = lenet_reference(x, params)
    assert jnp.allclose(out, ref, atol=5e-2, rtol=5e-2), (
        f"max abs err {jnp.max(jnp.abs(out - ref))}")
    print("KERNEL_OK")
</pallas_src>

<mosaic_0001>
module attributes {stable_mosaic.version = 11 : i64} {
  func.func @_lenet_kernel(%arg0: i32, %arg1: memref<1x32x32x3xf32, #tpu.memory_space<vmem>>, %arg2: memref<75x6xbf16, #tpu.memory_space<vmem>>, %arg3: memref<1x6xf32, #tpu.memory_space<vmem>>, %arg4: memref<150x16xbf16, #tpu.memory_space<vmem>>, %arg5: memref<1x16xf32, #tpu.memory_space<vmem>>, %arg6: memref<400x128xbf16, #tpu.memory_space<vmem>>, %arg7: memref<1x128xf32, #tpu.memory_space<vmem>>, %arg8: memref<128x128xbf16, #tpu.memory_space<vmem>>, %arg9: memref<1x128xf32, #tpu.memory_space<vmem>>, %arg10: memref<128x10xbf16, #tpu.memory_space<vmem>>, %arg11: memref<1x10xf32, #tpu.memory_space<vmem>>, %arg12: memref<1x1x10xf32, #tpu.memory_space<vmem>>, %arg13: memref<14x14x6xf32, #tpu.memory_space<vmem>>, %arg14: memref<5x5x16xf32, #tpu.memory_space<vmem>>, %arg15: memref<28x75xf32, #tpu.memory_space<vmem>>, %arg16: memref<10x150xf32, #tpu.memory_space<vmem>>, %arg17: memref<1x400xf32, #tpu.memory_space<vmem>>) attributes {dimension_semantics = [#tpu.dimension_semantics<parallel>], iteration_bounds = array<i64: 2>, scalar_prefetch = 0 : i64, scratch_operands = 5 : i64, tpu.core_type = #tpu.core_type<tc>, window_params = [{transform_indices = @transform_0, window_bounds = array<i64: 1, 32, 32, 3>}, {pipeline_mode = #tpu.pipeline_mode<synchronous>, transform_indices = @transform_1, window_bounds = array<i64: 75, 6>}, {pipeline_mode = #tpu.pipeline_mode<synchronous>, transform_indices = @transform_2, window_bounds = array<i64: 1, 6>}, {pipeline_mode = #tpu.pipeline_mode<synchronous>, transform_indices = @transform_3, window_bounds = array<i64: 150, 16>}, {pipeline_mode = #tpu.pipeline_mode<synchronous>, transform_indices = @transform_4, window_bounds = array<i64: 1, 16>}, {pipeline_mode = #tpu.pipeline_mode<synchronous>, transform_indices = @transform_5, window_bounds = array<i64: 400, 128>}, {pipeline_mode = #tpu.pipeline_mode<synchronous>, transform_indices = @transform_6, window_bounds = array<i64: 1, 128>}, {pipeline_mode = #tpu.pipeline_mode<synchronous>, transform_indices = @transform_7, window_bounds = array<i64: 128, 128>}, {pipeline_mode = #tpu.pipeline_mode<synchronous>, transform_indices = @transform_8, window_bounds = array<i64: 1, 128>}, {pipeline_mode = #tpu.pipeline_mode<synchronous>, transform_indices = @transform_9, window_bounds = array<i64: 128, 10>}, {pipeline_mode = #tpu.pipeline_mode<synchronous>, transform_indices = @transform_10, window_bounds = array<i64: 1, 10>}, {transform_indices = @transform_11, window_bounds = array<i64: 1, 1, 10>}]} {
    %c0 = arith.constant 0 : index
    %c0_0 = arith.constant 0 : index
    %0 = vector.load %arg2[%c0, %c0_0] : memref<75x6xbf16, #tpu.memory_space<vmem>>, vector<75x6xbf16>
    %c0_1 = arith.constant 0 : index
    %c0_2 = arith.constant 0 : index
    %1 = vector.load %arg3[%c0_1, %c0_2] : memref<1x6xf32, #tpu.memory_space<vmem>>, vector<1x6xf32>
    %c0_3 = arith.constant 0 : index
    %c0_4 = arith.constant 0 : index
    %2 = vector.load %arg4[%c0_3, %c0_4] : memref<150x16xbf16, #tpu.memory_space<vmem>>, vector<150x16xbf16>
    %c0_5 = arith.constant 0 : index
    %c0_6 = arith.constant 0 : index
    %3 = vector.load %arg5[%c0_5, %c0_6] : memref<1x16xf32, #tpu.memory_space<vmem>>, vector<1x16xf32>
    %4 = tpu.iota {dimensions = array<i32: 0>} : vector<14x28xi32>
    %5 = tpu.iota {dimensions = array<i32: 1>} : vector<14x28xi32>
    %c2_i32 = arith.constant 2 : i32
    %6 = vector.broadcast %c2_i32 : i32 to vector<14x28xi32>
    %7 = arith.muli %6, %4 : vector<14x28xi32>
    %c0_i32 = arith.constant 0 : i32
    %8 = vector.broadcast %c0_i32 : i32 to vector<14x28xi32>
    %9 = arith.addi %7, %8 : vector<14x28xi32>
    %10 = arith.cmpi eq, %5, %9 : vector<14x28xi32>
    %11 = arith.extui %10 : vector<14x28xi1> to vector<14x28xi32>
    %12 = arith.sitofp %11 : vector<14x28xi32> to vector<14x28xf32>
    %13 = tpu.iota {dimensions = array<i32: 0>} : vector<14x28xi32>
    %14 = tpu.iota {dimensions = array<i32: 1>} : vector<14x28xi32>
    %c2_i32_7 = arith.constant 2 : i32
    %15 = vector.broadcast %c2_i32_7 : i32 to vector<14x28xi32>
    %16 = arith.muli %15, %13 : vector<14x28xi32>
    %c1_i32 = arith.constant 1 : i32
    %17 = vector.broadcast %c1_i32 : i32 to vector<14x28xi32>
    %18 = arith.addi %16, %17 : vector<14x28xi32>
    %19 = arith.cmpi eq, %14, %18 : vector<14x28xi32>
    %20 = arith.extui %19 : vector<14x28xi1> to vector<14x28xi32>
    %21 = arith.sitofp %20 : vector<14x28xi32> to vector<14x28xf32>
    %22 = tpu.iota {dimensions = array<i32: 0>} : vector<5x10xi32>
    %23 = tpu.iota {dimensions = array<i32: 1>} : vector<5x10xi32>
    %c2_i32_8 = arith.constant 2 : i32
    %24 = vector.broadcast %c2_i32_8 : i32 to vector<5x10xi32>
    %25 = arith.muli %24, %22 : vector<5x10xi32>
    %c0_i32_9 = arith.constant 0 : i32
    %26 = vector.broadcast %c0_i32_9 : i32 to vector<5x10xi32>
    %27 = arith.addi %25, %26 : vector<5x10xi32>
    %28 = arith.cmpi eq, %23, %27 : vector<5x10xi32>
    %29 = arith.extui %28 : vector<5x10xi1> to vector<5x10xi32>
    %30 = arith.sitofp %29 : vector<5x10xi32> to vector<5x10xf32>
    %31 = tpu.iota {dimensions = array<i32: 0>} : vector<5x10xi32>
    %32 = tpu.iota {dimensions = array<i32: 1>} : vector<5x10xi32>
    %c2_i32_10 = arith.constant 2 : i32
    %33 = vector.broadcast %c2_i32_10 : i32 to vector<5x10xi32>
    %34 = arith.muli %33, %31 : vector<5x10xi32>
    %c1_i32_11 = arith.constant 1 : i32
    %35 = vector.broadcast %c1_i32_11 : i32 to vector<5x10xi32>
    %36 = arith.addi %34, %35 : vector<5x10xi32>
    %37 = arith.cmpi eq, %32, %36 : vector<5x10xi32>
    %38 = arith.extui %37 : vector<5x10xi1> to vector<5x10xi32>
    %39 = arith.sitofp %38 : vector<5x10xi32> to vector<5x10xf32>
    %c0_i32_12 = arith.constant 0 : i32
    %c14_i32 = arith.constant 14 : i32
    %40 = arith.addi %c0_i32_12, %c14_i32 : i32
    %c1_i32_13 = arith.constant 1 : i32
    scf.for %arg18 = %c0_i32_12 to %40 step %c1_i32_13  : i32 {
      %c2_i32_137 = arith.constant 2 : i32
      %142 = arith.muli %c2_i32_137, %arg18 : i32
      %c0_i32_138 = arith.constant 0 : i32
      %143 = arith.addi %142, %c0_i32_138 : i32
      %c0_139 = arith.constant 0 : index
      %144 = arith.index_cast %143 : i32 to index
      %c0_140 = arith.constant 0 : index
      %c0_141 = arith.constant 0 : index
      %145 = vector.load %arg1[%c0_139, %144, %c0_140, %c0_141] : memref<1x32x32x3xf32, #tpu.memory_space<vmem>>, vector<1x1x28x3xf32>
      %146 = vector.shape_cast %145 : vector<1x1x28x3xf32> to vector<28x3xf32>
      %c0_142 = arith.constant 0 : index
      %c0_143 = arith.constant 0 : index
      %147 = vector.load %arg15[%c0_142, %c0_143] : memref<28x75xf32, #tpu.memory_space<vmem>>, vector<28x3xf32>
      tpu.vector_store %arg15[%c0_142, %c0_143], %146 {strides = array<i32>} : memref<28x75xf32, #tpu.memory_space<vmem>>, vector<28x3xf32>,
      %c0_i32_144 = arith.constant 0 : i32
      %148 = arith.addi %142, %c0_i32_144 : i32
      %c0_145 = arith.constant 0 : index
      %149 = arith.index_cast %148 : i32 to index
      %c1_146 = arith.constant 1 : index
      %c0_147 = arith.constant 0 : index
      %150 = vector.load %arg1[%c0_145, %149, %c1_146, %c0_147] : memref<1x32x32x3xf32, #tpu.memory_space<vmem>>, vector<1x1x28x3xf32>
      %151 = vector.shape_cast %150 : vector<1x1x28x3xf32> to vector<28x3xf32>
      %c0_148 = arith.constant 0 : index
      %c3_149 = arith.constant 3 : index
      %152 = vector.load %arg15[%c0_148, %c3_149] : memref<28x75xf32, #tpu.memory_space<vmem>>, vector<28x3xf32>
      tpu.vector_store %arg15[%c0_148, %c3_149], %151 {strides = array<i32>} : memref<28x75xf32, #tpu.memory_space<vmem>>, vector<28x3xf32>,
      %c0_i32_150 = arith.constant 0 : i32
      %153 = arith.addi %142, %c0_i32_150 : i32
      %c0_151 = arith.constant 0 : index
      %154 = arith.index_cast %153 : i32 to index
      %c2_152 = arith.constant 2 : index
      %c0_153 = arith.constant 0 : index
      %155 = vector.load %arg1[%c0_151, %154, %c2_152, %c0_153] : memref<1x32x32x3xf32, #tpu.memory_space<vmem>>, vector<1x1x28x3xf32>
      %156 = vector.shape_cast %155 : vector<1x1x28x3xf32> to vector<28x3xf32>
      %c0_154 = arith.constant 0 : index
      %c6 = arith.constant 6 : index
      %157 = vector.load %arg15[%c0_154, %c6] : memref<28x75xf32, #tpu.memory_space<vmem>>, vector<28x3xf32>
      tpu.vector_store %arg15[%c0_154, %c6], %156 {strides = array<i32>} : memref<28x75xf32, #tpu.memory_space<vmem>>, vector<28x3xf32>,
      %c0_i32_155 = arith.constant 0 : i32
      %158 = arith.addi %142, %c0_i32_155 : i32
      %c0_156 = arith.constant 0 : index
      %159 = arith.index_cast %158 : i32 to index
      %c3_157 = arith.constant 3 : index
      %c0_158 = arith.constant 0 : index
      %160 = vector.load %arg1[%c0_156, %159, %c3_157, %c0_158] : memref<1x32x32x3xf32, #tpu.memory_space<vmem>>, vector<1x1x28x3xf32>
      %161 = vector.shape_cast %160 : vector<1x1x28x3xf32> to vector<28x3xf32>
      %c0_159 = arith.constant 0 : index
      %c9 = arith.constant 9 : index
      %162 = vector.load %arg15[%c0_159, %c9] : memref<28x75xf32, #tpu.memory_space<vmem>>, vector<28x3xf32>
      tpu.vector_store %arg15[%c0_159, %c9], %161 {strides = array<i32>} : memref<28x75xf32, #tpu.memory_space<vmem>>, vector<28x3xf32>,
      %c0_i32_160 = arith.constant 0 : i32
      %163 = arith.addi %142, %c0_i32_160 : i32
      %c0_161 = arith.constant 0 : index
      %164 = arith.index_cast %163 : i32 to index
      %c4_162 = arith.constant 4 : index
      %c0_163 = arith.constant 0 : index
      %165 = vector.load %arg1[%c0_161, %164, %c4_162, %c0_163] : memref<1x32x32x3xf32, #tpu.memory_space<vmem>>, vector<1x1x28x3xf32>
      %166 = vector.shape_cast %165 : vector<1x1x28x3xf32> to vector<28x3xf32>
      %c0_164 = arith.constant 0 : index
      %c12 = arith.constant 12 : index
      %167 = vector.load %arg15[%c0_164, %c12] : memref<28x75xf32, #tpu.memory_space<vmem>>, vector<28x3xf32>
      tpu.vector_store %arg15[%c0_164, %c12], %166 {strides = array<i32>} : memref<28x75xf32, #tpu.memory_space<vmem>>, vector<28x3xf32>,
      %c1_i32_165 = arith.constant 1 : i32
      %168 = arith.addi %142, %c1_i32_165 : i32
      %c0_166 = arith.constant 0 : index
      %169 = arith.index_cast %168 : i32 to index
      %c0_167 = arith.constant 0 : index
      %c0_168 = arith.constant 0 : index
      %170 = vector.load %arg1[%c0_166, %169, %c0_167, %c0_168] : memref<1x32x32x3xf32, #tpu.memory_space<vmem>>, vector<1x1x28x3xf32>
      %171 = vector.shape_cast %170 : vector<1x1x28x3xf32> to vector<28x3xf32>
      %c0_169 = arith.constant 0 : index
      %c15 = arith.constant 15 : index
      %172 = vector.load %arg15[%c0_169, %c15] : memref<28x75xf32, #tpu.memory_space<vmem>>, vector<28x3xf32>
      tpu.vector_store %arg15[%c0_169, %c15], %171 {strides = array<i32>} : memref<28x75xf32, #tpu.memory_space<vmem>>, vector<28x3xf32>,
      %c1_i32_170 = arith.constant 1 : i32
      %173 = arith.addi %142, %c1_i32_170 : i32
      %c0_171 = arith.constant 0 : index
      %174 = arith.index_cast %173 : i32 to index
      %c1_172 = arith.constant 1 : index
      %c0_173 = arith.constant 0 : index
      %175 = vector.load %arg1[%c0_171, %174, %c1_172, %c0_173] : memref<1x32x32x3xf32, #tpu.memory_space<vmem>>, vector<1x1x28x3xf32>
      %176 = vector.shape_cast %175 : vector<1x1x28x3xf32> to vector<28x3xf32>
      %c0_174 = arith.constant 0 : index
      %c18 = arith.constant 18 : index
      %177 = vector.load %arg15[%c0_174, %c18] : memref<28x75xf32, #tpu.memory_space<vmem>>, vector<28x3xf32>
      tpu.vector_store %arg15[%c0_174, %c18], %176 {strides = array<i32>} : memref<28x75xf32, #tpu.memory_space<vmem>>, vector<28x3xf32>,
      %c1_i32_175 = arith.constant 1 : i32
      %178 = arith.addi %142, %c1_i32_175 : i32
      %c0_176 = arith.constant 0 : index
      %179 = arith.index_cast %178 : i32 to index
      %c2_177 = arith.constant 2 : index
      %c0_178 = arith.constant 0 : index
      %180 = vector.load %arg1[%c0_176, %179, %c2_177, %c0_178] : memref<1x32x32x3xf32, #tpu.memory_space<vmem>>, vector<1x1x28x3xf32>
      %181 = vector.shape_cast %180 : vector<1x1x28x3xf32> to vector<28x3xf32>
      %c0_179 = arith.constant 0 : index
      %c21 = arith.constant 21 : index
      %182 = vector.load %arg15[%c0_179, %c21] : memref<28x75xf32, #tpu.memory_space<vmem>>, vector<28x3xf32>
      tpu.vector_store %arg15[%c0_179, %c21], %181 {strides = array<i32>} : memref<28x75xf32, #tpu.memory_space<vmem>>, vector<28x3xf32>,
      %c1_i32_180 = arith.constant 1 : i32
      %183 = arith.addi %142, %c1_i32_180 : i32
      %c0_181 = arith.constant 0 : index
      %184 = arith.index_cast %183 : i32 to index
      %c3_182 = arith.constant 3 : index
      %c0_183 = arith.constant 0 : index
      %185 = vector.load %arg1[%c0_181, %184, %c3_182, %c0_183] : memref<1x32x32x3xf32, #tpu.memory_space<vmem>>, vector<1x1x28x3xf32>
      %186 = vector.shape_cast %185 : vector<1x1x28x3xf32> to vector<28x3xf32>
      %c0_184 = arith.constant 0 : index
      %c24 = arith.constant 24 : index
      %187 = vector.load %arg15[%c0_184, %c24] : memref<28x75xf32, #tpu.memory_space<vmem>>, vector<28x3xf32>
      tpu.vector_store %arg15[%c0_184, %c24], %186 {strides = array<i32>} : memref<28x75xf32, #tpu.memory_space<vmem>>, vector<28x3xf32>,
      %c1_i32_185 = arith.constant 1 : i32
      %188 = arith.addi %142, %c1_i32_185 : i32
      %c0_186 = arith.constant 0 : index
      %189 = arith.index_cast %188 : i32 to index
      %c4_187 = arith.constant 4 : index
      %c0_188 = arith.constant 0 : index
      %190 = vector.load %arg1[%c0_186, %189, %c4_187, %c0_188] : memref<1x32x32x3xf32, #tpu.memory_space<vmem>>, vector<1x1x28x3xf32>
      %191 = vector.shape_cast %190 : vector<1x1x28x3xf32> to vector<28x3xf32>
      %c0_189 = arith.constant 0 : index
      %c27 = arith.constant 27 : index
      %192 = vector.load %arg15[%c0_189, %c27] : memref<28x75xf32, #tpu.memory_space<vmem>>, vector<28x3xf32>
      tpu.vector_store %arg15[%c0_189, %c27], %191 {strides = array<i32>} : memref<28x75xf32, #tpu.memory_space<vmem>>, vector<28x3xf32>,
      %c2_i32_190 = arith.constant 2 : i32
      %193 = arith.addi %142, %c2_i32_190 : i32
      %c0_191 = arith.constant 0 : index
      %194 = arith.index_cast %193 : i32 to index
      %c0_192 = arith.constant 0 : index
      %c0_193 = arith.constant 0 : index
      %195 = vector.load %arg1[%c0_191, %194, %c0_192, %c0_193] : memref<1x32x32x3xf32, #tpu.memory_space<vmem>>, vector<1x1x28x3xf32>
      %196 = vector.shape_cast %195 : vector<1x1x28x3xf32> to vector<28x3xf32>
      %c0_194 = arith.constant 0 : index
      %c30 = arith.constant 30 : index
      %197 = vector.load %arg15[%c0_194, %c30] : memref<28x75xf32, #tpu.memory_space<vmem>>, vector<28x3xf32>
      tpu.vector_store %arg15[%c0_194, %c30], %196 {strides = array<i32>} : memref<28x75xf32, #tpu.memory_space<vmem>>, vector<28x3xf32>,
      %c2_i32_195 = arith.constant 2 : i32
      %198 = arith.addi %142, %c2_i32_195 : i32
      %c0_196 = arith.constant 0 : index
      %199 = arith.index_cast %198 : i32 to index
      %c1_197 = arith.constant 1 : index
      %c0_198 = arith.constant 0 : index
      %200 = vector.load %arg1[%c0_196, %199, %c1_197, %c0_198] : memref<1x32x32x3xf32, #tpu.memory_space<vmem>>, vector<1x1x28x3xf32>
      %201 = vector.shape_cast %200 : vector<1x1x28x3xf32> to vector<28x3xf32>
      %c0_199 = arith.constant 0 : index
      %c33 = arith.constant 33 : index
      %202 = vector.load %arg15[%c0_199, %c33] : memref<28x75xf32, #tpu.memory_space<vmem>>, vector<28x3xf32>
      tpu.vector_store %arg15[%c0_199, %c33], %201 {strides = array<i32>} : memref<28x75xf32, #tpu.memory_space<vmem>>, vector<28x3xf32>,
      %c2_i32_200 = arith.constant 2 : i32
      %203 = arith.addi %142, %c2_i32_200 : i32
      %c0_201 = arith.constant 0 : index
      %204 = arith.index_cast %203 : i32 to index
      %c2_202 = arith.constant 2 : index
      %c0_203 = arith.constant 0 : index
      %205 = vector.load %arg1[%c0_201, %204, %c2_202, %c0_203] : memref<1x32x32x3xf32, #tpu.memory_space<vmem>>, vector<1x1x28x3xf32>
      %206 = vector.shape_cast %205 : vector<1x1x28x3xf32> to vector<28x3xf32>
      %c0_204 = arith.constant 0 : index
      %c36 = arith.constant 36 : index
      %207 = vector.load %arg15[%c0_204, %c36] : memref<28x75xf32, #tpu.memory_space<vmem>>, vector<28x3xf32>
      tpu.vector_store %arg15[%c0_204, %c36], %206 {strides = array<i32>} : memref<28x75xf32, #tpu.memory_space<vmem>>, vector<28x3xf32>,
      %c2_i32_205 = arith.constant 2 : i32
      %208 = arith.addi %142, %c2_i32_205 : i32
      %c0_206 = arith.constant 0 : index
      %209 = arith.index_cast %208 : i32 to index
      %c3_207 = arith.constant 3 : index
      %c0_208 = arith.constant 0 : index
      %210 = vector.load %arg1[%c0_206, %209, %c3_207, %c0_208] : memref<1x32x32x3xf32, #tpu.memory_space<vmem>>, vector<1x1x28x3xf32>
      %211 = vector.shape_cast %210 : vector<1x1x28x3xf32> to vector<28x3xf32>
      %c0_209 = arith.constant 0 : index
      %c39 = arith.constant 39 : index
      %212 = vector.load %arg15[%c0_209, %c39] : memref<28x75xf32, #tpu.memory_space<vmem>>, vector<28x3xf32>
      tpu.vector_store %arg15[%c0_209, %c39], %211 {strides = array<i32>} : memref<28x75xf32, #tpu.memory_space<vmem>>, vector<28x3xf32>,
      %c2_i32_210 = arith.constant 2 : i32
      %213 = arith.addi %142, %c2_i32_210 : i32
      %c0_211 = arith.constant 0 : index
      %214 = arith.index_cast %213 : i32 to index
      %c4_212 = arith.constant 4 : index
      %c0_213 = arith.constant 0 : index
      %215 = vector.load %arg1[%c0_211, %214, %c4_212, %c0_213] : memref<1x32x32x3xf32, #tpu.memory_space<vmem>>, vector<1x1x28x3xf32>
      %216 = vector.shape_cast %215 : vector<1x1x28x3xf32> to vector<28x3xf32>
      %c0_214 = arith.constant 0 : index
      %c42 = arith.constant 42 : index
      %217 = vector.load %arg15[%c0_214, %c42] : memref<28x75xf32, #tpu.memory_space<vmem>>, vector<28x3xf32>
      tpu.vector_store %arg15[%c0_214, %c42], %216 {strides = array<i32>} : memref<28x75xf32, #tpu.memory_space<vmem>>, vector<28x3xf32>,
      %c3_i32 = arith.constant 3 : i32
      %218 = arith.addi %142, %c3_i32 : i32
      %c0_215 = arith.constant 0 : index
      %219 = arith.index_cast %218 : i32 to index
      %c0_216 = arith.constant 0 : index
      %c0_217 = arith.constant 0 : index
      %220 = vector.load %arg1[%c0_215, %219, %c0_216, %c0_217] : memref<1x32x32x3xf32, #tpu.memory_space<vmem>>, vector<1x1x28x3xf32>
      %221 = vector.shape_cast %220 : vector<1x1x28x3xf32> to vector<28x3xf32>
      %c0_218 = arith.constant 0 : index
      %c45 = arith.constant 45 : index
      %222 = vector.load %arg15[%c0_218, %c45] : memref<28x75xf32, #tpu.memory_space<vmem>>, vector<28x3xf32>
      tpu.vector_store %arg15[%c0_218, %c45], %221 {strides = array<i32>} : memref<28x75xf32, #tpu.memory_space<vmem>>, vector<28x3xf32>,
      %c3_i32_219 = arith.constant 3 : i32
      %223 = arith.addi %142, %c3_i32_219 : i32
      %c0_220 = arith.constant 0 : index
      %224 = arith.index_cast %223 : i32 to index
      %c1_221 = arith.constant 1 : index
      %c0_222 = arith.constant 0 : index
      %225 = vector.load %arg1[%c0_220, %224, %c1_221, %c0_222] : memref<1x32x32x3xf32, #tpu.memory_space<vmem>>, vector<1x1x28x3xf32>
      %226 = vector.shape_cast %225 : vector<1x1x28x3xf32> to vector<28x3xf32>
      %c0_223 = arith.constant 0 : index
      %c48_224 = arith.constant 48 : index
      %227 = vector.load %arg15[%c0_223, %c48_224] : memref<28x75xf32, #tpu.memory_space<vmem>>, vector<28x3xf32>
      tpu.vector_store %arg15[%c0_223, %c48_224], %226 {strides = array<i32>} : memref<28x75xf32, #tpu.memory_space<vmem>>, vector<28x3xf32>,
      %c3_i32_225 = arith.constant 3 : i32
      %228 = arith.addi %142, %c3_i32_225 : i32
      %c0_226 = arith.constant 0 : index
      %229 = arith.index_cast %228 : i32 to index
      %c2_227 = arith.constant 2 : index
      %c0_228 = arith.constant 0 : index
      %230 = vector.load %arg1[%c0_226, %229, %c2_227, %c0_228] : memref<1x32x32x3xf32, #tpu.memory_space<vmem>>, vector<1x1x28x3xf32>
      %231 = vector.shape_cast %230 : vector<1x1x28x3xf32> to vector<28x3xf32>
      %c0_229 = arith.constant 0 : index
      %c51 = arith.constant 51 : index
      %232 = vector.load %arg15[%c0_229, %c51] : memref<28x75xf32, #tpu.memory_space<vmem>>, vector<28x3xf32>
      tpu.vector_store %arg15[%c0_229, %c51], %231 {strides = array<i32>} : memref<28x75xf32, #tpu.memory_space<vmem>>, vector<28x3xf32>,
      %c3_i32_230 = arith.constant 3 : i32
      %233 = arith.addi %142, %c3_i32_230 : i32
      %c0_231 = arith.constant 0 : index
      %234 = arith.index_cast %233 : i32 to index
      %c3_232 = arith.constant 3 : index
      %c0_233 = arith.constant 0 : index
      %235 = vector.load %arg1[%c0_231, %234, %c3_232, %c0_233] : memref<1x32x32x3xf32, #tpu.memory_space<vmem>>, vector<1x1x28x3xf32>
      %236 = vector.shape_cast %235 : vector<1x1x28x3xf32> to vector<28x3xf32>
      %c0_234 = arith.constant 0 : index
      %c54 = arith.constant 54 : index
      %237 = vector.load %arg15[%c0_234, %c54] : memref<28x75xf32, #tpu.memory_space<vmem>>, vector<28x3xf32>
      tpu.vector_store %arg15[%c0_234, %c54], %236 {strides = array<i32>} : memref<28x75xf32, #tpu.memory_space<vmem>>, vector<28x3xf32>,
      %c3_i32_235 = arith.constant 3 : i32
      %238 = arith.addi %142, %c3_i32_235 : i32
      %c0_236 = arith.constant 0 : index
      %239 = arith.index_cast %238 : i32 to index
      %c4_237 = arith.constant 4 : index
      %c0_238 = arith.constant 0 : index
      %240 = vector.load %arg1[%c0_236, %239, %c4_237, %c0_238] : memref<1x32x32x3xf32, #tpu.memory_space<vmem>>, vector<1x1x28x3xf32>
      %241 = vector.shape_cast %240 : vector<1x1x28x3xf32> to vector<28x3xf32>
      %c0_239 = arith.constant 0 : index
      %c57 = arith.constant 57 : index
      %242 = vector.load %arg15[%c0_239, %c57] : memref<28x75xf32, #tpu.memory_space<vmem>>, vector<28x3xf32>
      tpu.vector_store %arg15[%c0_239, %c57], %241 {strides = array<i32>} : memref<28x75xf32, #tpu.memory_space<vmem>>, vector<28x3xf32>,
      %c4_i32 = arith.constant 4 : i32
      %243 = arith.addi %142, %c4_i32 : i32
      %c0_240 = arith.constant 0 : index
      %244 = arith.index_cast %243 : i32 to index
      %c0_241 = arith.constant 0 : index
      %c0_242 = arith.constant 0 : index
      %245 = vector.load %arg1[%c0_240, %244, %c0_241, %c0_242] : memref<1x32x32x3xf32, #tpu.memory_space<vmem>>, vector<1x1x28x3xf32>
      %246 = vector.shape_cast %245 : vector<1x1x28x3xf32> to vector<28x3xf32>
      %c0_243 = arith.constant 0 : index
      %c60 = arith.constant 60 : index
      %247 = vector.load %arg15[%c0_243, %c60] : memref<28x75xf32, #tpu.memory_space<vmem>>, vector<28x3xf32>
      tpu.vector_store %arg15[%c0_243, %c60], %246 {strides = array<i32>} : memref<28x75xf32, #tpu.memory_space<vmem>>, vector<28x3xf32>,
      %c4_i32_244 = arith.constant 4 : i32
      %248 = arith.addi %142, %c4_i32_244 : i32
      %c0_245 = arith.constant 0 : index
      %249 = arith.index_cast %248 : i32 to index
      %c1_246 = arith.constant 1 : index
      %c0_247 = arith.constant 0 : index
      %250 = vector.load %arg1[%c0_245, %249, %c1_246, %c0_247] : memref<1x32x32x3xf32, #tpu.memory_space<vmem>>, vector<1x1x28x3xf32>
      %251 = vector.shape_cast %250 : vector<1x1x28x3xf32> to vector<28x3xf32>
      %c0_248 = arith.constant 0 : index
      %c63 = arith.constant 63 : index
      %252 = vector.load %arg15[%c0_248, %c63] : memref<28x75xf32, #tpu.memory_space<vmem>>, vector<28x3xf32>
      tpu.vector_store %arg15[%c0_248, %c63], %251 {strides = array<i32>} : memref<28x75xf32, #tpu.memory_space<vmem>>, vector<28x3xf32>,
      %c4_i32_249 = arith.constant 4 : i32
      %253 = arith.addi %142, %c4_i32_249 : i32
      %c0_250 = arith.constant 0 : index
      %254 = arith.index_cast %253 : i32 to index
      %c2_251 = arith.constant 2 : index
      %c0_252 = arith.constant 0 : index
      %255 = vector.load %arg1[%c0_250, %254, %c2_251, %c0_252] : memref<1x32x32x3xf32, #tpu.memory_space<vmem>>, vector<1x1x28x3xf32>
      %256 = vector.shape_cast %255 : vector<1x1x28x3xf32> to vector<28x3xf32>
      %c0_253 = arith.constant 0 : index
      %c66 = arith.constant 66 : index
      %257 = vector.load %arg15[%c0_253, %c66] : memref<28x75xf32, #tpu.memory_space<vmem>>, vector<28x3xf32>
      tpu.vector_store %arg15[%c0_253, %c66], %256 {strides = array<i32>} : memref<28x75xf32, #tpu.memory_space<vmem>>, vector<28x3xf32>,
      %c4_i32_254 = arith.constant 4 : i32
      %258 = arith.addi %142, %c4_i32_254 : i32
      %c0_255 = arith.constant 0 : index
      %259 = arith.index_cast %258 : i32 to index
      %c3_256 = arith.constant 3 : index
      %c0_257 = arith.constant 0 : index
      %260 = vector.load %arg1[%c0_255, %259, %c3_256, %c0_257] : memref<1x32x32x3xf32, #tpu.memory_space<vmem>>, vector<1x1x28x3xf32>
      %261 = vector.shape_cast %260 : vector<1x1x28x3xf32> to vector<28x3xf32>
      %c0_258 = arith.constant 0 : index
      %c69 = arith.constant 69 : index
      %262 = vector.load %arg15[%c0_258, %c69] : memref<28x75xf32, #tpu.memory_space<vmem>>, vector<28x3xf32>
      tpu.vector_store %arg15[%c0_258, %c69], %261 {strides = array<i32>} : memref<28x75xf32, #tpu.memory_space<vmem>>, vector<28x3xf32>,
      %c4_i32_259 = arith.constant 4 : i32
      %263 = arith.addi %142, %c4_i32_259 : i32
      %c0_260 = arith.constant 0 : index
      %264 = arith.index_cast %263 : i32 to index
      %c4_261 = arith.constant 4 : index
      %c0_262 = arith.constant 0 : index
      %265 = vector.load %arg1[%c0_260, %264, %c4_261, %c0_262] : memref<1x32x32x3xf32, #tpu.memory_space<vmem>>, vector<1x1x28x3xf32>
      %266 = vector.shape_cast %265 : vector<1x1x28x3xf32> to vector<28x3xf32>
      %c0_263 = arith.constant 0 : index
      %c72 = arith.constant 72 : index
      %267 = vector.load %arg15[%c0_263, %c72] : memref<28x75xf32, #tpu.memory_space<vmem>>, vector<28x3xf32>
      tpu.vector_store %arg15[%c0_263, %c72], %266 {strides = array<i32>} : memref<28x75xf32, #tpu.memory_space<vmem>>, vector<28x3xf32>,
      %c0_264 = arith.constant 0 : index
      %c0_265 = arith.constant 0 : index
      %268 = vector.load %arg15[%c0_264, %c0_265] : memref<28x75xf32, #tpu.memory_space<vmem>>, vector<28x75xf32>
      %269 = arith.truncf %268 : vector<28x75xf32> to vector<28x75xbf16>
      %cst_266 = arith.constant dense<0.000000e+00> : vector<28x6xf32>
      %270 = tpu.matmul %269, %0, %cst_266 {dimension_numbers = #tpu.dot_dimension_numbers<[1], [0], [0], [1], [0, 0, 1, 1], [], []>} : vector<28x75xbf16>, vector<75x6xbf16>, vector<28x6xf32> -> vector<28x6xf32>
      %271 = vector.broadcast %1 : vector<1x6xf32> to vector<28x6xf32>
      %272 = arith.addf %270, %271 : vector<28x6xf32>
      %cst_267 = arith.constant 0.000000e+00 : f32
      %273 = vector.broadcast %cst_267 : f32 to vector<28x6xf32>
      %274 = arith.maximumf %272, %273 : vector<28x6xf32>
      %c2_i32_268 = arith.constant 2 : i32
      %275 = arith.muli %c2_i32_268, %arg18 : i32
      %c1_i32_269 = arith.constant 1 : i32
      %276 = arith.addi %275, %c1_i32_269 : i32
      %c0_i32_270 = arith.constant 0 : i32
      %277 = arith.addi %276, %c0_i32_270 : i32
      %c0_271 = arith.constant 0 : index
      %278 = arith.index_cast %277 : i32 to index
      %c0_272 = arith.constant 0 : index
      %c0_273 = arith.constant 0 : index
      %279 = vector.load %arg1[%c0_271, %278, %c0_272, %c0_273] : memref<1x32x32x3xf32, #tpu.memory_space<vmem>>, vector<1x1x28x3xf32>
      %280 = vector.shape_cast %279 : vector<1x1x28x3xf32> to vector<28x3xf32>
      %c0_274 = arith.constant 0 : index
      %c0_275 = arith.constant 0 : index
      %281 = vector.load %arg15[%c0_274, %c0_275] : memref<28x75xf32, #tpu.memory_space<vmem>>, vector<28x3xf32>
      tpu.vector_store %arg15[%c0_274, %c0_275], %280 {strides = array<i32>} : memref<28x75xf32, #tpu.memory_space<vmem>>, vector<28x3xf32>,
      %c0_i32_276 = arith.constant 0 : i32
      %282 = arith.addi %276, %c0_i32_276 : i32
      %c0_277 = arith.constant 0 : index
      %283 = arith.index_cast %282 : i32 to index
      %c1_278 = arith.constant 1 : index
      %c0_279 = arith.constant 0 : index
      %284 = vector.load %arg1[%c0_277, %283, %c1_278, %c0_279] : memref<1x32x32x3xf32, #tpu.memory_space<vmem>>, vector<1x1x28x3xf32>
      %285 = vector.shape_cast %284 : vector<1x1x28x3xf32> to vector<28x3xf32>
      %c0_280 = arith.constant 0 : index
      %c3_281 = arith.constant 3 : index
      %286 = vector.load %arg15[%c0_280, %c3_281] : memref<28x75xf32, #tpu.memory_space<vmem>>, vector<28x3xf32>
      tpu.vector_store %arg15[%c0_280, %c3_281], %285 {strides = array<i32>} : memref<28x75xf32, #tpu.memory_space<vmem>>, vector<28x3xf32>,
      %c0_i32_282 = arith.constant 0 : i32
      %287 = arith.addi %276, %c0_i32_282 : i32
      %c0_283 = arith.constant 0 : index
      %288 = arith.index_cast %287 : i32 to index
      %c2_284 = arith.constant 2 : index
      %c0_285 = arith.constant 0 : index
      %289 = vector.load %arg1[%c0_283, %288, %c2_284, %c0_285] : memref<1x32x32x3xf32, #tpu.memory_space<vmem>>, vector<1x1x28x3xf32>
      %290 = vector.shape_cast %289 : vector<1x1x28x3xf32> to vector<28x3xf32>
      %c0_286 = arith.constant 0 : index
      %c6_287 = arith.constant 6 : index
      %291 = vector.load %arg15[%c0_286, %c6_287] : memref<28x75xf32, #tpu.memory_space<vmem>>, vector<28x3xf32>
      tpu.vector_store %arg15[%c0_286, %c6_287], %290 {strides = array<i32>} : memref<28x75xf32, #tpu.memory_space<vmem>>, vector<28x3xf32>,
      %c0_i32_288 = arith.constant 0 : i32
      %292 = arith.addi %276, %c0_i32_288 : i32
      %c0_289 = arith.constant 0 : index
      %293 = arith.index_cast %292 : i32 to index
      %c3_290 = arith.constant 3 : index
      %c0_291 = arith.constant 0 : index
      %294 = vector.load %arg1[%c0_289, %293, %c3_290, %c0_291] : memref<1x32x32x3xf32, #tpu.memory_space<vmem>>, vector<1x1x28x3xf32>
      %295 = vector.shape_cast %294 : vector<1x1x28x3xf32> to vector<28x3xf32>
      %c0_292 = arith.constant 0 : index
      %c9_293 = arith.constant 9 : index
      %296 = vector.load %arg15[%c0_292, %c9_293] : memref<28x75xf32, #tpu.memory_space<vmem>>, vector<28x3xf32>
      tpu.vector_store %arg15[%c0_292, %c9_293], %295 {strides = array<i32>} : memref<28x75xf32, #tpu.memory_space<vmem>>, vector<28x3xf32>,
      %c0_i32_294 = arith.constant 0 : i32
      %297 = arith.addi %276, %c0_i32_294 : i32
      %c0_295 = arith.constant 0 : index
      %298 = arith.index_cast %297 : i32 to index
      %c4_296 = arith.constant 4 : index
      %c0_297 = arith.constant 0 : index
      %299 = vector.load %arg1[%c0_295, %298, %c4_296, %c0_297] : memref<1x32x32x3xf32, #tpu.memory_space<vmem>>, vector<1x1x28x3xf32>
      %300 = vector.shape_cast %299 : vector<1x1x28x3xf32> to vector<28x3xf32>
      %c0_298 = arith.constant 0 : index
      %c12_299 = arith.constant 12 : index
      %301 = vector.load %arg15[%c0_298, %c12_299] : memref<28x75xf32, #tpu.memory_space<vmem>>, vector<28x3xf32>
      tpu.vector_store %arg15[%c0_298, %c12_299], %300 {strides = array<i32>} : memref<28x75xf32, #tpu.memory_space<vmem>>, vector<28x3xf32>,
      %c1_i32_300 = arith.constant 1 : i32
      %302 = arith.addi %276, %c1_i32_300 : i32
      %c0_301 = arith.constant 0 : index
      %303 = arith.index_cast %302 : i32 to index
      %c0_302 = arith.constant 0 : index
      %c0_303 = arith.constant 0 : index
      %304 = vector.load %arg1[%c0_301, %303, %c0_302, %c0_303] : memref<1x32x32x3xf32, #tpu.memory_space<vmem>>, vector<1x1x28x3xf32>
      %305 = vector.shape_cast %304 : vector<1x1x28x3xf32> to vector<28x3xf32>
      %c0_304 = arith.constant 0 : index
      %c15_305 = arith.constant 15 : index
      %306 = vector.load %arg15[%c0_304, %c15_305] : memref<28x75xf32, #tpu.memory_space<vmem>>, vector<28x3xf32>
      tpu.vector_store %arg15[%c0_304, %c15_305], %305 {strides = array<i32>} : memref<28x75xf32, #tpu.memory_space<vmem>>, vector<28x3xf32>,
      %c1_i32_306 = arith.constant 1 : i32
      %307 = arith.addi %276, %c1_i32_306 : i32
      %c0_307 = arith.constant 0 : index
      %308 = arith.index_cast %307 : i32 to index
      %c1_308 = arith.constant 1 : index
      %c0_309 = arith.constant 0 : index
      %309 = vector.load %arg1[%c0_307, %308, %c1_308, %c0_309] : memref<1x32x32x3xf32, #tpu.memory_space<vmem>>, vector<1x1x28x3xf32>
      %310 = vector.shape_cast %309 : vector<1x1x28x3xf32> to vector<28x3xf32>
      %c0_310 = arith.constant 0 : index
      %c18_311 = arith.constant 18 : index
      %311 = vector.load %arg15[%c0_310, %c18_311] : memref<28x75xf32, #tpu.memory_space<vmem>>, vector<28x3xf32>
      tpu.vector_store %arg15[%c0_310, %c18_311], %310 {strides = array<i32>} : memref<28x75xf32, #tpu.memory_space<vmem>>, vector<28x3xf32>,
      %c1_i32_312 = arith.constant 1 : i32
      %312 = arith.addi %276, %c1_i32_312 : i32
      %c0_313 = arith.constant 0 : index
      %313 = arith.index_cast %312 : i32 to index
      %c2_314 = arith.constant 2 : index
      %c0_315 = arith.constant 0 : index
      %314 = vector.load %arg1[%c0_313, %313, %c2_314, %c0_315] : memref<1x32x32x3xf32, #tpu.memory_space<vmem>>, vector<1x1x28x3xf32>
      %315 = vector.shape_cast %314 : vector<1x1x28x3xf32> to vector<28x3xf32>
      %c0_316 = arith.constant 0 : index
      %c21_317 = arith.constant 21 : index
      %316 = vector.load %arg15[%c0_316, %c21_317] : memref<28x75xf32, #tpu.memory_space<vmem>>, vector<28x3xf32>
      tpu.vector_store %arg15[%c0_316, %c21_317], %315 {strides = array<i32>} : memref<28x75xf32, #tpu.memory_space<vmem>>, vector<28x3xf32>,
      %c1_i32_318 = arith.constant 1 : i32
      %317 = arith.addi %276, %c1_i32_318 : i32
      %c0_319 = arith.constant 0 : index
      %318 = arith.index_cast %317 : i32 to index
      %c3_320 = arith.constant 3 : index
      %c0_321 = arith.constant 0 : index
      %319 = vector.load %arg1[%c0_319, %318, %c3_320, %c0_321] : memref<1x32x32x3xf32, #tpu.memory_space<vmem>>, vector<1x1x28x3xf32>
      %320 = vector.shape_cast %319 : vector<1x1x28x3xf32> to vector<28x3xf32>
      %c0_322 = arith.constant 0 : index
      %c24_323 = arith.constant 24 : index
      %321 = vector.load %arg15[%c0_322, %c24_323] : memref<28x75xf32, #tpu.memory_space<vmem>>, vector<28x3xf32>
      tpu.vector_store %arg15[%c0_322, %c24_323], %320 {strides = array<i32>} : memref<28x75xf32, #tpu.memory_space<vmem>>, vector<28x3xf32>,
      %c1_i32_324 = arith.constant 1 : i32
      %322 = arith.addi %276, %c1_i32_324 : i32
      %c0_325 = arith.constant 0 : index
      %323 = arith.index_cast %322 : i32 to index
      %c4_326 = arith.constant 4 : index
      %c0_327 = arith.constant 0 : index
      %324 = vector.load %arg1[%c0_325, %323, %c4_326, %c0_327] : memref<1x32x32x3xf32, #tpu.memory_space<vmem>>, vector<1x1x28x3xf32>
      %325 = vector.shape_cast %324 : vector<1x1x28x3xf32> to vector<28x3xf32>
      %c0_328 = arith.constant 0 : index
      %c27_329 = arith.constant 27 : index
      %326 = vector.load %arg15[%c0_328, %c27_329] : memref<28x75xf32, #tpu.memory_space<vmem>>, vector<28x3xf32>
      tpu.vector_store %arg15[%c0_328, %c27_329], %325 {strides = array<i32>} : memref<28x75xf32, #tpu.memory_space<vmem>>, vector<28x3xf32>,
      %c2_i32_330 = arith.constant 2 : i32
      %327 = arith.addi %276, %c2_i32_330 : i32
      %c0_331 = arith.constant 0 : index
      %328 = arith.index_cast %327 : i32 to index
      %c0_332 = arith.constant 0 : index
      %c0_333 = arith.constant 0 : index
      %329 = vector.load %arg1[%c0_331, %328, %c0_332, %c0_333] : memref<1x32x32x3xf32, #tpu.memory_space<vmem>>, vector<1x1x28x3xf32>
      %330 = vector.shape_cast %329 : vector<1x1x28x3xf32> to vector<28x3xf32>
      %c0_334 = arith.constant 0 : index
      %c30_335 = arith.constant 30 : index
      %331 = vector.load %arg15[%c0_334, %c30_335] : memref<28x75xf32, #tpu.memory_space<vmem>>, vector<28x3xf32>
      tpu.vector_store %arg15[%c0_334, %c30_335], %330 {strides = array<i32>} : memref<28x75xf32, #tpu.memory_space<vmem>>, vector<28x3xf32>,
      %c2_i32_336 = arith.constant 2 : i32
      %332 = arith.addi %276, %c2_i32_336 : i32
      %c0_337 = arith.constant 0 : index
      %333 = arith.index_cast %332 : i32 to index
      %c1_338 = arith.constant 1 : index
      %c0_339 = arith.constant 0 : index
      %334 = vector.load %arg1[%c0_337, %333, %c1_338, %c0_339] : memref<1x32x32x3xf32, #tpu.memory_space<vmem>>, vector<1x1x28x3xf32>
      %335 = vector.shape_cast %334 : vector<1x1x28x3xf32> to vector<28x3xf32>
      %c0_340 = arith.constant 0 : index
      %c33_341 = arith.constant 33 : index
      %336 = vector.load %arg15[%c0_340, %c33_341] : memref<28x75xf32, #tpu.memory_space<vmem>>, vector<28x3xf32>
      tpu.vector_store %arg15[%c0_340, %c33_341], %335 {strides = array<i32>} : memref<28x75xf32, #tpu.memory_space<vmem>>, vector<28x3xf32>,
      %c2_i32_342 = arith.constant 2 : i32
      %337 = arith.addi %276, %c2_i32_342 : i32
      %c0_343 = arith.constant 0 : index
      %338 = arith.index_cast %337 : i32 to index
      %c2_344 = arith.constant 2 : index
      %c0_345 = arith.constant 0 : index
      %339 = vector.load %arg1[%c0_343, %338, %c2_344, %c0_345] : memref<1x32x32x3xf32, #tpu.memory_space<vmem>>, vector<1x1x28x3xf32>
      %340 = vector.shape_cast %339 : vector<1x1x28x3xf32> to vector<28x3xf32>
      %c0_346 = arith.constant 0 : index
      %c36_347 = arith.constant 36 : index
      %341 = vector.load %arg15[%c0_346, %c36_347] : memref<28x75xf32, #tpu.memory_space<vmem>>, vector<28x3xf32>
      tpu.vector_store %arg15[%c0_346, %c36_347], %340 {strides = array<i32>} : memref<28x75xf32, #tpu.memory_space<vmem>>, vector<28x3xf32>,
      %c2_i32_348 = arith.constant 2 : i32
      %342 = arith.addi %276, %c2_i32_348 : i32
      %c0_349 = arith.constant 0 : index
      %343 = arith.index_cast %342 : i32 to index
      %c3_350 = arith.constant 3 : index
      %c0_351 = arith.constant 0 : index
      %344 = vector.load %arg1[%c0_349, %343, %c3_350, %c0_351] : memref<1x32x32x3xf32, #tpu.memory_space<vmem>>, vector<1x1x28x3xf32>
      %345 = vector.shape_cast %344 : vector<1x1x28x3xf32> to vector<28x3xf32>
      %c0_352 = arith.constant 0 : index
      %c39_353 = arith.constant 39 : index
      %346 = vector.load %arg15[%c0_352, %c39_353] : memref<28x75xf32, #tpu.memory_space<vmem>>, vector<28x3xf32>
      tpu.vector_store %arg15[%c0_352, %c39_353], %345 {strides = array<i32>} : memref<28x75xf32, #tpu.memory_space<vmem>>, vector<28x3xf32>,
      %c2_i32_354 = arith.constant 2 : i32
      %347 = arith.addi %276, %c2_i32_354 : i32
      %c0_355 = arith.constant 0 : index
      %348 = arith.index_cast %347 : i32 to index
      %c4_356 = arith.constant 4 : index
      %c0_357 = arith.constant 0 : index
      %349 = vector.load %arg1[%c0_355, %348, %c4_356, %c0_357] : memref<1x32x32x3xf32, #tpu.memory_space<vmem>>, vector<1x1x28x3xf32>
      %350 = vector.shape_cast %349 : vector<1x1x28x3xf32> to vector<28x3xf32>
      %c0_358 = arith.constant 0 : index
      %c42_359 = arith.constant 42 : index
      %351 = vector.load %arg15[%c0_358, %c42_359] : memref<28x75xf32, #tpu.memory_space<vmem>>, vector<28x3xf32>
      tpu.vector_store %arg15[%c0_358, %c42_359], %350 {strides = array<i32>} : memref<28x75xf32, #tpu.memory_space<vmem>>, vector<28x3xf32>,
      %c3_i32_360 = arith.constant 3 : i32
      %352 = arith.addi %276, %c3_i32_360 : i32
      %c0_361 = arith.constant 0 : index
      %353 = arith.index_cast %352 : i32 to index
      %c0_362 = arith.constant 0 : index
      %c0_363 = arith.constant 0 : index
      %354 = vector.load %arg1[%c0_361, %353, %c0_362, %c0_363] : memref<1x32x32x3xf32, #tpu.memory_space<vmem>>, vector<1x1x28x3xf32>
      %355 = vector.shape_cast %354 : vector<1x1x28x3xf32> to vector<28x3xf32>
      %c0_364 = arith.constant 0 : index
      %c45_365 = arith.constant 45 : index
      %356 = vector.load %arg15[%c0_364, %c45_365] : memref<28x75xf32, #tpu.memory_space<vmem>>, vector<28x3xf32>
      tpu.vector_store %arg15[%c0_364, %c45_365], %355 {strides = array<i32>} : memref<28x75xf32, #tpu.memory_space<vmem>>, vector<28x3xf32>,
      %c3_i32_366 = arith.constant 3 : i32
      %357 = arith.addi %276, %c3_i32_366 : i32
      %c0_367 = arith.constant 0 : index
      %358 = arith.index_cast %357 : i32 to index
      %c1_368 = arith.constant 1 : index
      %c0_369 = arith.constant 0 : index
      %359 = vector.load %arg1[%c0_367, %358, %c1_368, %c0_369] : memref<1x32x32x3xf32, #tpu.memory_space<vmem>>, vector<1x1x28x3xf32>
      %360 = vector.shape_cast %359 : vector<1x1x28x3xf32> to vector<28x3xf32>
      %c0_370 = arith.constant 0 : index
      %c48_371 = arith.constant 48 : index
      %361 = vector.load %arg15[%c0_370, %c48_371] : memref<28x75xf32, #tpu.memory_space<vmem>>, vector<28x3xf32>
      tpu.vector_store %arg15[%c0_370, %c48_371], %360 {strides = array<i32>} : memref<28x75xf32, #tpu.memory_space<vmem>>, vector<28x3xf32>,
      %c3_i32_372 = arith.constant 3 : i32
      %362 = arith.addi %276, %c3_i32_372 : i32
      %c0_373 = arith.constant 0 : index
      %363 = arith.index_cast %362 : i32 to index
      %c2_374 = arith.constant 2 : index
      %c0_375 = arith.constant 0 : index
      %364 = vector.load %arg1[%c0_373, %363, %c2_374, %c0_375] : memref<1x32x32x3xf32, #tpu.memory_space<vmem>>, vector<1x1x28x3xf32>
      %365 = vector.shape_cast %364 : vector<1x1x28x3xf32> to vector<28x3xf32>
      %c0_376 = arith.constant 0 : index
      %c51_377 = arith.constant 51 : index
      %366 = vector.load %arg15[%c0_376, %c51_377] : memref<28x75xf32, #tpu.memory_space<vmem>>, vector<28x3xf32>
      tpu.vector_store %arg15[%c0_376, %c51_377], %365 {strides = array<i32>} : memref<28x75xf32, #tpu.memory_space<vmem>>, vector<28x3xf32>,
      %c3_i32_378 = arith.constant 3 : i32
      %367 = arith.addi %276, %c3_i32_378 : i32
      %c0_379 = arith.constant 0 : index
      %368 = arith.index_cast %367 : i32 to index
      %c3_380 = arith.constant 3 : index
      %c0_381 = arith.constant 0 : index
      %369 = vector.load %arg1[%c0_379, %368, %c3_380, %c0_381] : memref<1x32x32x3xf32, #tpu.memory_space<vmem>>, vector<1x1x28x3xf32>
      %370 = vector.shape_cast %369 : vector<1x1x28x3xf32> to vector<28x3xf32>
      %c0_382 = arith.constant 0 : index
      %c54_383 = arith.constant 54 : index
      %371 = vector.load %arg15[%c0_382, %c54_383] : memref<28x75xf32, #tpu.memory_space<vmem>>, vector<28x3xf32>
      tpu.vector_store %arg15[%c0_382, %c54_383], %370 {strides = array<i32>} : memref<28x75xf32, #tpu.memory_space<vmem>>, vector<28x3xf32>,
      %c3_i32_384 = arith.constant 3 : i32
      %372 = arith.addi %276, %c3_i32_384 : i32
      %c0_385 = arith.constant 0 : index
      %373 = arith.index_cast %372 : i32 to index
      %c4_386 = arith.constant 4 : index
      %c0_387 = arith.constant 0 : index
      %374 = vector.load %arg1[%c0_385, %373, %c4_386, %c0_387] : memref<1x32x32x3xf32, #tpu.memory_space<vmem>>, vector<1x1x28x3xf32>
      %375 = vector.shape_cast %374 : vector<1x1x28x3xf32> to vector<28x3xf32>
      %c0_388 = arith.constant 0 : index
      %c57_389 = arith.constant 57 : index
      %376 = vector.load %arg15[%c0_388, %c57_389] : memref<28x75xf32, #tpu.memory_space<vmem>>, vector<28x3xf32>
      tpu.vector_store %arg15[%c0_388, %c57_389], %375 {strides = array<i32>} : memref<28x75xf32, #tpu.memory_space<vmem>>, vector<28x3xf32>,
      %c4_i32_390 = arith.constant 4 : i32
      %377 = arith.addi %276, %c4_i32_390 : i32
      %c0_391 = arith.constant 0 : index
      %378 = arith.index_cast %377 : i32 to index
      %c0_392 = arith.constant 0 : index
      %c0_393 = arith.constant 0 : index
      %379 = vector.load %arg1[%c0_391, %378, %c0_392, %c0_393] : memref<1x32x32x3xf32, #tpu.memory_space<vmem>>, vector<1x1x28x3xf32>
      %380 = vector.shape_cast %379 : vector<1x1x28x3xf32> to vector<28x3xf32>
      %c0_394 = arith.constant 0 : index
      %c60_395 = arith.constant 60 : index
      %381 = vector.load %arg15[%c0_394, %c60_395] : memref<28x75xf32, #tpu.memory_space<vmem>>, vector<28x3xf32>
      tpu.vector_store %arg15[%c0_394, %c60_395], %380 {strides = array<i32>} : memref<28x75xf32, #tpu.memory_space<vmem>>, vector<28x3xf32>,
      %c4_i32_396 = arith.constant 4 : i32
      %382 = arith.addi %276, %c4_i32_396 : i32
      %c0_397 = arith.constant 0 : index
      %383 = arith.index_cast %382 : i32 to index
      %c1_398 = arith.constant 1 : index
      %c0_399 = arith.constant 0 : index
      %384 = vector.load %arg1[%c0_397, %383, %c1_398, %c0_399] : memref<1x32x32x3xf32, #tpu.memory_space<vmem>>, vector<1x1x28x3xf32>
      %385 = vector.shape_cast %384 : vector<1x1x28x3xf32> to vector<28x3xf32>
      %c0_400 = arith.constant 0 : index
      %c63_401 = arith.constant 63 : index
      %386 = vector.load %arg15[%c0_400, %c63_401] : memref<28x75xf32, #tpu.memory_space<vmem>>, vector<28x3xf32>
      tpu.vector_store %arg15[%c0_400, %c63_401], %385 {strides = array<i32>} : memref<28x75xf32, #tpu.memory_space<vmem>>, vector<28x3xf32>,
      %c4_i32_402 = arith.constant 4 : i32
      %387 = arith.addi %276, %c4_i32_402 : i32
      %c0_403 = arith.constant 0 : index
      %388 = arith.index_cast %387 : i32 to index
      %c2_404 = arith.constant 2 : index
      %c0_405 = arith.constant 0 : index
      %389 = vector.load %arg1[%c0_403, %388, %c2_404, %c0_405] : memref<1x32x32x3xf32, #tpu.memory_space<vmem>>, vector<1x1x28x3xf32>
      %390 = vector.shape_cast %389 : vector<1x1x28x3xf32> to vector<28x3xf32>
      %c0_406 = arith.constant 0 : index
      %c66_407 = arith.constant 66 : index
      %391 = vector.load %arg15[%c0_406, %c66_407] : memref<28x75xf32, #tpu.memory_space<vmem>>, vector<28x3xf32>
      tpu.vector_store %arg15[%c0_406, %c66_407], %390 {strides = array<i32>} : memref<28x75xf32, #tpu.memory_space<vmem>>, vector<28x3xf32>,
      %c4_i32_408 = arith.constant 4 : i32
      %392 = arith.addi %276, %c4_i32_408 : i32
      %c0_409 = arith.constant 0 : index
      %393 = arith.index_cast %392 : i32 to index
      %c3_410 = arith.constant 3 : index
      %c0_411 = arith.constant 0 : index
      %394 = vector.load %arg1[%c0_409, %393, %c3_410, %c0_411] : memref<1x32x32x3xf32, #tpu.memory_space<vmem>>, vector<1x1x28x3xf32>
      %395 = vector.shape_cast %394 : vector<1x1x28x3xf32> to vector<28x3xf32>
      %c0_412 = arith.constant 0 : index
      %c69_413 = arith.constant 69 : index
      %396 = vector.load %arg15[%c0_412, %c69_413] : memref<28x75xf32, #tpu.memory_space<vmem>>, vector<28x3xf32>
      tpu.vector_store %arg15[%c0_412, %c69_413], %395 {strides = array<i32>} : memref<28x75xf32, #tpu.memory_space<vmem>>, vector<28x3xf32>,
      %c4_i32_414 = arith.constant 4 : i32
      %397 = arith.addi %276, %c4_i32_414 : i32
      %c0_415 = arith.constant 0 : index
      %398 = arith.index_cast %397 : i32 to index
      %c4_416 = arith.constant 4 : index
      %c0_417 = arith.constant 0 : index
      %399 = vector.load %arg1[%c0_415, %398, %c4_416, %c0_417] : memref<1x32x32x3xf32, #tpu.memory_space<vmem>>, vector<1x1x28x3xf32>
      %400 = vector.shape_cast %399 : vector<1x1x28x3xf32> to vector<28x3xf32>
      %c0_418 = arith.constant 0 : index
      %c72_419 = arith.constant 72 : index
      %401 = vector.load %arg15[%c0_418, %c72_419] : memref<28x75xf32, #tpu.memory_space<vmem>>, vector<28x3xf32>
      tpu.vector_store %arg15[%c0_418, %c72_419], %400 {strides = array<i32>} : memref<28x75xf32, #tpu.memory_space<vmem>>, vector<28x3xf32>,
      %c0_420 = arith.constant 0 : index
      %c0_421 = arith.constant 0 : index
      %402 = vector.load %arg15[%c0_420, %c0_421] : memref<28x75xf32, #tpu.memory_space<vmem>>, vector<28x75xf32>
      %403 = arith.truncf %402 : vector<28x75xf32> to vector<28x75xbf16>
      %cst_422 = arith.constant dense<0.000000e+00> : vector<28x6xf32>
      %404 = tpu.matmul %403, %0, %cst_422 {dimension_numbers = #tpu.dot_dimension_numbers<[1], [0], [0], [1], [0, 0, 1, 1], [], []>} : vector<28x75xbf16>, vector<75x6xbf16>, vector<28x6xf32> -> vector<28x6xf32>
      %405 = vector.broadcast %1 : vector<1x6xf32> to vector<28x6xf32>
      %406 = arith.addf %404, %405 : vector<28x6xf32>
      %cst_423 = arith.constant 0.000000e+00 : f32
      %407 = vector.broadcast %cst_423 : f32 to vector<28x6xf32>
      %408 = arith.maximumf %406, %407 : vector<28x6xf32>
      %409 = arith.maximumf %274, %408 : vector<28x6xf32>
      %cst_424 = arith.constant dense<0.000000e+00> : vector<14x6xf32>
      %410 = tpu.matmul %12, %409, %cst_424 {dimension_numbers = #tpu.dot_dimension_numbers<[1], [0], [0], [1], [0, 0, 1, 1], [], []>} : vector<14x28xf32>, vector<28x6xf32>, vector<14x6xf32> -> vector<14x6xf32>
      %cst_425 = arith.constant dense<0.000000e+00> : vector<14x6xf32>
      %411 = tpu.matmul %21, %409, %cst_425 {dimension_numbers = #tpu.dot_dimension_numbers<[1], [0], [0], [1], [0, 0, 1, 1], [], []>} : vector<14x28xf32>, vector<28x6xf32>, vector<14x6xf32> -> vector<14x6xf32>
      %412 = arith.maximumf %410, %411 : vector<14x6xf32>
      %413 = arith.index_cast %arg18 : i32 to index
      %c0_426 = arith.constant 0 : index
      %c0_427 = arith.constant 0 : index
      %414 = vector.load %arg13[%413, %c0_426, %c0_427] : memref<14x14x6xf32, #tpu.memory_space<vmem>>, vector<1x14x6xf32>
      %415 = vector.shape_cast %414 : vector<1x14x6xf32> to vector<14x6xf32>
      %416 = vector.shape_cast %412 : vector<14x6xf32> to vector<1x14x6xf32>
      tpu.vector_store %arg13[%413, %c0_426, %c0_427], %416 {strides = array<i32>} : memref<14x14x6xf32, #tpu.memory_space<vmem>>, vector<1x14x6xf32>,
    }
    %c14_i32_14 = arith.constant 14 : i32
    %c0_i32_15 = arith.constant 0 : i32
    %c5_i32 = arith.constant 5 : i32
    %41 = arith.addi %c0_i32_15, %c5_i32 : i32
    %c1_i32_16 = arith.constant 1 : i32
    scf.for %arg18 = %c0_i32_15 to %41 step %c1_i32_16  : i32 {
      %c2_i32_137 = arith.constant 2 : i32
      %142 = arith.muli %c2_i32_137, %arg18 : i32
      %c0_i32_138 = arith.constant 0 : i32
      %143 = arith.addi %142, %c0_i32_138 : i32
      %144 = arith.index_cast %143 : i32 to index
      %c0_139 = arith.constant 0 : index
      %c0_140 = arith.constant 0 : index
      %145 = vector.load %arg13[%144, %c0_139, %c0_140] : memref<14x14x6xf32, #tpu.memory_space<vmem>>, vector<1x10x6xf32>
      %146 = vector.shape_cast %145 : vector<1x10x6xf32> to vector<10x6xf32>
      %c0_141 = arith.constant 0 : index
      %c0_142 = arith.constant 0 : index
      %147 = vector.load %arg16[%c0_141, %c0_142] : memref<10x150xf32, #tpu.memory_space<vmem>>, vector<10x6xf32>
      tpu.vector_store %arg16[%c0_141, %c0_142], %146 {strides = array<i32>} : memref<10x150xf32, #tpu.memory_space<vmem>>, vector<10x6xf32>,
      %c0_i32_143 = arith.constant 0 : i32
      %148 = arith.addi %142, %c0_i32_143 : i32
      %149 = arith.index_cast %148 : i32 to index
      %c1_144 = arith.constant 1 : index
      %c0_145 = arith.constant 0 : index
      %150 = vector.load %arg13[%149, %c1_144, %c0_145] : memref<14x14x6xf32, #tpu.memory_space<vmem>>, vector<1x10x6xf32>
      %151 = vector.shape_cast %150 : vector<1x10x6xf32> to vector<10x6xf32>
      %c0_146 = arith.constant 0 : index
      %c6 = arith.constant 6 : index
      %152 = vector.load %arg16[%c0_146, %c6] : memref<10x150xf32, #tpu.memory_space<vmem>>, vector<10x6xf32>
      tpu.vector_store %arg16[%c0_146, %c6], %151 {strides = array<i32>} : memref<10x150xf32, #tpu.memory_space<vmem>>, vector<10x6xf32>,
      %c0_i32_147 = arith.constant 0 : i32
      %153 = arith.addi %142, %c0_i32_147 : i32
      %154 = arith.index_cast %153 : i32 to index
      %c2_148 = arith.constant 2 : index
      %c0_149 = arith.constant 0 : index
      %155 = vector.load %arg13[%154, %c2_148, %c0_149] : memref<14x14x6xf32, #tpu.memory_space<vmem>>, vector<1x10x6xf32>
      %156 = vector.shape_cast %155 : vector<1x10x6xf32> to vector<10x6xf32>
      %c0_150 = arith.constant 0 : index
      %c12 = arith.constant 12 : index
      %157 = vector.load %arg16[%c0_150, %c12] : memref<10x150xf32, #tpu.memory_space<vmem>>, vector<10x6xf32>
      tpu.vector_store %arg16[%c0_150, %c12], %156 {strides = array<i32>} : memref<10x150xf32, #tpu.memory_space<vmem>>, vector<10x6xf32>,
      %c0_i32_151 = arith.constant 0 : i32
      %158 = arith.addi %142, %c0_i32_151 : i32
      %159 = arith.index_cast %158 : i32 to index
      %c3_152 = arith.constant 3 : index
      %c0_153 = arith.constant 0 : index
      %160 = vector.load %arg13[%159, %c3_152, %c0_153] : memref<14x14x6xf32, #tpu.memory_space<vmem>>, vector<1x10x6xf32>
      %161 = vector.shape_cast %160 : vector<1x10x6xf32> to vector<10x6xf32>
      %c0_154 = arith.constant 0 : index
      %c18 = arith.constant 18 : index
      %162 = vector.load %arg16[%c0_154, %c18] : memref<10x150xf32, #tpu.memory_space<vmem>>, vector<10x6xf32>
      tpu.vector_store %arg16[%c0_154, %c18], %161 {strides = array<i32>} : memref<10x150xf32, #tpu.memory_space<vmem>>, vector<10x6xf32>,
      %c0_i32_155 = arith.constant 0 : i32
      %163 = arith.addi %142, %c0_i32_155 : i32
      %164 = arith.index_cast %163 : i32 to index
      %c4_156 = arith.constant 4 : index
      %c0_157 = arith.constant 0 : index
      %165 = vector.load %arg13[%164, %c4_156, %c0_157] : memref<14x14x6xf32, #tpu.memory_space<vmem>>, vector<1x10x6xf32>
      %166 = vector.shape_cast %165 : vector<1x10x6xf32> to vector<10x6xf32>
      %c0_158 = arith.constant 0 : index
      %c24 = arith.constant 24 : index
      %167 = vector.load %arg16[%c0_158, %c24] : memref<10x150xf32, #tpu.memory_space<vmem>>, vector<10x6xf32>
      tpu.vector_store %arg16[%c0_158, %c24], %166 {strides = array<i32>} : memref<10x150xf32, #tpu.memory_space<vmem>>, vector<10x6xf32>,
      %c1_i32_159 = arith.constant 1 : i32
      %168 = arith.addi %142, %c1_i32_159 : i32
      %169 = arith.index_cast %168 : i32 to index
      %c0_160 = arith.constant 0 : index
      %c0_161 = arith.constant 0 : index
      %170 = vector.load %arg13[%169, %c0_160, %c0_161] : memref<14x14x6xf32, #tpu.memory_space<vmem>>, vector<1x10x6xf32>
      %171 = vector.shape_cast %170 : vector<1x10x6xf32> to vector<10x6xf32>
      %c0_162 = arith.constant 0 : index
      %c30 = arith.constant 30 : index
      %172 = vector.load %arg16[%c0_162, %c30] : memref<10x150xf32, #tpu.memory_space<vmem>>, vector<10x6xf32>
      tpu.vector_store %arg16[%c0_162, %c30], %171 {strides = array<i32>} : memref<10x150xf32, #tpu.memory_space<vmem>>, vector<10x6xf32>,
      %c1_i32_163 = arith.constant 1 : i32
      %173 = arith.addi %142, %c1_i32_163 : i32
      %174 = arith.index_cast %173 : i32 to index
      %c1_164 = arith.constant 1 : index
      %c0_165 = arith.constant 0 : index
      %175 = vector.load %arg13[%174, %c1_164, %c0_165] : memref<14x14x6xf32, #tpu.memory_space<vmem>>, vector<1x10x6xf32>
      %176 = vector.shape_cast %175 : vector<1x10x6xf32> to vector<10x6xf32>
      %c0_166 = arith.constant 0 : index
      %c36 = arith.constant 36 : index
      %177 = vector.load %arg16[%c0_166, %c36] : memref<10x150xf32, #tpu.memory_space<vmem>>, vector<10x6xf32>
      tpu.vector_store %arg16[%c0_166, %c36], %176 {strides = array<i32>} : memref<10x150xf32, #tpu.memory_space<vmem>>, vector<10x6xf32>,
      %c1_i32_167 = arith.constant 1 : i32
      %178 = arith.addi %142, %c1_i32_167 : i32
      %179 = arith.index_cast %178 : i32 to index
      %c2_168 = arith.constant 2 : index
      %c0_169 = arith.constant 0 : index
      %180 = vector.load %arg13[%179, %c2_168, %c0_169] : memref<14x14x6xf32, #tpu.memory_space<vmem>>, vector<1x10x6xf32>
      %181 = vector.shape_cast %180 : vector<1x10x6xf32> to vector<10x6xf32>
      %c0_170 = arith.constant 0 : index
      %c42 = arith.constant 42 : index
      %182 = vector.load %arg16[%c0_170, %c42] : memref<10x150xf32, #tpu.memory_space<vmem>>, vector<10x6xf32>
      tpu.vector_store %arg16[%c0_170, %c42], %181 {strides = array<i32>} : memref<10x150xf32, #tpu.memory_space<vmem>>, vector<10x6xf32>,
      %c1_i32_171 = arith.constant 1 : i32
      %183 = arith.addi %142, %c1_i32_171 : i32
      %184 = arith.index_cast %183 : i32 to index
      %c3_172 = arith.constant 3 : index
      %c0_173 = arith.constant 0 : index
      %185 = vector.load %arg13[%184, %c3_172, %c0_173] : memref<14x14x6xf32, #tpu.memory_space<vmem>>, vector<1x10x6xf32>
      %186 = vector.shape_cast %185 : vector<1x10x6xf32> to vector<10x6xf32>
      %c0_174 = arith.constant 0 : index
      %c48_175 = arith.constant 48 : index
      %187 = vector.load %arg16[%c0_174, %c48_175] : memref<10x150xf32, #tpu.memory_space<vmem>>, vector<10x6xf32>
      tpu.vector_store %arg16[%c0_174, %c48_175], %186 {strides = array<i32>} : memref<10x150xf32, #tpu.memory_space<vmem>>, vector<10x6xf32>,
      %c1_i32_176 = arith.constant 1 : i32
      %188 = arith.addi %142, %c1_i32_176 : i32
      %189 = arith.index_cast %188 : i32 to index
      %c4_177 = arith.constant 4 : index
      %c0_178 = arith.constant 0 : index
      %190 = vector.load %arg13[%189, %c4_177, %c0_178] : memref<14x14x6xf32, #tpu.memory_space<vmem>>, vector<1x10x6xf32>
      %191 = vector.shape_cast %190 : vector<1x10x6xf32> to vector<10x6xf32>
      %c0_179 = arith.constant 0 : index
      %c54 = arith.constant 54 : index
      %192 = vector.load %arg16[%c0_179, %c54] : memref<10x150xf32, #tpu.memory_space<vmem>>, vector<10x6xf32>
      tpu.vector_store %arg16[%c0_179, %c54], %191 {strides = array<i32>} : memref<10x150xf32, #tpu.memory_space<vmem>>, vector<10x6xf32>,
      %c2_i32_180 = arith.constant 2 : i32
      %193 = arith.addi %142, %c2_i32_180 : i32
      %194 = arith.index_cast %193 : i32 to index
      %c0_181 = arith.constant 0 : index
      %c0_182 = arith.constant 0 : index
      %195 = vector.load %arg13[%194, %c0_181, %c0_182] : memref<14x14x6xf32, #tpu.memory_space<vmem>>, vector<1x10x6xf32>
      %196 = vector.shape_cast %195 : vector<1x10x6xf32> to vector<10x6xf32>
      %c0_183 = arith.constant 0 : index
      %c60 = arith.constant 60 : index
      %197 = vector.load %arg16[%c0_183, %c60] : memref<10x150xf32, #tpu.memory_space<vmem>>, vector<10x6xf32>
      tpu.vector_store %arg16[%c0_183, %c60], %196 {strides = array<i32>} : memref<10x150xf32, #tpu.memory_space<vmem>>, vector<10x6xf32>,
      %c2_i32_184 = arith.constant 2 : i32
      %198 = arith.addi %142, %c2_i32_184 : i32
      %199 = arith.index_cast %198 : i32 to index
      %c1_185 = arith.constant 1 : index
      %c0_186 = arith.constant 0 : index
      %200 = vector.load %arg13[%199, %c1_185, %c0_186] : memref<14x14x6xf32, #tpu.memory_space<vmem>>, vector<1x10x6xf32>
      %201 = vector.shape_cast %200 : vector<1x10x6xf32> to vector<10x6xf32>
      %c0_187 = arith.constant 0 : index
      %c66 = arith.constant 66 : index
      %202 = vector.load %arg16[%c0_187, %c66] : memref<10x150xf32, #tpu.memory_space<vmem>>, vector<10x6xf32>
      tpu.vector_store %arg16[%c0_187, %c66], %201 {strides = array<i32>} : memref<10x150xf32, #tpu.memory_space<vmem>>, vector<10x6xf32>,
      %c2_i32_188 = arith.constant 2 : i32
      %203 = arith.addi %142, %c2_i32_188 : i32
      %204 = arith.index_cast %203 : i32 to index
      %c2_189 = arith.constant 2 : index
      %c0_190 = arith.constant 0 : index
      %205 = vector.load %arg13[%204, %c2_189, %c0_190] : memref<14x14x6xf32, #tpu.memory_space<vmem>>, vector<1x10x6xf32>
      %206 = vector.shape_cast %205 : vector<1x10x6xf32> to vector<10x6xf32>
      %c0_191 = arith.constant 0 : index
      %c72 = arith.constant 72 : index
      %207 = vector.load %arg16[%c0_191, %c72] : memref<10x150xf32, #tpu.memory_space<vmem>>, vector<10x6xf32>
      tpu.vector_store %arg16[%c0_191, %c72], %206 {strides = array<i32>} : memref<10x150xf32, #tpu.memory_space<vmem>>, vector<10x6xf32>,
      %c2_i32_192 = arith.constant 2 : i32
      %208 = arith.addi %142, %c2_i32_192 : i32
      %209 = arith.index_cast %208 : i32 to index
      %c3_193 = arith.constant 3 : index
      %c0_194 = arith.constant 0 : index
      %210 = vector.load %arg13[%209, %c3_193, %c0_194] : memref<14x14x6xf32, #tpu.memory_space<vmem>>, vector<1x10x6xf32>
      %211 = vector.shape_cast %210 : vector<1x10x6xf32> to vector<10x6xf32>
      %c0_195 = arith.constant 0 : index
      %c78 = arith.constant 78 : index
      %212 = vector.load %arg16[%c0_195, %c78] : memref<10x150xf32, #tpu.memory_space<vmem>>, vector<10x6xf32>
      tpu.vector_store %arg16[%c0_195, %c78], %211 {strides = array<i32>} : memref<10x150xf32, #tpu.memory_space<vmem>>, vector<10x6xf32>,
      %c2_i32_196 = arith.constant 2 : i32
      %213 = arith.addi %142, %c2_i32_196 : i32
      %214 = arith.index_cast %213 : i32 to index
      %c4_197 = arith.constant 4 : index
      %c0_198 = arith.constant 0 : index
      %215 = vector.load %arg13[%214, %c4_197, %c0_198] : memref<14x14x6xf32, #tpu.memory_space<vmem>>, vector<1x10x6xf32>
      %216 = vector.shape_cast %215 : vector<1x10x6xf32> to vector<10x6xf32>
      %c0_199 = arith.constant 0 : index
      %c84 = arith.constant 84 : index
      %217 = vector.load %arg16[%c0_199, %c84] : memref<10x150xf32, #tpu.memory_space<vmem>>, vector<10x6xf32>
      tpu.vector_store %arg16[%c0_199, %c84], %216 {strides = array<i32>} : memref<10x150xf32, #tpu.memory_space<vmem>>, vector<10x6xf32>,
      %c3_i32 = arith.constant 3 : i32
      %218 = arith.addi %142, %c3_i32 : i32
      %219 = arith.index_cast %218 : i32 to index
      %c0_200 = arith.constant 0 : index
      %c0_201 = arith.constant 0 : index
      %220 = vector.load %arg13[%219, %c0_200, %c0_201] : memref<14x14x6xf32, #tpu.memory_space<vmem>>, vector<1x10x6xf32>
      %221 = vector.shape_cast %220 : vector<1x10x6xf32> to vector<10x6xf32>
      %c0_202 = arith.constant 0 : index
      %c90 = arith.constant 90 : index
      %222 = vector.load %arg16[%c0_202, %c90] : memref<10x150xf32, #tpu.memory_space<vmem>>, vector<10x6xf32>
      tpu.vector_store %arg16[%c0_202, %c90], %221 {strides = array<i32>} : memref<10x150xf32, #tpu.memory_space<vmem>>, vector<10x6xf32>,
      %c3_i32_203 = arith.constant 3 : i32
      %223 = arith.addi %142, %c3_i32_203 : i32
      %224 = arith.index_cast %223 : i32 to index
      %c1_204 = arith.constant 1 : index
      %c0_205 = arith.constant 0 : index
      %225 = vector.load %arg13[%224, %c1_204, %c0_205] : memref<14x14x6xf32, #tpu.memory_space<vmem>>, vector<1x10x6xf32>
      %226 = vector.shape_cast %225 : vector<1x10x6xf32> to vector<10x6xf32>
      %c0_206 = arith.constant 0 : index
      %c96_207 = arith.constant 96 : index
      %227 = vector.load %arg16[%c0_206, %c96_207] : memref<10x150xf32, #tpu.memory_space<vmem>>, vector<10x6xf32>
      tpu.vector_store %arg16[%c0_206, %c96_207], %226 {strides = array<i32>} : memref<10x150xf32, #tpu.memory_space<vmem>>, vector<10x6xf32>,
      %c3_i32_208 = arith.constant 3 : i32
      %228 = arith.addi %142, %c3_i32_208 : i32
      %229 = arith.index_cast %228 : i32 to index
      %c2_209 = arith.constant 2 : index
      %c0_210 = arith.constant 0 : index
      %230 = vector.load %arg13[%229, %c2_209, %c0_210] : memref<14x14x6xf32, #tpu.memory_space<vmem>>, vector<1x10x6xf32>
      %231 = vector.shape_cast %230 : vector<1x10x6xf32> to vector<10x6xf32>
      %c0_211 = arith.constant 0 : index
      %c102 = arith.constant 102 : index
      %232 = vector.load %arg16[%c0_211, %c102] : memref<10x150xf32, #tpu.memory_space<vmem>>, vector<10x6xf32>
      tpu.vector_store %arg16[%c0_211, %c102], %231 {strides = array<i32>} : memref<10x150xf32, #tpu.memory_space<vmem>>, vector<10x6xf32>,
      %c3_i32_212 = arith.constant 3 : i32
      %233 = arith.addi %142, %c3_i32_212 : i32
      %234 = arith.index_cast %233 : i32 to index
      %c3_213 = arith.constant 3 : index
      %c0_214 = arith.constant 0 : index
      %235 = vector.load %arg13[%234, %c3_213, %c0_214] : memref<14x14x6xf32, #tpu.memory_space<vmem>>, vector<1x10x6xf32>
      %236 = vector.shape_cast %235 : vector<1x10x6xf32> to vector<10x6xf32>
      %c0_215 = arith.constant 0 : index
      %c108 = arith.constant 108 : index
      %237 = vector.load %arg16[%c0_215, %c108] : memref<10x150xf32, #tpu.memory_space<vmem>>, vector<10x6xf32>
      tpu.vector_store %arg16[%c0_215, %c108], %236 {strides = array<i32>} : memref<10x150xf32, #tpu.memory_space<vmem>>, vector<10x6xf32>,
      %c3_i32_216 = arith.constant 3 : i32
      %238 = arith.addi %142, %c3_i32_216 : i32
      %239 = arith.index_cast %238 : i32 to index
      %c4_217 = arith.constant 4 : index
      %c0_218 = arith.constant 0 : index
      %240 = vector.load %arg13[%239, %c4_217, %c0_218] : memref<14x14x6xf32, #tpu.memory_space<vmem>>, vector<1x10x6xf32>
      %241 = vector.shape_cast %240 : vector<1x10x6xf32> to vector<10x6xf32>
      %c0_219 = arith.constant 0 : index
      %c114 = arith.constant 114 : index
      %242 = vector.load %arg16[%c0_219, %c114] : memref<10x150xf32, #tpu.memory_space<vmem>>, vector<10x6xf32>
      tpu.vector_store %arg16[%c0_219, %c114], %241 {strides = array<i32>} : memref<10x150xf32, #tpu.memory_space<vmem>>, vector<10x6xf32>,
      %c4_i32 = arith.constant 4 : i32
      %243 = arith.addi %142, %c4_i32 : i32
      %244 = arith.index_cast %243 : i32 to index
      %c0_220 = arith.constant 0 : index
      %c0_221 = arith.constant 0 : index
      %245 = vector.load %arg13[%244, %c0_220, %c0_221] : memref<14x14x6xf32, #tpu.memory_space<vmem>>, vector<1x10x6xf32>
      %246 = vector.shape_cast %245 : vector<1x10x6xf32> to vector<10x6xf32>
      %c0_222 = arith.constant 0 : index
      %c120 = arith.constant 120 : index
      %247 = vector.load %arg16[%c0_222, %c120] : memref<10x150xf32, #tpu.memory_space<vmem>>, vector<10x6xf32>
      tpu.vector_store %arg16[%c0_222, %c120], %246 {strides = array<i32>} : memref<10x150xf32, #tpu.memory_space<vmem>>, vector<10x6xf32>,
      %c4_i32_223 = arith.constant 4 : i32
      %248 = arith.addi %142, %c4_i32_223 : i32
      %249 = arith.index_cast %248 : i32 to index
      %c1_224 = arith.constant 1 : index
      %c0_225 = arith.constant 0 : index
      %250 = vector.load %arg13[%249, %c1_224, %c0_225] : memref<14x14x6xf32, #tpu.memory_space<vmem>>, vector<1x10x6xf32>
      %251 = vector.shape_cast %250 : vector<1x10x6xf32> to vector<10x6xf32>
      %c0_226 = arith.constant 0 : index
      %c126 = arith.constant 126 : index
      %252 = vector.load %arg16[%c0_226, %c126] : memref<10x150xf32, #tpu.memory_space<vmem>>, vector<10x6xf32>
      tpu.vector_store %arg16[%c0_226, %c126], %251 {strides = array<i32>} : memref<10x150xf32, #tpu.memory_space<vmem>>, vector<10x6xf32>,
      %c4_i32_227 = arith.constant 4 : i32
      %253 = arith.addi %142, %c4_i32_227 : i32
      %254 = arith.index_cast %253 : i32 to index
      %c2_228 = arith.constant 2 : index
      %c0_229 = arith.constant 0 : index
      %255 = vector.load %arg13[%254, %c2_228, %c0_229] : memref<14x14x6xf32, #tpu.memory_space<vmem>>, vector<1x10x6xf32>
      %256 = vector.shape_cast %255 : vector<1x10x6xf32> to vector<10x6xf32>
      %c0_230 = arith.constant 0 : index
      %c132 = arith.constant 132 : index
      %257 = vector.load %arg16[%c0_230, %c132] : memref<10x150xf32, #tpu.memory_space<vmem>>, vector<10x6xf32>
      tpu.vector_store %arg16[%c0_230, %c132], %256 {strides = array<i32>} : memref<10x150xf32, #tpu.memory_space<vmem>>, vector<10x6xf32>,
      %c4_i32_231 = arith.constant 4 : i32
      %258 = arith.addi %142, %c4_i32_231 : i32
      %259 = arith.index_cast %258 : i32 to index
      %c3_232 = arith.constant 3 : index
      %c0_233 = arith.constant 0 : index
      %260 = vector.load %arg13[%259, %c3_232, %c0_233] : memref<14x14x6xf32, #tpu.memory_space<vmem>>, vector<1x10x6xf32>
      %261 = vector.shape_cast %260 : vector<1x10x6xf32> to vector<10x6xf32>
      %c0_234 = arith.constant 0 : index
      %c138 = arith.constant 138 : index
      %262 = vector.load %arg16[%c0_234, %c138] : memref<10x150xf32, #tpu.memory_space<vmem>>, vector<10x6xf32>
      tpu.vector_store %arg16[%c0_234, %c138], %261 {strides = array<i32>} : memref<10x150xf32, #tpu.memory_space<vmem>>, vector<10x6xf32>,
      %c4_i32_235 = arith.constant 4 : i32
      %263 = arith.addi %142, %c4_i32_235 : i32
      %264 = arith.index_cast %263 : i32 to index
      %c4_236 = arith.constant 4 : index
      %c0_237 = arith.constant 0 : index
      %265 = vector.load %arg13[%264, %c4_236, %c0_237] : memref<14x14x6xf32, #tpu.memory_space<vmem>>, vector<1x10x6xf32>
      %266 = vector.shape_cast %265 : vector<1x10x6xf32> to vector<10x6xf32>
      %c0_238 = arith.constant 0 : index
      %c144_239 = arith.constant 144 : index
      %267 = vector.load %arg16[%c0_238, %c144_239] : memref<10x150xf32, #tpu.memory_space<vmem>>, vector<10x6xf32>
      tpu.vector_store %arg16[%c0_238, %c144_239], %266 {strides = array<i32>} : memref<10x150xf32, #tpu.memory_space<vmem>>, vector<10x6xf32>,
      %c0_240 = arith.constant 0 : index
      %c0_241 = arith.constant 0 : index
      %268 = vector.load %arg16[%c0_240, %c0_241] : memref<10x150xf32, #tpu.memory_space<vmem>>, vector<10x150xf32>
      %269 = arith.truncf %268 : vector<10x150xf32> to vector<10x150xbf16>
      %cst_242 = arith.constant dense<0.000000e+00> : vector<10x16xf32>
      %270 = tpu.matmul %269, %2, %cst_242 {dimension_numbers = #tpu.dot_dimension_numbers<[1], [0], [0], [1], [0, 0, 1, 1], [], []>} : vector<10x150xbf16>, vector<150x16xbf16>, vector<10x16xf32> -> vector<10x16xf32>
      %271 = vector.broadcast %3 : vector<1x16xf32> to vector<10x16xf32>
      %272 = arith.addf %270, %271 : vector<10x16xf32>
      %cst_243 = arith.constant 0.000000e+00 : f32
      %273 = vector.broadcast %cst_243 : f32 to vector<10x16xf32>
      %274 = arith.maximumf %272, %273 : vector<10x16xf32>
      %c2_i32_244 = arith.constant 2 : i32
      %275 = arith.muli %c2_i32_244, %arg18 : i32
      %c1_i32_245 = arith.constant 1 : i32
      %276 = arith.addi %275, %c1_i32_245 : i32
      %c0_i32_246 = arith.constant 0 : i32
      %277 = arith.addi %276, %c0_i32_246 : i32
      %278 = arith.index_cast %277 : i32 to index
      %c0_247 = arith.constant 0 : index
      %c0_248 = arith.constant 0 : index
      %279 = vector.load %arg13[%278, %c0_247, %c0_248] : memref<14x14x6xf32, #tpu.memory_space<vmem>>, vector<1x10x6xf32>
      %280 = vector.shape_cast %279 : vector<1x10x6xf32> to vector<10x6xf32>
      %c0_249 = arith.constant 0 : index
      %c0_250 = arith.constant 0 : index
      %281 = vector.load %arg16[%c0_249, %c0_250] : memref<10x150xf32, #tpu.memory_space<vmem>>, vector<10x6xf32>
      tpu.vector_store %arg16[%c0_249, %c0_250], %280 {strides = array<i32>} : memref<10x150xf32, #tpu.memory_space<vmem>>, vector<10x6xf32>,
      %c0_i32_251 = arith.constant 0 : i32
      %282 = arith.addi %276, %c0_i32_251 : i32
      %283 = arith.index_cast %282 : i32 to index
      %c1_252 = arith.constant 1 : index
      %c0_253 = arith.constant 0 : index
      %284 = vector.load %arg13[%283, %c1_252, %c0_253] : memref<14x14x6xf32, #tpu.memory_space<vmem>>, vector<1x10x6xf32>
      %285 = vector.shape_cast %284 : vector<1x10x6xf32> to vector<10x6xf32>
      %c0_254 = arith.constant 0 : index
      %c6_255 = arith.constant 6 : index
      %286 = vector.load %arg16[%c0_254, %c6_255] : memref<10x150xf32, #tpu.memory_space<vmem>>, vector<10x6xf32>
      tpu.vector_store %arg16[%c0_254, %c6_255], %285 {strides = array<i32>} : memref<10x150xf32, #tpu.memory_space<vmem>>, vector<10x6xf32>,
      %c0_i32_256 = arith.constant 0 : i32
      %287 = arith.addi %276, %c0_i32_256 : i32
      %288 = arith.index_cast %287 : i32 to index
      %c2_257 = arith.constant 2 : index
      %c0_258 = arith.constant 0 : index
      %289 = vector.load %arg13[%288, %c2_257, %c0_258] : memref<14x14x6xf32, #tpu.memory_space<vmem>>, vector<1x10x6xf32>
      %290 = vector.shape_cast %289 : vector<1x10x6xf32> to vector<10x6xf32>
      %c0_259 = arith.constant 0 : index
      %c12_260 = arith.constant 12 : index
      %291 = vector.load %arg16[%c0_259, %c12_260] : memref<10x150xf32, #tpu.memory_space<vmem>>, vector<10x6xf32>
      tpu.vector_store %arg16[%c0_259, %c12_260], %290 {strides = array<i32>} : memref<10x150xf32, #tpu.memory_space<vmem>>, vector<10x6xf32>,
      %c0_i32_261 = arith.constant 0 : i32
      %292 = arith.addi %276, %c0_i32_261 : i32
      %293 = arith.index_cast %292 : i32 to index
      %c3_262 = arith.constant 3 : index
      %c0_263 = arith.constant 0 : index
      %294 = vector.load %arg13[%293, %c3_262, %c0_263] : memref<14x14x6xf32, #tpu.memory_space<vmem>>, vector<1x10x6xf32>
      %295 = vector.shape_cast %294 : vector<1x10x6xf32> to vector<10x6xf32>
      %c0_264 = arith.constant 0 : index
      %c18_265 = arith.constant 18 : index
      %296 = vector.load %arg16[%c0_264, %c18_265] : memref<10x150xf32, #tpu.memory_space<vmem>>, vector<10x6xf32>
      tpu.vector_store %arg16[%c0_264, %c18_265], %295 {strides = array<i32>} : memref<10x150xf32, #tpu.memory_space<vmem>>, vector<10x6xf32>,
      %c0_i32_266 = arith.constant 0 : i32
      %297 = arith.addi %276, %c0_i32_266 : i32
      %298 = arith.index_cast %297 : i32 to index
      %c4_267 = arith.constant 4 : index
      %c0_268 = arith.constant 0 : index
      %299 = vector.load %arg13[%298, %c4_267, %c0_268] : memref<14x14x6xf32, #tpu.memory_space<vmem>>, vector<1x10x6xf32>
      %300 = vector.shape_cast %299 : vector<1x10x6xf32> to vector<10x6xf32>
      %c0_269 = arith.constant 0 : index
      %c24_270 = arith.constant 24 : index
      %301 = vector.load %arg16[%c0_269, %c24_270] : memref<10x150xf32, #tpu.memory_space<vmem>>, vector<10x6xf32>
      tpu.vector_store %arg16[%c0_269, %c24_270], %300 {strides = array<i32>} : memref<10x150xf32, #tpu.memory_space<vmem>>, vector<10x6xf32>,
      %c1_i32_271 = arith.constant 1 : i32
      %302 = arith.addi %276, %c1_i32_271 : i32
      %303 = arith.index_cast %302 : i32 to index
      %c0_272 = arith.constant 0 : index
      %c0_273 = arith.constant 0 : index
      %304 = vector.load %arg13[%303, %c0_272, %c0_273] : memref<14x14x6xf32, #tpu.memory_space<vmem>>, vector<1x10x6xf32>
      %305 = vector.shape_cast %304 : vector<1x10x6xf32> to vector<10x6xf32>
      %c0_274 = arith.constant 0 : index
      %c30_275 = arith.constant 30 : index
      %306 = vector.load %arg16[%c0_274, %c30_275] : memref<10x150xf32, #tpu.memory_space<vmem>>, vector<10x6xf32>
      tpu.vector_store %arg16[%c0_274, %c30_275], %305 {strides = array<i32>} : memref<10x150xf32, #tpu.memory_space<vmem>>, vector<10x6xf32>,
      %c1_i32_276 = arith.constant 1 : i32
      %307 = arith.addi %276, %c1_i32_276 : i32
      %308 = arith.index_cast %307 : i32 to index
      %c1_277 = arith.constant 1 : index
      %c0_278 = arith.constant 0 : index
      %309 = vector.load %arg13[%308, %c1_277, %c0_278] : memref<14x14x6xf32, #tpu.memory_space<vmem>>, vector<1x10x6xf32>
      %310 = vector.shape_cast %309 : vector<1x10x6xf32> to vector<10x6xf32>
      %c0_279 = arith.constant 0 : index
      %c36_280 = arith.constant 36 : index
      %311 = vector.load %arg16[%c0_279, %c36_280] : memref<10x150xf32, #tpu.memory_space<vmem>>, vector<10x6xf32>
      tpu.vector_store %arg16[%c0_279, %c36_280], %310 {strides = array<i32>} : memref<10x150xf32, #tpu.memory_space<vmem>>, vector<10x6xf32>,
      %c1_i32_281 = arith.constant 1 : i32
      %312 = arith.addi %276, %c1_i32_281 : i32
      %313 = arith.index_cast %312 : i32 to index
      %c2_282 = arith.constant 2 : index
      %c0_283 = arith.constant 0 : index
      %314 = vector.load %arg13[%313, %c2_282, %c0_283] : memref<14x14x6xf32, #tpu.memory_space<vmem>>, vector<1x10x6xf32>
      %315 = vector.shape_cast %314 : vector<1x10x6xf32> to vector<10x6xf32>
      %c0_284 = arith.constant 0 : index
      %c42_285 = arith.constant 42 : index
      %316 = vector.load %arg16[%c0_284, %c42_285] : memref<10x150xf32, #tpu.memory_space<vmem>>, vector<10x6xf32>
      tpu.vector_store %arg16[%c0_284, %c42_285], %315 {strides = array<i32>} : memref<10x150xf32, #tpu.memory_space<vmem>>, vector<10x6xf32>,
      %c1_i32_286 = arith.constant 1 : i32
      %317 = arith.addi %276, %c1_i32_286 : i32
      %318 = arith.index_cast %317 : i32 to index
      %c3_287 = arith.constant 3 : index
      %c0_288 = arith.constant 0 : index
      %319 = vector.load %arg13[%318, %c3_287, %c0_288] : memref<14x14x6xf32, #tpu.memory_space<vmem>>, vector<1x10x6xf32>
      %320 = vector.shape_cast %319 : vector<1x10x6xf32> to vector<10x6xf32>
      %c0_289 = arith.constant 0 : index
      %c48_290 = arith.constant 48 : index
      %321 = vector.load %arg16[%c0_289, %c48_290] : memref<10x150xf32, #tpu.memory_space<vmem>>, vector<10x6xf32>
      tpu.vector_store %arg16[%c0_289, %c48_290], %320 {strides = array<i32>} : memref<10x150xf32, #tpu.memory_space<vmem>>, vector<10x6xf32>,
      %c1_i32_291 = arith.constant 1 : i32
      %322 = arith.addi %276, %c1_i32_291 : i32
      %323 = arith.index_cast %322 : i32 to index
      %c4_292 = arith.constant 4 : index
      %c0_293 = arith.constant 0 : index
      %324 = vector.load %arg13[%323, %c4_292, %c0_293] : memref<14x14x6xf32, #tpu.memory_space<vmem>>, vector<1x10x6xf32>
      %325 = vector.shape_cast %324 : vector<1x10x6xf32> to vector<10x6xf32>
      %c0_294 = arith.constant 0 : index
      %c54_295 = arith.constant 54 : index
      %326 = vector.load %arg16[%c0_294, %c54_295] : memref<10x150xf32, #tpu.memory_space<vmem>>, vector<10x6xf32>
      tpu.vector_store %arg16[%c0_294, %c54_295], %325 {strides = array<i32>} : memref<10x150xf32, #tpu.memory_space<vmem>>, vector<10x6xf32>,
      %c2_i32_296 = arith.constant 2 : i32
      %327 = arith.addi %276, %c2_i32_296 : i32
      %328 = arith.index_cast %327 : i32 to index
      %c0_297 = arith.constant 0 : index
      %c0_298 = arith.constant 0 : index
      %329 = vector.load %arg13[%328, %c0_297, %c0_298] : memref<14x14x6xf32, #tpu.memory_space<vmem>>, vector<1x10x6xf32>
      %330 = vector.shape_cast %329 : vector<1x10x6xf32> to vector<10x6xf32>
      %c0_299 = arith.constant 0 : index
      %c60_300 = arith.constant 60 : index
      %331 = vector.load %arg16[%c0_299, %c60_300] : memref<10x150xf32, #tpu.memory_space<vmem>>, vector<10x6xf32>
      tpu.vector_store %arg16[%c0_299, %c60_300], %330 {strides = array<i32>} : memref<10x150xf32, #tpu.memory_space<vmem>>, vector<10x6xf32>,
      %c2_i32_301 = arith.constant 2 : i32
      %332 = arith.addi %276, %c2_i32_301 : i32
      %333 = arith.index_cast %332 : i32 to index
      %c1_302 = arith.constant 1 : index
      %c0_303 = arith.constant 0 : index
      %334 = vector.load %arg13[%333, %c1_302, %c0_303] : memref<14x14x6xf32, #tpu.memory_space<vmem>>, vector<1x10x6xf32>
      %335 = vector.shape_cast %334 : vector<1x10x6xf32> to vector<10x6xf32>
      %c0_304 = arith.constant 0 : index
      %c66_305 = arith.constant 66 : index
      %336 = vector.load %arg16[%c0_304, %c66_305] : memref<10x150xf32, #tpu.memory_space<vmem>>, vector<10x6xf32>
      tpu.vector_store %arg16[%c0_304, %c66_305], %335 {strides = array<i32>} : memref<10x150xf32, #tpu.memory_space<vmem>>, vector<10x6xf32>,
      %c2_i32_306 = arith.constant 2 : i32
      %337 = arith.addi %276, %c2_i32_306 : i32
      %338 = arith.index_cast %337 : i32 to index
      %c2_307 = arith.constant 2 : index
      %c0_308 = arith.constant 0 : index
      %339 = vector.load %arg13[%338, %c2_307, %c0_308] : memref<14x14x6xf32, #tpu.memory_space<vmem>>, vector<1x10x6xf32>
      %340 = vector.shape_cast %339 : vector<1x10x6xf32> to vector<10x6xf32>
      %c0_309 = arith.constant 0 : index
      %c72_310 = arith.constant 72 : index
      %341 = vector.load %arg16[%c0_309, %c72_310] : memref<10x150xf32, #tpu.memory_space<vmem>>, vector<10x6xf32>
      tpu.vector_store %arg16[%c0_309, %c72_310], %340 {strides = array<i32>} : memref<10x150xf32, #tpu.memory_space<vmem>>, vector<10x6xf32>,
      %c2_i32_311 = arith.constant 2 : i32
      %342 = arith.addi %276, %c2_i32_311 : i32
      %343 = arith.index_cast %342 : i32 to index
      %c3_312 = arith.constant 3 : index
      %c0_313 = arith.constant 0 : index
      %344 = vector.load %arg13[%343, %c3_312, %c0_313] : memref<14x14x6xf32, #tpu.memory_space<vmem>>, vector<1x10x6xf32>
      %345 = vector.shape_cast %344 : vector<1x10x6xf32> to vector<10x6xf32>
      %c0_314 = arith.constant 0 : index
      %c78_315 = arith.constant 78 : index
      %346 = vector.load %arg16[%c0_314, %c78_315] : memref<10x150xf32, #tpu.memory_space<vmem>>, vector<10x6xf32>
      tpu.vector_store %arg16[%c0_314, %c78_315], %345 {strides = array<i32>} : memref<10x150xf32, #tpu.memory_space<vmem>>, vector<10x6xf32>,
      %c2_i32_316 = arith.constant 2 : i32
      %347 = arith.addi %276, %c2_i32_316 : i32
      %348 = arith.index_cast %347 : i32 to index
      %c4_317 = arith.constant 4 : index
      %c0_318 = arith.constant 0 : index
      %349 = vector.load %arg13[%348, %c4_317, %c0_318] : memref<14x14x6xf32, #tpu.memory_space<vmem>>, vector<1x10x6xf32>
      %350 = vector.shape_cast %349 : vector<1x10x6xf32> to vector<10x6xf32>
      %c0_319 = arith.constant 0 : index
      %c84_320 = arith.constant 84 : index
      %351 = vector.load %arg16[%c0_319, %c84_320] : memref<10x150xf32, #tpu.memory_space<vmem>>, vector<10x6xf32>
      tpu.vector_store %arg16[%c0_319, %c84_320], %350 {strides = array<i32>} : memref<10x150xf32, #tpu.memory_space<vmem>>, vector<10x6xf32>,
      %c3_i32_321 = arith.constant 3 : i32
      %352 = arith.addi %276, %c3_i32_321 : i32
      %353 = arith.index_cast %352 : i32 to index
      %c0_322 = arith.constant 0 : index
      %c0_323 = arith.constant 0 : index
      %354 = vector.load %arg13[%353, %c0_322, %c0_323] : memref<14x14x6xf32, #tpu.memory_space<vmem>>, vector<1x10x6xf32>
      %355 = vector.shape_cast %354 : vector<1x10x6xf32> to vector<10x6xf32>
      %c0_324 = arith.constant 0 : index
      %c90_325 = arith.constant 90 : index
      %356 = vector.load %arg16[%c0_324, %c90_325] : memref<10x150xf32, #tpu.memory_space<vmem>>, vector<10x6xf32>
      tpu.vector_store %arg16[%c0_324, %c90_325], %355 {strides = array<i32>} : memref<10x150xf32, #tpu.memory_space<vmem>>, vector<10x6xf32>,
      %c3_i32_326 = arith.constant 3 : i32
      %357 = arith.addi %276, %c3_i32_326 : i32
      %358 = arith.index_cast %357 : i32 to index
      %c1_327 = arith.constant 1 : index
      %c0_328 = arith.constant 0 : index
      %359 = vector.load %arg13[%358, %c1_327, %c0_328] : memref<14x14x6xf32, #tpu.memory_space<vmem>>, vector<1x10x6xf32>
      %360 = vector.shape_cast %359 : vector<1x10x6xf32> to vector<10x6xf32>
      %c0_329 = arith.constant 0 : index
      %c96_330 = arith.constant 96 : index
      %361 = vector.load %arg16[%c0_329, %c96_330] : memref<10x150xf32, #tpu.memory_space<vmem>>, vector<10x6xf32>
      tpu.vector_store %arg16[%c0_329, %c96_330], %360 {strides = array<i32>} : memref<10x150xf32, #tpu.memory_space<vmem>>, vector<10x6xf32>,
      %c3_i32_331 = arith.constant 3 : i32
      %362 = arith.addi %276, %c3_i32_331 : i32
      %363 = arith.index_cast %362 : i32 to index
      %c2_332 = arith.constant 2 : index
      %c0_333 = arith.constant 0 : index
      %364 = vector.load %arg13[%363, %c2_332, %c0_333] : memref<14x14x6xf32, #tpu.memory_space<vmem>>, vector<1x10x6xf32>
      %365 = vector.shape_cast %364 : vector<1x10x6xf32> to vector<10x6xf32>
      %c0_334 = arith.constant 0 : index
      %c102_335 = arith.constant 102 : index
      %366 = vector.load %arg16[%c0_334, %c102_335] : memref<10x150xf32, #tpu.memory_space<vmem>>, vector<10x6xf32>
      tpu.vector_store %arg16[%c0_334, %c102_335], %365 {strides = array<i32>} : memref<10x150xf32, #tpu.memory_space<vmem>>, vector<10x6xf32>,
      %c3_i32_336 = arith.constant 3 : i32
      %367 = arith.addi %276, %c3_i32_336 : i32
      %368 = arith.index_cast %367 : i32 to index
      %c3_337 = arith.constant 3 : index
      %c0_338 = arith.constant 0 : index
      %369 = vector.load %arg13[%368, %c3_337, %c0_338] : memref<14x14x6xf32, #tpu.memory_space<vmem>>, vector<1x10x6xf32>
      %370 = vector.shape_cast %369 : vector<1x10x6xf32> to vector<10x6xf32>
      %c0_339 = arith.constant 0 : index
      %c108_340 = arith.constant 108 : index
      %371 = vector.load %arg16[%c0_339, %c108_340] : memref<10x150xf32, #tpu.memory_space<vmem>>, vector<10x6xf32>
      tpu.vector_store %arg16[%c0_339, %c108_340], %370 {strides = array<i32>} : memref<10x150xf32, #tpu.memory_space<vmem>>, vector<10x6xf32>,
      %c3_i32_341 = arith.constant 3 : i32
      %372 = arith.addi %276, %c3_i32_341 : i32
      %373 = arith.index_cast %372 : i32 to index
      %c4_342 = arith.constant 4 : index
      %c0_343 = arith.constant 0 : index
      %374 = vector.load %arg13[%373, %c4_342, %c0_343] : memref<14x14x6xf32, #tpu.memory_space<vmem>>, vector<1x10x6xf32>
      %375 = vector.shape_cast %374 : vector<1x10x6xf32> to vector<10x6xf32>
      %c0_344 = arith.constant 0 : index
      %c114_345 = arith.constant 114 : index
      %376 = vector.load %arg16[%c0_344, %c114_345] : memref<10x150xf32, #tpu.memory_space<vmem>>, vector<10x6xf32>
      tpu.vector_store %arg16[%c0_344, %c114_345], %375 {strides = array<i32>} : memref<10x150xf32, #tpu.memory_space<vmem>>, vector<10x6xf32>,
      %c4_i32_346 = arith.constant 4 : i32
      %377 = arith.addi %276, %c4_i32_346 : i32
      %378 = arith.index_cast %377 : i32 to index
      %c0_347 = arith.constant 0 : index
      %c0_348 = arith.constant 0 : index
      %379 = vector.load %arg13[%378, %c0_347, %c0_348] : memref<14x14x6xf32, #tpu.memory_space<vmem>>, vector<1x10x6xf32>
      %380 = vector.shape_cast %379 : vector<1x10x6xf32> to vector<10x6xf32>
      %c0_349 = arith.constant 0 : index
      %c120_350 = arith.constant 120 : index
      %381 = vector.load %arg16[%c0_349, %c120_350] : memref<10x150xf32, #tpu.memory_space<vmem>>, vector<10x6xf32>
      tpu.vector_store %arg16[%c0_349, %c120_350], %380 {strides = array<i32>} : memref<10x150xf32, #tpu.memory_space<vmem>>, vector<10x6xf32>,
      %c4_i32_351 = arith.constant 4 : i32
      %382 = arith.addi %276, %c4_i32_351 : i32
      %383 = arith.index_cast %382 : i32 to index
      %c1_352 = arith.constant 1 : index
      %c0_353 = arith.constant 0 : index
      %384 = vector.load %arg13[%383, %c1_352, %c0_353] : memref<14x14x6xf32, #tpu.memory_space<vmem>>, vector<1x10x6xf32>
      %385 = vector.shape_cast %384 : vector<1x10x6xf32> to vector<10x6xf32>
      %c0_354 = arith.constant 0 : index
      %c126_355 = arith.constant 126 : index
      %386 = vector.load %arg16[%c0_354, %c126_355] : memref<10x150xf32, #tpu.memory_space<vmem>>, vector<10x6xf32>
      tpu.vector_store %arg16[%c0_354, %c126_355], %385 {strides = array<i32>} : memref<10x150xf32, #tpu.memory_space<vmem>>, vector<10x6xf32>,
      %c4_i32_356 = arith.constant 4 : i32
      %387 = arith.addi %276, %c4_i32_356 : i32
      %388 = arith.index_cast %387 : i32 to index
      %c2_357 = arith.constant 2 : index
      %c0_358 = arith.constant 0 : index
      %389 = vector.load %arg13[%388, %c2_357, %c0_358] : memref<14x14x6xf32, #tpu.memory_space<vmem>>, vector<1x10x6xf32>
      %390 = vector.shape_cast %389 : vector<1x10x6xf32> to vector<10x6xf32>
      %c0_359 = arith.constant 0 : index
      %c132_360 = arith.constant 132 : index
      %391 = vector.load %arg16[%c0_359, %c132_360] : memref<10x150xf32, #tpu.memory_space<vmem>>, vector<10x6xf32>
      tpu.vector_store %arg16[%c0_359, %c132_360], %390 {strides = array<i32>} : memref<10x150xf32, #tpu.memory_space<vmem>>, vector<10x6xf32>,
      %c4_i32_361 = arith.constant 4 : i32
      %392 = arith.addi %276, %c4_i32_361 : i32
      %393 = arith.index_cast %392 : i32 to index
      %c3_362 = arith.constant 3 : index
      %c0_363 = arith.constant 0 : index
      %394 = vector.load %arg13[%393, %c3_362, %c0_363] : memref<14x14x6xf32, #tpu.memory_space<vmem>>, vector<1x10x6xf32>
      %395 = vector.shape_cast %394 : vector<1x10x6xf32> to vector<10x6xf32>
      %c0_364 = arith.constant 0 : index
      %c138_365 = arith.constant 138 : index
      %396 = vector.load %arg16[%c0_364, %c138_365] : memref<10x150xf32, #tpu.memory_space<vmem>>, vector<10x6xf32>
      tpu.vector_store %arg16[%c0_364, %c138_365], %395 {strides = array<i32>} : memref<10x150xf32, #tpu.memory_space<vmem>>, vector<10x6xf32>,
      %c4_i32_366 = arith.constant 4 : i32
      %397 = arith.addi %276, %c4_i32_366 : i32
      %398 = arith.index_cast %397 : i32 to index
      %c4_367 = arith.constant 4 : index
      %c0_368 = arith.constant 0 : index
      %399 = vector.load %arg13[%398, %c4_367, %c0_368] : memref<14x14x6xf32, #tpu.memory_space<vmem>>, vector<1x10x6xf32>
      %400 = vector.shape_cast %399 : vector<1x10x6xf32> to vector<10x6xf32>
      %c0_369 = arith.constant 0 : index
      %c144_370 = arith.constant 144 : index
      %401 = vector.load %arg16[%c0_369, %c144_370] : memref<10x150xf32, #tpu.memory_space<vmem>>, vector<10x6xf32>
      tpu.vector_store %arg16[%c0_369, %c144_370], %400 {strides = array<i32>} : memref<10x150xf32, #tpu.memory_space<vmem>>, vector<10x6xf32>,
      %c0_371 = arith.constant 0 : index
      %c0_372 = arith.constant 0 : index
      %402 = vector.load %arg16[%c0_371, %c0_372] : memref<10x150xf32, #tpu.memory_space<vmem>>, vector<10x150xf32>
      %403 = arith.truncf %402 : vector<10x150xf32> to vector<10x150xbf16>
      %cst_373 = arith.constant dense<0.000000e+00> : vector<10x16xf32>
      %404 = tpu.matmul %403, %2, %cst_373 {dimension_numbers = #tpu.dot_dimension_numbers<[1], [0], [0], [1], [0, 0, 1, 1], [], []>} : vector<10x150xbf16>, vector<150x16xbf16>, vector<10x16xf32> -> vector<10x16xf32>
      %405 = vector.broadcast %3 : vector<1x16xf32> to vector<10x16xf32>
      %406 = arith.addf %404, %405 : vector<10x16xf32>
      %cst_374 = arith.constant 0.000000e+00 : f32
      %407 = vector.broadcast %cst_374 : f32 to vector<10x16xf32>
      %408 = arith.maximumf %406, %407 : vector<10x16xf32>
      %409 = arith.maximumf %274, %408 : vector<10x16xf32>
      %cst_375 = arith.constant dense<0.000000e+00> : vector<5x16xf32>
      %410 = tpu.matmul %30, %409, %cst_375 {dimension_numbers = #tpu.dot_dimension_numbers<[1], [0], [0], [1], [0, 0, 1, 1], [], []>} : vector<5x10xf32>, vector<10x16xf32>, vector<5x16xf32> -> vector<5x16xf32>
      %cst_376 = arith.constant dense<0.000000e+00> : vector<5x16xf32>
      %411 = tpu.matmul %39, %409, %cst_376 {dimension_numbers = #tpu.dot_dimension_numbers<[1], [0], [0], [1], [0, 0, 1, 1], [], []>} : vector<5x10xf32>, vector<10x16xf32>, vector<5x16xf32> -> vector<5x16xf32>
      %412 = arith.maximumf %410, %411 : vector<5x16xf32>
      %413 = arith.index_cast %arg18 : i32 to index
      %c0_377 = arith.constant 0 : index
      %c0_378 = arith.constant 0 : index
      %414 = vector.load %arg14[%413, %c0_377, %c0_378] : memref<5x5x16xf32, #tpu.memory_space<vmem>>, vector<1x5x16xf32>
      %415 = vector.shape_cast %414 : vector<1x5x16xf32> to vector<5x16xf32>
      %416 = vector.shape_cast %412 : vector<5x16xf32> to vector<1x5x16xf32>
      tpu.vector_store %arg14[%413, %c0_377, %c0_378], %416 {strides = array<i32>} : memref<5x5x16xf32, #tpu.memory_space<vmem>>, vector<1x5x16xf32>,
    }
    %c5_i32_17 = arith.constant 5 : i32
    %c0_18 = arith.constant 0 : index
    %c0_19 = arith.constant 0 : index
    %c0_20 = arith.constant 0 : index
    %42 = vector.load %arg14[%c0_18, %c0_19, %c0_20] : memref<5x5x16xf32, #tpu.memory_space<vmem>>, vector<1x1x16xf32>
    %43 = vector.shape_cast %42 : vector<1x1x16xf32> to vector<1x16xf32>
    %c0_21 = arith.constant 0 : index
    %c0_22 = arith.constant 0 : index
    %44 = vector.load %arg17[%c0_21, %c0_22] : memref<1x400xf32, #tpu.memory_space<vmem>>, vector<1x16xf32>
    tpu.vector_store %arg17[%c0_21, %c0_22], %43 {strides = array<i32>} : memref<1x400xf32, #tpu.memory_space<vmem>>, vector<1x16xf32>,
    %c0_23 = arith.constant 0 : index
    %c1 = arith.constant 1 : index
    %c0_24 = arith.constant 0 : index
    %45 = vector.load %arg14[%c0_23, %c1, %c0_24] : memref<5x5x16xf32, #tpu.memory_space<vmem>>, vector<1x1x16xf32>
    %46 = vector.shape_cast %45 : vector<1x1x16xf32> to vector<1x16xf32>
    %c0_25 = arith.constant 0 : index
    %c16 = arith.constant 16 : index
    %47 = vector.load %arg17[%c0_25, %c16] : memref<1x400xf32, #tpu.memory_space<vmem>>, vector<1x16xf32>
    tpu.vector_store %arg17[%c0_25, %c16], %46 {strides = array<i32>} : memref<1x400xf32, #tpu.memory_space<vmem>>, vector<1x16xf32>,
    %c0_26 = arith.constant 0 : index
    %c2 = arith.constant 2 : index
    %c0_27 = arith.constant 0 : index
    %48 = vector.load %arg14[%c0_26, %c2, %c0_27] : memref<5x5x16xf32, #tpu.memory_space<vmem>>, vector<1x1x16xf32>
    %49 = vector.shape_cast %48 : vector<1x1x16xf32> to vector<1x16xf32>
    %c0_28 = arith.constant 0 : index
    %c32 = arith.constant 32 : index
    %50 = vector.load %arg17[%c0_28, %c32] : memref<1x400xf32, #tpu.memory_space<vmem>>, vector<1x16xf32>
    tpu.vector_store %arg17[%c0_28, %c32], %49 {strides = array<i32>} : memref<1x400xf32, #tpu.memory_space<vmem>>, vector<1x16xf32>,
    %c0_29 = arith.constant 0 : index
    %c3 = arith.constant 3 : index
    %c0_30 = arith.constant 0 : index
    %51 = vector.load %arg14[%c0_29, %c3, %c0_30] : memref<5x5x16xf32, #tpu.memory_space<vmem>>, vector<1x1x16xf32>
    %52 = vector.shape_cast %51 : vector<1x1x16xf32> to vector<1x16xf32>
    %c0_31 = arith.constant 0 : index
    %c48 = arith.constant 48 : index
    %53 = vector.load %arg17[%c0_31, %c48] : memref<1x400xf32, #tpu.memory_space<vmem>>, vector<1x16xf32>
    tpu.vector_store %arg17[%c0_31, %c48], %52 {strides = array<i32>} : memref<1x400xf32, #tpu.memory_space<vmem>>, vector<1x16xf32>,
    %c0_32 = arith.constant 0 : index
    %c4 = arith.constant 4 : index
    %c0_33 = arith.constant 0 : index
    %54 = vector.load %arg14[%c0_32, %c4, %c0_33] : memref<5x5x16xf32, #tpu.memory_space<vmem>>, vector<1x1x16xf32>
    %55 = vector.shape_cast %54 : vector<1x1x16xf32> to vector<1x16xf32>
    %c0_34 = arith.constant 0 : index
    %c64 = arith.constant 64 : index
    %56 = vector.load %arg17[%c0_34, %c64] : memref<1x400xf32, #tpu.memory_space<vmem>>, vector<1x16xf32>
    tpu.vector_store %arg17[%c0_34, %c64], %55 {strides = array<i32>} : memref<1x400xf32, #tpu.memory_space<vmem>>, vector<1x16xf32>,
    %c1_35 = arith.constant 1 : index
    %c0_36 = arith.constant 0 : index
    %c0_37 = arith.constant 0 : index
    %57 = vector.load %arg14[%c1_35, %c0_36, %c0_37] : memref<5x5x16xf32, #tpu.memory_space<vmem>>, vector<1x1x16xf32>
    %58 = vector.shape_cast %57 : vector<1x1x16xf32> to vector<1x16xf32>
    %c0_38 = arith.constant 0 : index
    %c80 = arith.constant 80 : index
    %59 = vector.load %arg17[%c0_38, %c80] : memref<1x400xf32, #tpu.memory_space<vmem>>, vector<1x16xf32>
    tpu.vector_store %arg17[%c0_38, %c80], %58 {strides = array<i32>} : memref<1x400xf32, #tpu.memory_space<vmem>>, vector<1x16xf32>,
    %c1_39 = arith.constant 1 : index
    %c1_40 = arith.constant 1 : index
    %c0_41 = arith.constant 0 : index
    %60 = vector.load %arg14[%c1_39, %c1_40, %c0_41] : memref<5x5x16xf32, #tpu.memory_space<vmem>>, vector<1x1x16xf32>
    %61 = vector.shape_cast %60 : vector<1x1x16xf32> to vector<1x16xf32>
    %c0_42 = arith.constant 0 : index
    %c96 = arith.constant 96 : index
    %62 = vector.load %arg17[%c0_42, %c96] : memref<1x400xf32, #tpu.memory_space<vmem>>, vector<1x16xf32>
    tpu.vector_store %arg17[%c0_42, %c96], %61 {strides = array<i32>} : memref<1x400xf32, #tpu.memory_space<vmem>>, vector<1x16xf32>,
    %c1_43 = arith.constant 1 : index
    %c2_44 = arith.constant 2 : index
    %c0_45 = arith.constant 0 : index
    %63 = vector.load %arg14[%c1_43, %c2_44, %c0_45] : memref<5x5x16xf32, #tpu.memory_space<vmem>>, vector<1x1x16xf32>
    %64 = vector.shape_cast %63 : vector<1x1x16xf32> to vector<1x16xf32>
    %c0_46 = arith.constant 0 : index
    %c112 = arith.constant 112 : index
    %65 = vector.load %arg17[%c0_46, %c112] : memref<1x400xf32, #tpu.memory_space<vmem>>, vector<1x16xf32>
    tpu.vector_store %arg17[%c0_46, %c112], %64 {strides = array<i32>} : memref<1x400xf32, #tpu.memory_space<vmem>>, vector<1x16xf32>,
    %c1_47 = arith.constant 1 : index
    %c3_48 = arith.constant 3 : index
    %c0_49 = arith.constant 0 : index
    %66 = vector.load %arg14[%c1_47, %c3_48, %c0_49] : memref<5x5x16xf32, #tpu.memory_space<vmem>>, vector<1x1x16xf32>
    %67 = vector.shape_cast %66 : vector<1x1x16xf32> to vector<1x16xf32>
    %c0_50 = arith.constant 0 : index
    %c128 = arith.constant 128 : index
    %68 = vector.load %arg17[%c0_50, %c128] : memref<1x400xf32, #tpu.memory_space<vmem>>, vector<1x16xf32>
    tpu.vector_store %arg17[%c0_50, %c128], %67 {strides = array<i32>} : memref<1x400xf32, #tpu.memory_space<vmem>>, vector<1x16xf32>,
    %c1_51 = arith.constant 1 : index
    %c4_52 = arith.constant 4 : index
    %c0_53 = arith.constant 0 : index
    %69 = vector.load %arg14[%c1_51, %c4_52, %c0_53] : memref<5x5x16xf32, #tpu.memory_space<vmem>>, vector<1x1x16xf32>
    %70 = vector.shape_cast %69 : vector<1x1x16xf32> to vector<1x16xf32>
    %c0_54 = arith.constant 0 : index
    %c144 = arith.constant 144 : index
    %71 = vector.load %arg17[%c0_54, %c144] : memref<1x400xf32, #tpu.memory_space<vmem>>, vector<1x16xf32>
    tpu.vector_store %arg17[%c0_54, %c144], %70 {strides = array<i32>} : memref<1x400xf32, #tpu.memory_space<vmem>>, vector<1x16xf32>,
    %c2_55 = arith.constant 2 : index
    %c0_56 = arith.constant 0 : index
    %c0_57 = arith.constant 0 : index
    %72 = vector.load %arg14[%c2_55, %c0_56, %c0_57] : memref<5x5x16xf32, #tpu.memory_space<vmem>>, vector<1x1x16xf32>
    %73 = vector.shape_cast %72 : vector<1x1x16xf32> to vector<1x16xf32>
    %c0_58 = arith.constant 0 : index
    %c160 = arith.constant 160 : index
    %74 = vector.load %arg17[%c0_58, %c160] : memref<1x400xf32, #tpu.memory_space<vmem>>, vector<1x16xf32>
    tpu.vector_store %arg17[%c0_58, %c160], %73 {strides = array<i32>} : memref<1x400xf32, #tpu.memory_space<vmem>>, vector<1x16xf32>,
    %c2_59 = arith.constant 2 : index
    %c1_60 = arith.constant 1 : index
    %c0_61 = arith.constant 0 : index
    %75 = vector.load %arg14[%c2_59, %c1_60, %c0_61] : memref<5x5x16xf32, #tpu.memory_space<vmem>>, vector<1x1x16xf32>
    %76 = vector.shape_cast %75 : vector<1x1x16xf32> to vector<1x16xf32>
    %c0_62 = arith.constant 0 : index
    %c176 = arith.constant 176 : index
    %77 = vector.load %arg17[%c0_62, %c176] : memref<1x400xf32, #tpu.memory_space<vmem>>, vector<1x16xf32>
    tpu.vector_store %arg17[%c0_62, %c176], %76 {strides = array<i32>} : memref<1x400xf32, #tpu.memory_space<vmem>>, vector<1x16xf32>,
    %c2_63 = arith.constant 2 : index
    %c2_64 = arith.constant 2 : index
    %c0_65 = arith.constant 0 : index
    %78 = vector.load %arg14[%c2_63, %c2_64, %c0_65] : memref<5x5x16xf32, #tpu.memory_space<vmem>>, vector<1x1x16xf32>
    %79 = vector.shape_cast %78 : vector<1x1x16xf32> to vector<1x16xf32>
    %c0_66 = arith.constant 0 : index
    %c192 = arith.constant 192 : index
    %80 = vector.load %arg17[%c0_66, %c192] : memref<1x400xf32, #tpu.memory_space<vmem>>, vector<1x16xf32>
    tpu.vector_store %arg17[%c0_66, %c192], %79 {strides = array<i32>} : memref<1x400xf32, #tpu.memory_space<vmem>>, vector<1x16xf32>,
    %c2_67 = arith.constant 2 : index
    %c3_68 = arith.constant 3 : index
    %c0_69 = arith.constant 0 : index
    %81 = vector.load %arg14[%c2_67, %c3_68, %c0_69] : memref<5x5x16xf32, #tpu.memory_space<vmem>>, vector<1x1x16xf32>
    %82 = vector.shape_cast %81 : vector<1x1x16xf32> to vector<1x16xf32>
    %c0_70 = arith.constant 0 : index
    %c208 = arith.constant 208 : index
    %83 = vector.load %arg17[%c0_70, %c208] : memref<1x400xf32, #tpu.memory_space<vmem>>, vector<1x16xf32>
    tpu.vector_store %arg17[%c0_70, %c208], %82 {strides = array<i32>} : memref<1x400xf32, #tpu.memory_space<vmem>>, vector<1x16xf32>,
    %c2_71 = arith.constant 2 : index
    %c4_72 = arith.constant 4 : index
    %c0_73 = arith.constant 0 : index
    %84 = vector.load %arg14[%c2_71, %c4_72, %c0_73] : memref<5x5x16xf32, #tpu.memory_space<vmem>>, vector<1x1x16xf32>
    %85 = vector.shape_cast %84 : vector<1x1x16xf32> to vector<1x16xf32>
    %c0_74 = arith.constant 0 : index
    %c224 = arith.constant 224 : index
    %86 = vector.load %arg17[%c0_74, %c224] : memref<1x400xf32, #tpu.memory_space<vmem>>, vector<1x16xf32>
    tpu.vector_store %arg17[%c0_74, %c224], %85 {strides = array<i32>} : memref<1x400xf32, #tpu.memory_space<vmem>>, vector<1x16xf32>,
    %c3_75 = arith.constant 3 : index
    %c0_76 = arith.constant 0 : index
    %c0_77 = arith.constant 0 : index
    %87 = vector.load %arg14[%c3_75, %c0_76, %c0_77] : memref<5x5x16xf32, #tpu.memory_space<vmem>>, vector<1x1x16xf32>
    %88 = vector.shape_cast %87 : vector<1x1x16xf32> to vector<1x16xf32>
    %c0_78 = arith.constant 0 : index
    %c240 = arith.constant 240 : index
    %89 = vector.load %arg17[%c0_78, %c240] : memref<1x400xf32, #tpu.memory_space<vmem>>, vector<1x16xf32>
    tpu.vector_store %arg17[%c0_78, %c240], %88 {strides = array<i32>} : memref<1x400xf32, #tpu.memory_space<vmem>>, vector<1x16xf32>,
    %c3_79 = arith.constant 3 : index
    %c1_80 = arith.constant 1 : index
    %c0_81 = arith.constant 0 : index
    %90 = vector.load %arg14[%c3_79, %c1_80, %c0_81] : memref<5x5x16xf32, #tpu.memory_space<vmem>>, vector<1x1x16xf32>
    %91 = vector.shape_cast %90 : vector<1x1x16xf32> to vector<1x16xf32>
    %c0_82 = arith.constant 0 : index
    %c256 = arith.constant 256 : index
    %92 = vector.load %arg17[%c0_82, %c256] : memref<1x400xf32, #tpu.memory_space<vmem>>, vector<1x16xf32>
    tpu.vector_store %arg17[%c0_82, %c256], %91 {strides = array<i32>} : memref<1x400xf32, #tpu.memory_space<vmem>>, vector<1x16xf32>,
    %c3_83 = arith.constant 3 : index
    %c2_84 = arith.constant 2 : index
    %c0_85 = arith.constant 0 : index
    %93 = vector.load %arg14[%c3_83, %c2_84, %c0_85] : memref<5x5x16xf32, #tpu.memory_space<vmem>>, vector<1x1x16xf32>
    %94 = vector.shape_cast %93 : vector<1x1x16xf32> to vector<1x16xf32>
    %c0_86 = arith.constant 0 : index
    %c272 = arith.constant 272 : index
    %95 = vector.load %arg17[%c0_86, %c272] : memref<1x400xf32, #tpu.memory_space<vmem>>, vector<1x16xf32>
    tpu.vector_store %arg17[%c0_86, %c272], %94 {strides = array<i32>} : memref<1x400xf32, #tpu.memory_space<vmem>>, vector<1x16xf32>,
    %c3_87 = arith.constant 3 : index
    %c3_88 = arith.constant 3 : index
    %c0_89 = arith.constant 0 : index
    %96 = vector.load %arg14[%c3_87, %c3_88, %c0_89] : memref<5x5x16xf32, #tpu.memory_space<vmem>>, vector<1x1x16xf32>
    %97 = vector.shape_cast %96 : vector<1x1x16xf32> to vector<1x16xf32>
    %c0_90 = arith.constant 0 : index
    %c288 = arith.constant 288 : index
    %98 = vector.load %arg17[%c0_90, %c288] : memref<1x400xf32, #tpu.memory_space<vmem>>, vector<1x16xf32>
    tpu.vector_store %arg17[%c0_90, %c288], %97 {strides = array<i32>} : memref<1x400xf32, #tpu.memory_space<vmem>>, vector<1x16xf32>,
    %c3_91 = arith.constant 3 : index
    %c4_92 = arith.constant 4 : index
    %c0_93 = arith.constant 0 : index
    %99 = vector.load %arg14[%c3_91, %c4_92, %c0_93] : memref<5x5x16xf32, #tpu.memory_space<vmem>>, vector<1x1x16xf32>
    %100 = vector.shape_cast %99 : vector<1x1x16xf32> to vector<1x16xf32>
    %c0_94 = arith.constant 0 : index
    %c304 = arith.constant 304 : index
    %101 = vector.load %arg17[%c0_94, %c304] : memref<1x400xf32, #tpu.memory_space<vmem>>, vector<1x16xf32>
    tpu.vector_store %arg17[%c0_94, %c304], %100 {strides = array<i32>} : memref<1x400xf32, #tpu.memory_space<vmem>>, vector<1x16xf32>,
    %c4_95 = arith.constant 4 : index
    %c0_96 = arith.constant 0 : index
    %c0_97 = arith.constant 0 : index
    %102 = vector.load %arg14[%c4_95, %c0_96, %c0_97] : memref<5x5x16xf32, #tpu.memory_space<vmem>>, vector<1x1x16xf32>
    %103 = vector.shape_cast %102 : vector<1x1x16xf32> to vector<1x16xf32>
    %c0_98 = arith.constant 0 : index
    %c320 = arith.constant 320 : index
    %104 = vector.load %arg17[%c0_98, %c320] : memref<1x400xf32, #tpu.memory_space<vmem>>, vector<1x16xf32>
    tpu.vector_store %arg17[%c0_98, %c320], %103 {strides = array<i32>} : memref<1x400xf32, #tpu.memory_space<vmem>>, vector<1x16xf32>,
    %c4_99 = arith.constant 4 : index
    %c1_100 = arith.constant 1 : index
    %c0_101 = arith.constant 0 : index
    %105 = vector.load %arg14[%c4_99, %c1_100, %c0_101] : memref<5x5x16xf32, #tpu.memory_space<vmem>>, vector<1x1x16xf32>
    %106 = vector.shape_cast %105 : vector<1x1x16xf32> to vector<1x16xf32>
    %c0_102 = arith.constant 0 : index
    %c336 = arith.constant 336 : index
    %107 = vector.load %arg17[%c0_102, %c336] : memref<1x400xf32, #tpu.memory_space<vmem>>, vector<1x16xf32>
    tpu.vector_store %arg17[%c0_102, %c336], %106 {strides = array<i32>} : memref<1x400xf32, #tpu.memory_space<vmem>>, vector<1x16xf32>,
    %c4_103 = arith.constant 4 : index
    %c2_104 = arith.constant 2 : index
    %c0_105 = arith.constant 0 : index
    %108 = vector.load %arg14[%c4_103, %c2_104, %c0_105] : memref<5x5x16xf32, #tpu.memory_space<vmem>>, vector<1x1x16xf32>
    %109 = vector.shape_cast %108 : vector<1x1x16xf32> to vector<1x16xf32>
    %c0_106 = arith.constant 0 : index
    %c352 = arith.constant 352 : index
    %110 = vector.load %arg17[%c0_106, %c352] : memref<1x400xf32, #tpu.memory_space<vmem>>, vector<1x16xf32>
    tpu.vector_store %arg17[%c0_106, %c352], %109 {strides = array<i32>} : memref<1x400xf32, #tpu.memory_space<vmem>>, vector<1x16xf32>,
    %c4_107 = arith.constant 4 : index
    %c3_108 = arith.constant 3 : index
    %c0_109 = arith.constant 0 : index
    %111 = vector.load %arg14[%c4_107, %c3_108, %c0_109] : memref<5x5x16xf32, #tpu.memory_space<vmem>>, vector<1x1x16xf32>
    %112 = vector.shape_cast %111 : vector<1x1x16xf32> to vector<1x16xf32>
    %c0_110 = arith.constant 0 : index
    %c368 = arith.constant 368 : index
    %113 = vector.load %arg17[%c0_110, %c368] : memref<1x400xf32, #tpu.memory_space<vmem>>, vector<1x16xf32>
    tpu.vector_store %arg17[%c0_110, %c368], %112 {strides = array<i32>} : memref<1x400xf32, #tpu.memory_space<vmem>>, vector<1x16xf32>,
    %c4_111 = arith.constant 4 : index
    %c4_112 = arith.constant 4 : index
    %c0_113 = arith.constant 0 : index
    %114 = vector.load %arg14[%c4_111, %c4_112, %c0_113] : memref<5x5x16xf32, #tpu.memory_space<vmem>>, vector<1x1x16xf32>
    %115 = vector.shape_cast %114 : vector<1x1x16xf32> to vector<1x16xf32>
    %c0_114 = arith.constant 0 : index
    %c384 = arith.constant 384 : index
    %116 = vector.load %arg17[%c0_114, %c384] : memref<1x400xf32, #tpu.memory_space<vmem>>, vector<1x16xf32>
    tpu.vector_store %arg17[%c0_114, %c384], %115 {strides = array<i32>} : memref<1x400xf32, #tpu.memory_space<vmem>>, vector<1x16xf32>,
    %c0_115 = arith.constant 0 : index
    %c0_116 = arith.constant 0 : index
    %117 = vector.load %arg17[%c0_115, %c0_116] : memref<1x400xf32, #tpu.memory_space<vmem>>, vector<1x400xf32>
    %118 = arith.truncf %117 : vector<1x400xf32> to vector<1x400xbf16>
    %c0_117 = arith.constant 0 : index
    %c0_118 = arith.constant 0 : index
    %119 = vector.load %arg6[%c0_117, %c0_118] : memref<400x128xbf16, #tpu.memory_space<vmem>>, vector<400x128xbf16>
    %cst = arith.constant dense<0.000000e+00> : vector<1x128xf32>
    %120 = tpu.matmul %118, %119, %cst {dimension_numbers = #tpu.dot_dimension_numbers<[1], [0], [0], [1], [0, 0, 1, 1], [], []>} : vector<1x400xbf16>, vector<400x128xbf16>, vector<1x128xf32> -> vector<1x128xf32>
    %c0_119 = arith.constant 0 : index
    %c0_120 = arith.constant 0 : index
    %121 = vector.load %arg7[%c0_119, %c0_120] : memref<1x128xf32, #tpu.memory_space<vmem>>, vector<1x128xf32>
    %122 = arith.addf %120, %121 : vector<1x128xf32>
    %cst_121 = arith.constant 0.000000e+00 : f32
    %123 = vector.broadcast %cst_121 : f32 to vector<1x128xf32>
    %124 = arith.maximumf %122, %123 : vector<1x128xf32>
    %125 = arith.truncf %124 : vector<1x128xf32> to vector<1x128xbf16>
    %c0_122 = arith.constant 0 : index
    %c0_123 = arith.constant 0 : index
    %126 = vector.load %arg8[%c0_122, %c0_123] : memref<128x128xbf16, #tpu.memory_space<vmem>>, vector<128x128xbf16>
    %cst_124 = arith.constant dense<0.000000e+00> : vector<1x128xf32>
    %127 = tpu.matmul %125, %126, %cst_124 {dimension_numbers = #tpu.dot_dimension_numbers<[1], [0], [0], [1], [0, 0, 1, 1], [], []>} : vector<1x128xbf16>, vector<128x128xbf16>, vector<1x128xf32> -> vector<1x128xf32>
    %c0_125 = arith.constant 0 : index
    %c0_126 = arith.constant 0 : index
    %128 = vector.load %arg9[%c0_125, %c0_126] : memref<1x128xf32, #tpu.memory_space<vmem>>, vector<1x128xf32>
    %129 = arith.addf %127, %128 : vector<1x128xf32>
    %cst_127 = arith.constant 0.000000e+00 : f32
    %130 = vector.broadcast %cst_127 : f32 to vector<1x128xf32>
    %131 = arith.maximumf %129, %130 : vector<1x128xf32>
    %132 = arith.truncf %131 : vector<1x128xf32> to vector<1x128xbf16>
    %c0_128 = arith.constant 0 : index
    %c0_129 = arith.constant 0 : index
    %133 = vector.load %arg10[%c0_128, %c0_129] : memref<128x10xbf16, #tpu.memory_space<vmem>>, vector<128x10xbf16>
    %cst_130 = arith.constant dense<0.000000e+00> : vector<1x10xf32>
    %134 = tpu.matmul %132, %133, %cst_130 {dimension_numbers = #tpu.dot_dimension_numbers<[1], [0], [0], [1], [0, 0, 1, 1], [], []>} : vector<1x128xbf16>, vector<128x10xbf16>, vector<1x10xf32> -> vector<1x10xf32>
    %c0_131 = arith.constant 0 : index
    %c0_132 = arith.constant 0 : index
    %135 = vector.load %arg11[%c0_131, %c0_132] : memref<1x10xf32, #tpu.memory_space<vmem>>, vector<1x10xf32>
    %136 = arith.addf %134, %135 : vector<1x10xf32>
    %cst_133 = arith.constant 0.000000e+00 : f32
    %137 = vector.broadcast %cst_133 : f32 to vector<1x10xf32>
    %138 = arith.maximumf %136, %137 : vector<1x10xf32>
    %c0_134 = arith.constant 0 : index
    %c0_135 = arith.constant 0 : index
    %c0_136 = arith.constant 0 : index
    %139 = vector.load %arg12[%c0_134, %c0_135, %c0_136] : memref<1x1x10xf32, #tpu.memory_space<vmem>>, vector<1x1x10xf32>
    %140 = vector.shape_cast %139 : vector<1x1x10xf32> to vector<1x10xf32>
    %141 = vector.shape_cast %138 : vector<1x10xf32> to vector<1x1x10xf32>
    tpu.vector_store %arg12[%c0_134, %c0_135, %c0_136], %141 {strides = array<i32>} : memref<1x1x10xf32, #tpu.memory_space<vmem>>, vector<1x1x10xf32>,
    return
  }
  func.func @transform_0(%arg0: i32) -> (i32, i32, i32, i32) {
    %c0_i32 = arith.constant 0 : i32
    %c0_i32_0 = arith.constant 0 : i32
    %c0_i32_1 = arith.constant 0 : i32
    %c0_i32_2 = arith.constant 0 : i32
    return %arg0, %c0_i32, %c0_i32_0, %c0_i32_1 : i32, i32, i32, i32
  }
  func.func @transform_1(%arg0: i32) -> (i32, i32) {
    %c0_i32 = arith.constant 0 : i32
    %c0_i32_0 = arith.constant 0 : i32
    %c0_i32_1 = arith.constant 0 : i32
    return %c0_i32, %c0_i32_0 : i32, i32
  }
  func.func @transform_2(%arg0: i32) -> (i32, i32) {
    %c0_i32 = arith.constant 0 : i32
    %c0_i32_0 = arith.constant 0 : i32
    %c0_i32_1 = arith.constant 0 : i32
    return %c0_i32, %c0_i32_0 : i32, i32
  }
  func.func @transform_3(%arg0: i32) -> (i32, i32) {
    %c0_i32 = arith.constant 0 : i32
    %c0_i32_0 = arith.constant 0 : i32
    %c0_i32_1 = arith.constant 0 : i32
    return %c0_i32, %c0_i32_0 : i32, i32
  }
  func.func @transform_4(%arg0: i32) -> (i32, i32) {
    %c0_i32 = arith.constant 0 : i32
    %c0_i32_0 = arith.constant 0 : i32
    %c0_i32_1 = arith.constant 0 : i32
    return %c0_i32, %c0_i32_0 : i32, i32
  }
  func.func @transform_5(%arg0: i32) -> (i32, i32) {
    %c0_i32 = arith.constant 0 : i32
    %c0_i32_0 = arith.constant 0 : i32
    %c0_i32_1 = arith.constant 0 : i32
    return %c0_i32, %c0_i32_0 : i32, i32
  }
  func.func @transform_6(%arg0: i32) -> (i32, i32) {
    %c0_i32 = arith.constant 0 : i32
    %c0_i32_0 = arith.constant 0 : i32
    %c0_i32_1 = arith.constant 0 : i32
    return %c0_i32, %c0_i32_0 : i32, i32
  }
  func.func @transform_7(%arg0: i32) -> (i32, i32) {
    %c0_i32 = arith.constant 0 : i32
    %c0_i32_0 = arith.constant 0 : i32
    %c0_i32_1 = arith.constant 0 : i32
    return %c0_i32, %c0_i32_0 : i32, i32
  }
  func.func @transform_8(%arg0: i32) -> (i32, i32) {
    %c0_i32 = arith.constant 0 : i32
    %c0_i32_0 = arith.constant 0 : i32
    %c0_i32_1 = arith.constant 0 : i32
    return %c0_i32, %c0_i32_0 : i32, i32
  }
  func.func @transform_9(%arg0: i32) -> (i32, i32) {
    %c0_i32 = arith.constant 0 : i32
    %c0_i32_0 = arith.constant 0 : i32
    %c0_i32_1 = arith.constant 0 : i32
    return %c0_i32, %c0_i32_0 : i32, i32
  }
  func.func @transform_10(%arg0: i32) -> (i32, i32) {
    %c0_i32 = arith.constant 0 : i32
    %c0_i32_0 = arith.constant 0 : i32
    %c0_i32_1 = arith.constant 0 : i32
    return %c0_i32, %c0_i32_0 : i32, i32
  }
  func.func @transform_11(%arg0: i32) -> (i32, i32, i32) {
    %c0_i32 = arith.constant 0 : i32
    %c0_i32_0 = arith.constant 0 : i32
    %c0_i32_1 = arith.constant 0 : i32
    return %arg0, %c0_i32, %c0_i32_0 : i32, i32, i32
  }
}

</mosaic_0001>

<llo_original>
// kernel: lenet_forward.1
$region0: #{lenet_forward.1}
  #allocation0 [shape = 'u32[]', space=smem, size = 0x4, offset = 0x4, fixed_abs, tag = 'smem constant byte address 0x4 - core index']
  #allocation1 [shape = 'u32[144,128]{1,0:T(1,128)}', space=vmem, size = 0x12000, scoped, tag = 'internal scratch']
  #allocation2 [shape = 'f32[14,14,6]{2,1,0:T(8,128)}', space=vmem, size = 0x1c000, scoped, tag = 'scratch operand']
  #allocation3 [shape = 'f32[5,5,16]{2,1,0:T(8,128)}', space=vmem, size = 0x5000, scoped, tag = 'scratch operand']
  #allocation4 [shape = 'f32[28,75]{1,0:T(8,128)}', space=vmem, size = 0x4000, scoped, tag = 'scratch operand']
  #allocation5 [shape = 'f32[10,150]{1,0:T(8,128)}', space=vmem, size = 0x4000, scoped, tag = 'scratch operand']
  #allocation6 [shape = 'f32[1,400]{1,0:T(1,128)}', space=vmem, size = 0x800, scoped, tag = 'scratch operand']
  %s0 = inlined_call_operand.vmem [shape: f32[2,32,32,3], index: 0, kind: input, shape index: {}]
  %s1 = inlined_call_operand.vmem [shape: bf16[75,6], index: 1, kind: input, shape index: {}]
  %s2 = inlined_call_operand.vmem [shape: f32[1,6], index: 2, kind: input, shape index: {}]
  %s3 = inlined_call_operand.vmem [shape: bf16[150,16], index: 3, kind: input, shape index: {}]
  %s4 = inlined_call_operand.vmem [shape: f32[1,16], index: 4, kind: input, shape index: {}]
  %s5 = inlined_call_operand.vmem [shape: bf16[400,128], index: 5, kind: input, shape index: {}]
  %s6 = inlined_call_operand.vmem [shape: f32[1,128], index: 6, kind: input, shape index: {}]
  %s7 = inlined_call_operand.vmem [shape: bf16[128,128], index: 7, kind: input, shape index: {}]
  %s8 = inlined_call_operand.vmem [shape: f32[1,128], index: 8, kind: input, shape index: {}]
  %s9 = inlined_call_operand.vmem [shape: bf16[128,10], index: 9, kind: input, shape index: {}]
  %s10 = inlined_call_operand.vmem [shape: f32[1,10], index: 10, kind: input, shape index: {}]
  %s11 = inlined_call_operand.hbm [shape: f32[2,1,10], index: 11, kind: output, shape index: {}]
  %s12 = sld [smem:[#allocation0]]
  $region91: #{lenet_forward.1} parent=0
    _
  %s14 = ssub.s32 1, %s12
  %s15 = scalar_select 0, %s14, %s12
  $region1: #{lenet_forward.1} parent=0
    #allocation7 [shape = 'u8[1024]{0}', space=vmem, size = 0x400, scoped, tag = 'output window, operand 0']
    #allocation8 [shape = 's32[2]{0}', space=sflag, size = 0x8, scoped, tag = 'scoped memory for lenet_forward.1']
    %16 = vsyncpa [#allocation8], 0
    %s17 = scalar_lea.sflag [#allocation8], 1
    %18 = vsyncpa %s17, 0
    loop: start=0, step=1, limit=4
    $region2: #{lenet_forward.1} parent=1 // loop_pre_header
      _
    $region3: #{lenet_forward.1} parent=1 // loop_header
      %s20 = sphi 0, %s24
      %p21 = scmp.ge.s32.totalorder %s20, 4
      %s30 = sphi 0, %s32
      %s33 = sphi 0, %s30
      %s34 = sphi 0, %s33
      %s50 = sphi 0, %s34
      %s54 = sphi 0, %s54
      %s56 = sphi 0, %s54
      %s57 = sphi 0, %s56
      %s71 = sphi 0, %s57
      %s75 = sphi 0, %s75
      %s77 = sphi 0, %s75
      %s78 = sphi 0, %s77
      %s92 = sphi 0, %s78
      %s96 = sphi 0, %s96
      %s98 = sphi 0, %s96
      %s99 = sphi 0, %s98
      %s113 = sphi 0, %s99
      %s117 = sphi 0, %s117
      %s119 = sphi 0, %s117
      %s120 = sphi 0, %s119
      %s134 = sphi 0, %s120
      %s138 = sphi 0, %s138
      %s140 = sphi 0, %s138
      %s141 = sphi 0, %s140
      %s155 = sphi 0, %s141
      %s159 = sphi 0, %s159
      %s161 = sphi 0, %s159
      %s162 = sphi 0, %s161
      %s176 = sphi 0, %s162
      %s180 = sphi 0, %s180
      %s182 = sphi 0, %s180
      %s183 = sphi 0, %s182
      %s197 = sphi 0, %s183
      %s201 = sphi 0, %s201
      %s203 = sphi 0, %s201
      %s204 = sphi 0, %s203
      %s218 = sphi 0, %s204
      %s222 = sphi 0, %s222
      %s224 = sphi 0, %s222
      %s225 = sphi 0, %s224
      %s239 = sphi 0, %s225
      %s243 = sphi 0, %s243
      %s245 = sphi 0, %s243
      %s246 = sphi 0, %s245
      %s260 = sphi 0, %s246
      %s266 = sphi 0, %s268
      %s269 = sphi 0, %s266
      %s270 = sphi 0, %s269
      %s286 = sphi 0, %s270
    $region4: #{lenet_forward.1} parent=1 // loop_header_branch
      %23 = sbr.rel (%p21) target = $region8
    $region5: #{lenet_forward.1} parent=1 // loop_body
      %s25 = ssub.s32 %s20, 1
      %s26 = ssub.s32 %s20, 2
      %s27 = sadd.s32 %s20, 1
      %s28 = ssub.s32 %s20, %s27
      %p29 = scmp.eq.s32.totalorder %s28, 0
      %s31 = sadd.s32 %s30, 1
      %s32 = scalar_select %p29, %s30, %s31
      %p35 = pneg %p29
      %p36 = scmp.eq.s32.totalorder %s20, 1
      %p37 = por %p35, %p36
      %p38 = scmp.ne.s32.totalorder %s30, %s33
      %p39 = scmp.eq.s32.totalorder %s20, 0
      %p40 = por %p38, %p39
      %p41 = scmp.ne.s32.totalorder %s30, %s33
      %p42 = scmp.eq.s32.totalorder %s25, 1
      %p43 = por %p41, %p42
      %p44 = scmp.ne.s32.totalorder %s33, %s34
      %p45 = scmp.eq.s32.totalorder %s25, 0
      %p46 = por %p44, %p45
      %p47 = scmp.ne.s32.totalorder %s33, %s34
      %p48 = scmp.eq.s32.totalorder %s26, 1
      %p49 = por %p47, %p48
      %p51 = scmp.ne.s32.totalorder %s34, %s50
      %p52 = scmp.eq.s32.totalorder %s26, 0
      %p53 = por %p51, %p52
      %s55 = sadd.s32 %s54, 1
      %p58 = scmp.eq.s32.totalorder %s20, 1
      %p59 = scmp.ne.s32.totalorder %s54, %s56
      %p60 = scmp.eq.s32.totalorder %s20, 0
      %p61 = por %p59, %p60
      %p62 = scmp.ne.s32.totalorder %s54, %s56
      %p63 = scmp.eq.s32.totalorder %s25, 1
      %p64 = por %p62, %p63
      %p65 = scmp.ne.s32.totalorder %s56, %s57
      %p66 = scmp.eq.s32.totalorder %s25, 0
      %p67 = por %p65, %p66
      %p68 = scmp.ne.s32.totalorder %s56, %s57
      %p69 = scmp.eq.s32.totalorder %s26, 1
      %p70 = por %p68, %p69
      %p72 = scmp.ne.s32.totalorder %s57, %s71
      %p73 = scmp.eq.s32.totalorder %s26, 0
      %p74 = por %p72, %p73
      %s76 = sadd.s32 %s75, 1
      %p79 = scmp.eq.s32.totalorder %s20, 1
      %p80 = scmp.ne.s32.totalorder %s75, %s77
      %p81 = scmp.eq.s32.totalorder %s20, 0
      %p82 = por %p80, %p81
      %p83 = scmp.ne.s32.totalorder %s75, %s77
      %p84 = scmp.eq.s32.totalorder %s25, 1
      %p85 = por %p83, %p84
      %p86 = scmp.ne.s32.totalorder %s77, %s78
      %p87 = scmp.eq.s32.totalorder %s25, 0
      %p88 = por %p86, %p87
      %p89 = scmp.ne.s32.totalorder %s77, %s78
      %p90 = scmp.eq.s32.totalorder %s26, 1
      %p91 = por %p89, %p90
      %p93 = scmp.ne.s32.totalorder %s78, %s92
      %p94 = scmp.eq.s32.totalorder %s26, 0
      %p95 = por %p93, %p94
      %s97 = sadd.s32 %s96, 1
      %p100 = scmp.eq.s32.totalorder %s20, 1
      %p101 = scmp.ne.s32.totalorder %s96, %s98
      %p102 = scmp.eq.s32.totalorder %s20, 0
      %p103 = por %p101, %p102
      %p104 = scmp.ne.s32.totalorder %s96, %s98
      %p105 = scmp.eq.s32.totalorder %s25, 1
      %p106 = por %p104, %p105
      %p107 = scmp.ne.s32.totalorder %s98, %s99
      %p108 = scmp.eq.s32.totalorder %s25, 0
      %p109 = por %p107, %p108
      %p110 = scmp.ne.s32.totalorder %s98, %s99
      %p111 = scmp.eq.s32.totalorder %s26, 1
      %p112 = por %p110, %p111
      %p114 = scmp.ne.s32.totalorder %s99, %s113
      %p115 = scmp.eq.s32.totalorder %s26, 0
      %p116 = por %p114, %p115
      %s118 = sadd.s32 %s117, 1
      %p121 = scmp.eq.s32.totalorder %s20, 1
      %p122 = scmp.ne.s32.totalorder %s117, %s119
      %p123 = scmp.eq.s32.totalorder %s20, 0
      %p124 = por %p122, %p123
      %p125 = scmp.ne.s32.totalorder %s117, %s119
      %p126 = scmp.eq.s32.totalorder %s25, 1
      %p127 = por %p125, %p126
      %p128 = scmp.ne.s32.totalorder %s119, %s120
      %p129 = scmp.eq.s32.totalorder %s25, 0
      %p130 = por %p128, %p129
      %p131 = scmp.ne.s32.totalorder %s119, %s120
      %p132 = scmp.eq.s32.totalorder %s26, 1
      %p133 = por %p131, %p132
      %p135 = scmp.ne.s32.totalorder %s120, %s134
      %p136 = scmp.eq.s32.totalorder %s26, 0
      %p137 = por %p135, %p136
      %s139 = sadd.s32 %s138, 1
      %p142 = scmp.eq.s32.totalorder %s20, 1
      %p143 = scmp.ne.s32.totalorder %s138, %s140
      %p144 = scmp.eq.s32.totalorder %s20, 0
      %p145 = por %p143, %p144
      %p146 = scmp.ne.s32.totalorder %s138, %s140
      %p147 = scmp.eq.s32.totalorder %s25, 1
      %p148 = por %p146, %p147
      %p149 = scmp.ne.s32.totalorder %s140, %s141
      %p150 = scmp.eq.s32.totalorder %s25, 0
      %p151 = por %p149, %p150
      %p152 = scmp.ne.s32.totalorder %s140, %s141
      %p153 = scmp.eq.s32.totalorder %s26, 1
      %p154 = por %p152, %p153
      %p156 = scmp.ne.s32.totalorder %s141, %s155
      %p157 = scmp.eq.s32.totalorder %s26, 0
      %p158 = por %p156, %p157
      %s160 = sadd.s32 %s159, 1
      %p163 = scmp.eq.s32.totalorder %s20, 1
      %p164 = scmp.ne.s32.totalorder %s159, %s161
      %p165 = scmp.eq.s32.totalorder %s20, 0
      %p166 = por %p164, %p165
      %p167 = scmp.ne.s32.totalorder %s159, %s161
      %p168 = scmp.eq.s32.totalorder %s25, 1
      %p169 = por %p167, %p168
      %p170 = scmp.ne.s32.totalorder %s161, %s162
      %p171 = scmp.eq.s32.totalorder %s25, 0
      %p172 = por %p170, %p171
      %p173 = scmp.ne.s32.totalorder %s161, %s162
      %p174 = scmp.eq.s32.totalorder %s26, 1
      %p175 = por %p173, %p174
      %p177 = scmp.ne.s32.totalorder %s162, %s176
      %p178 = scmp.eq.s32.totalorder %s26, 0
      %p179 = por %p177, %p178
      %s181 = sadd.s32 %s180, 1
      %p184 = scmp.eq.s32.totalorder %s20, 1
      %p185 = scmp.ne.s32.totalorder %s180, %s182
      %p186 = scmp.eq.s32.totalorder %s20, 0
      %p187 = por %p185, %p186
      %p188 = scmp.ne.s32.totalorder %s180, %s182
      %p189 = scmp.eq.s32.totalorder %s25, 1
      %p190 = por %p188, %p189
      %p191 = scmp.ne.s32.totalorder %s182, %s183
      %p192 = scmp.eq.s32.totalorder %s25, 0
      %p193 = por %p191, %p192
      %p194 = scmp.ne.s32.totalorder %s182, %s183
      %p195 = scmp.eq.s32.totalorder %s26, 1
      %p196 = por %p194, %p195
      %p198 = scmp.ne.s32.totalorder %s183, %s197
      %p199 = scmp.eq.s32.totalorder %s26, 0
      %p200 = por %p198, %p199
      %s202 = sadd.s32 %s201, 1
      %p205 = scmp.eq.s32.totalorder %s20, 1
      %p206 = scmp.ne.s32.totalorder %s201, %s203
      %p207 = scmp.eq.s32.totalorder %s20, 0
      %p208 = por %p206, %p207
      %p209 = scmp.ne.s32.totalorder %s201, %s203
      %p210 = scmp.eq.s32.totalorder %s25, 1
      %p211 = por %p209, %p210
      %p212 = scmp.ne.s32.totalorder %s203, %s204
      %p213 = scmp.eq.s32.totalorder %s25, 0
      %p214 = por %p212, %p213
      %p215 = scmp.ne.s32.totalorder %s203, %s204
      %p216 = scmp.eq.s32.totalorder %s26, 1
      %p217 = por %p215, %p216
      %p219 = scmp.ne.s32.totalorder %s204, %s218
      %p220 = scmp.eq.s32.totalorder %s26, 0
      %p221 = por %p219, %p220
      %s223 = sadd.s32 %s222, 1
      %p226 = scmp.eq.s32.totalorder %s20, 1
      %p227 = scmp.ne.s32.totalorder %s222, %s224
      %p228 = scmp.eq.s32.totalorder %s20, 0
      %p229 = por %p227, %p228
      %p230 = scmp.ne.s32.totalorder %s222, %s224
      %p231 = scmp.eq.s32.totalorder %s25, 1
      %p232 = por %p230, %p231
      %p233 = scmp.ne.s32.totalorder %s224, %s225
      %p234 = scmp.eq.s32.totalorder %s25, 0
      %p235 = por %p233, %p234
      %p236 = scmp.ne.s32.totalorder %s224, %s225
      %p237 = scmp.eq.s32.totalorder %s26, 1
      %p238 = por %p236, %p237
      %p240 = scmp.ne.s32.totalorder %s225, %s239
      %p241 = scmp.eq.s32.totalorder %s26, 0
      %p242 = por %p240, %p241
      %s244 = sadd.s32 %s243, 1
      %p247 = scmp.eq.s32.totalorder %s20, 1
      %p248 = scmp.ne.s32.totalorder %s243, %s245
      %p249 = scmp.eq.s32.totalorder %s20, 0
      %p250 = por %p248, %p249
      %p251 = scmp.ne.s32.totalorder %s243, %s245
      %p252 = scmp.eq.s32.totalorder %s25, 1
      %p253 = por %p251, %p252
      %p254 = scmp.ne.s32.totalorder %s245, %s246
      %p255 = scmp.eq.s32.totalorder %s25, 0
      %p256 = por %p254, %p255
      %p257 = scmp.ne.s32.totalorder %s245, %s246
      %p258 = scmp.eq.s32.totalorder %s26, 1
      %p259 = por %p257, %p258
      %p261 = scmp.ne.s32.totalorder %s246, %s260
      %p262 = scmp.eq.s32.totalorder %s26, 0
      %p263 = por %p261, %p262
      %s264 = ssub.s32 %s20, %s27
      %p265 = scmp.eq.s32.totalorder %s264, 0
      %s267 = sadd.s32 %s266, 1
      %s268 = scalar_select %p265, %s266, %s267
      %p271 = pneg %p265
      %p272 = scmp.eq.s32.totalorder %s20, 1
      %p273 = por %p271, %p272
      %p274 = scmp.ne.s32.totalorder %s266, %s269
      %p275 = scmp.eq.s32.totalorder %s20, 0
      %p276 = por %p274, %p275
      %p277 = scmp.ne.s32.totalorder %s266, %s269
      %p278 = scmp.eq.s32.totalorder %s25, 1
      %p279 = por %p277, %p278
      %p280 = scmp.ne.s32.totalorder %s269, %s270
      %p281 = scmp.eq.s32.totalorder %s25, 0
      %p282 = por %p280, %p281
      %p283 = scmp.ne.s32.totalorder %s269, %s270
      %p284 = scmp.eq.s32.totalorder %s26, 1
      %p285 = por %p283, %p284
      %p287 = scmp.ne.s32.totalorder %s270, %s286
      %p288 = scmp.eq.s32.totalorder %s26, 0
      %p289 = por %p287, %p288
      %p290 = scmp.le.s32.totalorder 1, %s20
      %p291 = scmp.lt.s32.totalorder %s20, 3
      %p292 = pnand %p290, %p291
      %p293 = pneg %p292
      // Predicated region
      $region9: #{lenet_forward.1} parent=5 // pred_check
        _
      $region10: #{lenet_forward.1} parent=5 // pred_check_branch
        %295 = sbr.rel (%p292) target = $region12
      $region11: #{lenet_forward.1} parent=5 // pred_region
        %s296 = ssub.s32 %s20, 1
        // Predicated region
        $region13: #{lenet_forward.1} parent=11 // pred_check
          %p297 = pneg %p67
        $region14: #{lenet_forward.1} parent=11 // pred_check_branch
          %299 = sbr.rel (%p297) target = $region16
        $region15: #{lenet_forward.1} parent=11 // pred_region
          _
        $region16: #{lenet_forward.1} parent=11 // pred_fallthru
          _
        // Predicated region
        $region17: #{lenet_forward.1} parent=11 // pred_check
          %p300 = pneg %p88
        $region18: #{lenet_forward.1} parent=11 // pred_check_branch
          %302 = sbr.rel (%p300) target = $region20
        $region19: #{lenet_forward.1} parent=11 // pred_region
          _
        $region20: #{lenet_forward.1} parent=11 // pred_fallthru
          _
        // Predicated region
        $region21: #{lenet_forward.1} parent=11 // pred_check
          %p303 = pneg %p109
        $region22: #{lenet_forward.1} parent=11 // pred_check_branch
          %305 = sbr.rel (%p303) target = $region24
        $region23: #{lenet_forward.1} parent=11 // pred_region
          _
        $region24: #{lenet_forward.1} parent=11 // pred_fallthru
          _
        // Predicated region
        $region25: #{lenet_forward.1} parent=11 // pred_check
          %p306 = pneg %p130
        $region26: #{lenet_forward.1} parent=11 // pred_check_branch
          %308 = sbr.rel (%p306) target = $region28
        $region27: #{lenet_forward.1} parent=11 // pred_region
          _
        $region28: #{lenet_forward.1} parent=11 // pred_fallthru
          _
        // Predicated region
        $region29: #{lenet_forward.1} parent=11 // pred_check
          %p309 = pneg %p151
        $region30: #{lenet_forward.1} parent=11 // pred_check_branch
          %311 = sbr.rel (%p309) target = $region32
        $region31: #{lenet_forward.1} parent=11 // pred_region
          _
        $region32: #{lenet_forward.1} parent=11 // pred_fallthru
          _
        // Predicated region
        $region33: #{lenet_forward.1} parent=11 // pred_check
          %p312 = pneg %p172
        $region34: #{lenet_forward.1} parent=11 // pred_check_branch
          %314 = sbr.rel (%p312) target = $region36
        $region35: #{lenet_forward.1} parent=11 // pred_region
          _
        $region36: #{lenet_forward.1} parent=11 // pred_fallthru
          _
        // Predicated region
        $region37: #{lenet_forward.1} parent=11 // pred_check
          %p315 = pneg %p193
        $region38: #{lenet_forward.1} parent=11 // pred_check_branch
          %317 = sbr.rel (%p315) target = $region40
        $region39: #{lenet_forward.1} parent=11 // pred_region
          _
        $region40: #{lenet_forward.1} parent=11 // pred_fallthru
          _
        // Predicated region
        $region41: #{lenet_forward.1} parent=11 // pred_check
          %p318 = pneg %p214
        $region42: #{lenet_forward.1} parent=11 // pred_check_branch
          %320 = sbr.rel (%p318) target = $region44
        $region43: #{lenet_forward.1} parent=11 // pred_region
          _
        $region44: #{lenet_forward.1} parent=11 // pred_fallthru
          _
        // Predicated region
        $region45: #{lenet_forward.1} parent=11 // pred_check
          %p321 = pneg %p235
        $region46: #{lenet_forward.1} parent=11 // pred_check_branch
          %323 = sbr.rel (%p321) target = $region48
        $region47: #{lenet_forward.1} parent=11 // pred_region
          _
        $region48: #{lenet_forward.1} parent=11 // pred_fallthru
          _
        // Predicated region
        $region49: #{lenet_forward.1} parent=11 // pred_check
          %p324 = pneg %p256
        $region50: #{lenet_forward.1} parent=11 // pred_check_branch
          %326 = sbr.rel (%p324) target = $region52
        $region51: #{lenet_forward.1} parent=11 // pred_region
          _
        $region52: #{lenet_forward.1} parent=11 // pred_fallthru
          _
      $region12: #{lenet_forward.1} parent=5 // pred_fallthru
        _
      %p327 = scmp.lt.s32.totalorder %s20, 2
      // Predicated region
      $region53: #{lenet_forward.1} parent=5 // pred_check
        %p328 = pneg %p327
      $region54: #{lenet_forward.1} parent=5 // pred_check_branch
        %330 = sbr.rel (%p328) target = $region56
      $region55: #{lenet_forward.1} parent=5 // pred_region
        // Predicated region
        $region57: #{lenet_forward.1} parent=55 // pred_check
          %p331 = pneg %p40
        $region58: #{lenet_forward.1} parent=55 // pred_check_branch
          %333 = sbr.rel (%p331) target = $region60
        $region59: #{lenet_forward.1} parent=55 // pred_region
          %p334 = scmp.lt.s32.totalorder %s20, 1
          %s335 = scalar_select %p334, %s20, 1
          %s336 = smul.addr %s335, 128
          %s337 = smul.addr %s336, 8
          %s338 = scalar_lea.vmem %s0, %s337
        $region60: #{lenet_forward.1} parent=55 // pred_fallthru
          _
      $region56: #{lenet_forward.1} parent=5 // pred_fallthru
        _
      %p339 = scmp.le.s32.totalorder 1, %s20
      %p340 = scmp.lt.s32.totalorder %s20, 3
      %p341 = pnand %p339, %p340
      %p342 = pneg %p341
      // Predicated region
      $region61: #{lenet_forward.1} parent=5 // pred_check
        _
      $region62: #{lenet_forward.1} parent=5 // pred_check_branch
        %344 = sbr.rel (%p341) target = $region64
      $region63: #{lenet_forward.1} parent=5 // pred_region
        %s345 = ssub.s32 %s20, 1
        %p346 = scmp.lt.s32.totalorder %s25, 1
        %s347 = scalar_select %p346, %s25, 1
        %s348 = smul.addr %s347, 128
        %s349 = smul.addr %s348, 8
        %s350 = scalar_lea.vmem %s0, %s349
        %p351 = pneg %p46
        %p352 = pneg %p43
        %p353 = pneg %p67
        %p354 = pneg %p64
        %p355 = pneg %p88
        %p356 = pneg %p85
        %p357 = pneg %p109
        %p358 = pneg %p106
        %p359 = pneg %p130
        %p360 = pneg %p127
        %p361 = pneg %p151
        %p362 = pneg %p148
        %p363 = pneg %p172
        %p364 = pneg %p169
        %p365 = pneg %p193
        %p366 = pneg %p190
        %p367 = pneg %p214
        %p368 = pneg %p211
        %p369 = pneg %p235
        %p370 = pneg %p232
        %p371 = pneg %p256
        %p372 = pneg %p253
        %p373 = pneg %p282
        %p374 = pneg %p279
        %s375 = sand.u32 %s269, 1
        %s376 = scalar_lea.sflag [#allocation8], %s375
        %s377 = sand.u32 %s269, 1
        %s378 = scalar_lea.vmem [#allocation7], %s377
        %p379 = scmp.lt.s32.totalorder %s25, 1
        %s380 = scalar_select %p379, %s25, 1
        %s381 = smul.addr %s380, 128
        %s382 = smul.addr %s381, 8
        %s383 = scalar_lea.vmem %s0, %s382
        %v385 = vld [vmem:[%s1] sm:$0xf]
        %v386 = vld [vmem:[%s1 + $0x4] sm:$0xf]
        %v387 = vld [vmem:[%s1 + $0x8] sm:$0xf]
        %v388 = vld [vmem:[%s1 + $0xc] sm:$0xf]
        %v389 = vld [vmem:[%s1 + $0x10] sm:$0xf]
        %v390 = vld [vmem:[%s1 + $0x14] sm:$0xf]
        %v391 = vld [vmem:[%s1 + $0x18] sm:$0xf]
        %v392 = vld [vmem:[%s1 + $0x1c] sm:$0xf]
        %v393 = vld [vmem:[%s1 + $0x20] sm:$0xf]
        %v394 = vld [vmem:[%s1 + $0x24] sm:$0x3]
        %v395 = vld [vmem:[%s2] sm:$0x1]
        %v396 = vld [vmem:[%s3] sm:$0xf]
        %v397 = vld [vmem:[%s3 + $0x4] sm:$0xf]
        %v398 = vld [vmem:[%s3 + $0x8] sm:$0xf]
        %v399 = vld [vmem:[%s3 + $0xc] sm:$0xf]
        %v400 = vld [vmem:[%s3 + $0x10] sm:$0xf]
        %v401 = vld [vmem:[%s3 + $0x14] sm:$0xf]
        %v402 = vld [vmem:[%s3 + $0x18] sm:$0xf]
        %v403 = vld [vmem:[%s3 + $0x1c] sm:$0xf]
        %v404 = vld [vmem:[%s3 + $0x20] sm:$0xf]
        %v405 = vld [vmem:[%s3 + $0x24] sm:$0xf]
        %v406 = vld [vmem:[%s3 + $0x28] sm:$0xf]
        %v407 = vld [vmem:[%s3 + $0x2c] sm:$0xf]
        %v408 = vld [vmem:[%s3 + $0x30] sm:$0xf]
        %v409 = vld [vmem:[%s3 + $0x34] sm:$0xf]
        %v410 = vld [vmem:[%s3 + $0x38] sm:$0xf]
        %v411 = vld [vmem:[%s3 + $0x3c] sm:$0xf]
        %v412 = vld [vmem:[%s3 + $0x40] sm:$0xf]
        %v413 = vld [vmem:[%s3 + $0x44] sm:$0xf]
        %v414 = vld [vmem:[%s3 + $0x48] sm:$0x7]
        %v415 = vld [vmem:[%s4] sm:$0x1]
        %v416 = vlaneseq
        %v417 = vshrl.u32 %v416, 7
        %v418 = vadd.s32 %v417, 8
        %v419 = vlaneseq
        %v420 = vand.u32 %v419, 127
        %v421 = vmul.u32 %v417, 2
        %v422 = vmul.u32 %v418, 2
        %vm423 = vcmp.eq.s32.totalorder %v420, %v421
        %vm424 = vcmp.eq.s32.totalorder %v420, %v422
        %v425 = vsel %vm423, 1, 0
        %v426 = vsel %vm424, 1, 0
        %v427 = vcvt.s32.f32 %v425
        %v428 = vcvt.s32.f32 %v426
        %v429 = vadd.s32 %v421, 1
        %v430 = vadd.s32 %v422, 1
        %vm431 = vcmp.eq.s32.totalorder %v420, %v429
        %vm432 = vcmp.eq.s32.totalorder %v420, %v430
        %v433 = vsel %vm431, 1, 0
        %v434 = vsel %vm432, 1, 0
        %v435 = vcvt.s32.f32 %v433
        %v436 = vcvt.s32.f32 %v434
        loop: start=0, step=1, limit=14
        $region65: #{lenet_forward.1} parent=63 // loop_pre_header
          _
        $region66: #{lenet_forward.1} parent=63 // loop_header
          %s438 = sphi 0, %s442
          %p439 = scmp.ge.s32.totalorder %s438, 14
        $region67: #{lenet_forward.1} parent=63 // loop_header_branch
          %441 = sbr.rel (%p439) target = $region71
        $region68: #{lenet_forward.1} parent=63 // loop_body
          %s443 = smul.u32 %s438, 2
          %s444 = smul.u32 %s443, 32
          %s445 = scalar_lea.vmem %s383, %s444
          %v446 = vld [vmem:[%s445] sm:$0xff]
          %v447 = vld [vmem:[%s445 + $0x8] sm:$0xff]
          %v448 = vld [vmem:[%s445 + $0x10] sm:$0xff]
          %v449 = vld [vmem:[%s445 + $0x18] sm:$0xf]
          %vm450 = vcmask 23552
          %451 = vst.msk [vmem:[#allocation4] sm:$0xff] %vm450, %v446
          %452 = vst.msk [vmem:[#allocation4 + $0x8] sm:$0xff] %vm450, %v447
          %453 = vst.msk [vmem:[#allocation4 + $0x10] sm:$0xff] %vm450, %v448
          %vm454 = vcmask 19456
          %455 = vst.msk [vmem:[#allocation4 + $0x18] sm:$0xf] %vm454, %v449
          %v456 = vld [vmem:[%s445 + $0x1] sm:$0xff]
          %v457 = vld [vmem:[%s445 + $0x9] sm:$0xff]
          %v458 = vld [vmem:[%s445 + $0x11] sm:$0xff]
          %v459 = vld [vmem:[%s445 + $0x19] sm:$0xf]
          %464 = vrot.lane.b32.xlu0 %v456, 3
          %v465 = vpop.permute.xlu0 %464
          %466 = vrot.lane.b32.xlu0 %v457, 3
          %v467 = vpop.permute.xlu0 %466
          %468 = vrot.lane.b32.xlu0 %v458, 3
          %v469 = vpop.permute.xlu0 %468
          %470 = vrot.lane.b32.xlu0 %v459, 3
          %v471 = vpop.permute.xlu0 %470
          %vm476 = vcmask 48152
          %477 = vst.msk [vmem:[#allocation4] sm:$0xff] %vm476, %v465
          %478 = vst.msk [vmem:[#allocation4 + $0x8] sm:$0xff] %vm476, %v467
          %479 = vst.msk [vmem:[#allocation4 + $0x10] sm:$0xff] %vm476, %v469
          %vm480 = vcmask 44056
          %481 = vst.msk [vmem:[#allocation4 + $0x18] sm:$0xf] %vm480, %v471
          %v482 = vld [vmem:[%s445 + $0x2] sm:$0xff]
          %v483 = vld [vmem:[%s445 + $0xa] sm:$0xff]
          %v484 = vld [vmem:[%s445 + $0x12] sm:$0xff]
          %v485 = vld [vmem:[%s445 + $0x1a] sm:$0xf]
          %490 = vrot.lane.b32.xlu0 %v482, 6
          %v491 = vpop.permute.xlu0 %490
          %492 = vrot.lane.b32.xlu0 %v483, 6
          %v493 = vpop.permute.xlu0 %492
          %494 = vrot.lane.b32.xlu0 %v484, 6
          %v495 = vpop.permute.xlu0 %494
          %496 = vrot.lane.b32.xlu0 %v485, 6
          %v497 = vpop.permute.xlu0 %496
          %vm502 = vcmask 72752
          %503 = vst.msk [vmem:[#allocation4] sm:$0xff] %vm502, %v491
          %504 = vst.msk [vmem:[#allocation4 + $0x8] sm:$0xff] %vm502, %v493
          %505 = vst.msk [vmem:[#allocation4 + $0x10] sm:$0xff] %vm502, %v495
          %vm506 = vcmask 68656
          %507 = vst.msk [vmem:[#allocation4 + $0x18] sm:$0xf] %vm506, %v497
          %v508 = vld [vmem:[%s445 + $0x3] sm:$0xff]
          %v509 = vld [vmem:[%s445 + $0xb] sm:$0xff]
          %v510 = vld [vmem:[%s445 + $0x13] sm:$0xff]
          %v511 = vld [vmem:[%s445 + $0x1b] sm:$0xf]
          %516 = vrot.lane.b32.xlu0 %v508, 9
          %v517 = vpop.permute.xlu0 %516
          %518 = vrot.lane.b32.xlu0 %v509, 9
          %v519 = vpop.permute.xlu0 %518
          %520 = vrot.lane.b32.xlu0 %v510, 9
          %v521 = vpop.permute.xlu0 %520
          %522 = vrot.lane.b32.xlu0 %v511, 9
          %v523 = vpop.permute.xlu0 %522
          %vm528 = vcmask 97352
          %529 = vst.msk [vmem:[#allocation4] sm:$0xff] %vm528, %v517
          %530 = vst.msk [vmem:[#allocation4 + $0x8] sm:$0xff] %vm528, %v519
          %531 = vst.msk [vmem:[#allocation4 + $0x10] sm:$0xff] %vm528, %v521
          %vm532 = vcmask 93256
          %533 = vst.msk [vmem:[#allocation4 + $0x18] sm:$0xf] %vm532, %v523
          %v534 = vld [vmem:[%s445 + $0x4] sm:$0xff]
          %v535 = vld [vmem:[%s445 + $0xc] sm:$0xff]
          %v536 = vld [vmem:[%s445 + $0x14] sm:$0xff]
          %v537 = vld [vmem:[%s445 + $0x1c] sm:$0xf]
          %542 = vrot.lane.b32.xlu0 %v534, 12
          %v543 = vpop.permute.xlu0 %542
          %544 = vrot.lane.b32.xlu0 %v535, 12
          %v545 = vpop.permute.xlu0 %544
          %546 = vrot.lane.b32.xlu0 %v536, 12
          %v547 = vpop.permute.xlu0 %546
          %548 = vrot.lane.b32.xlu0 %v537, 12
          %v549 = vpop.permute.xlu0 %548
          %vm554 = vcmask 121952
          %555 = vst.msk [vmem:[#allocation4] sm:$0xff] %vm554, %v543
          %556 = vst.msk [vmem:[#allocation4 + $0x8] sm:$0xff] %vm554, %v545
          %557 = vst.msk [vmem:[#allocation4 + $0x10] sm:$0xff] %vm554, %v547
          %vm558 = vcmask 117856
          %559 = vst.msk [vmem:[#allocation4 + $0x18] sm:$0xf] %vm558, %v549
          %s560 = sadd.s32 %s443, 1
          %s561 = smul.u32 %s560, 32
          %s562 = scalar_lea.vmem %s383, %s561
          %v563 = vld [vmem:[%s562] sm:$0xff]
          %v564 = vld [vmem:[%s562 + $0x8] sm:$0xff]
          %v565 = vld [vmem:[%s562 + $0x10] sm:$0xff]
          %v566 = vld [vmem:[%s562 + $0x18] sm:$0xf]
          %571 = vrot.lane.b32.xlu0 %v563, 15
          %v572 = vpop.permute.xlu0 %571
          %573 = vrot.lane.b32.xlu0 %v564, 15
          %v574 = vpop.permute.xlu0 %573
          %575 = vrot.lane.b32.xlu0 %v565, 15
          %v576 = vpop.permute.xlu0 %575
          %577 = vrot.lane.b32.xlu0 %v566, 15
          %v578 = vpop.permute.xlu0 %577
          %vm583 = vcmask 146552
          %584 = vst.msk [vmem:[#allocation4] sm:$0xff] %vm583, %v572
          %585 = vst.msk [vmem:[#allocation4 + $0x8] sm:$0xff] %vm583, %v574
          %586 = vst.msk [vmem:[#allocation4 + $0x10] sm:$0xff] %vm583, %v576
          %vm587 = vcmask 142456
          %588 = vst.msk [vmem:[#allocation4 + $0x18] sm:$0xf] %vm587, %v578
          %v589 = vld [vmem:[%s562 + $0x1] sm:$0xff]
          %v590 = vld [vmem:[%s562 + $0x9] sm:$0xff]
          %v591 = vld [vmem:[%s562 + $0x11] sm:$0xff]
          %v592 = vld [vmem:[%s562 + $0x19] sm:$0xf]
          %597 = vrot.lane.b32.xlu0 %v589, 18
          %v598 = vpop.permute.xlu0 %597
          %599 = vrot.lane.b32.xlu0 %v590, 18
          %v600 = vpop.permute.xlu0 %599
          %601 = vrot.lane.b32.xlu0 %v591, 18
          %v602 = vpop.permute.xlu0 %601
          %603 = vrot.lane.b32.xlu0 %v592, 18
          %v604 = vpop.permute.xlu0 %603
          %vm609 = vcmask 171152
          %610 = vst.msk [vmem:[#allocation4] sm:$0xff] %vm609, %v598
          %611 = vst.msk [vmem:[#allocation4 + $0x8] sm:$0xff] %vm609, %v600
          %612 = vst.msk [vmem:[#allocation4 + $0x10] sm:$0xff] %vm609, %v602
          %vm613 = vcmask 167056
          %614 = vst.msk [vmem:[#allocation4 + $0x18] sm:$0xf] %vm613, %v604
          %v615 = vld [vmem:[%s562 + $0x2] sm:$0xff]
          %v616 = vld [vmem:[%s562 + $0xa] sm:$0xff]
          %v617 = vld [vmem:[%s562 + $0x12] sm:$0xff]
          %v618 = vld [vmem:[%s562 + $0x1a] sm:$0xf]
          %623 = vrot.lane.b32.xlu0 %v615, 21
          %v624 = vpop.permute.xlu0 %623
          %625 = vrot.lane.b32.xlu0 %v616, 21
          %v626 = vpop.permute.xlu0 %625
          %627 = vrot.lane.b32.xlu0 %v617, 21
          %v628 = vpop.permute.xlu0 %627
          %629 = vrot.lane.b32.xlu0 %v618, 21
          %v630 = vpop.permute.xlu0 %629
          %vm635 = vcmask 195752
          %636 = vst.msk [vmem:[#allocation4] sm:$0xff] %vm635, %v624
          %637 = vst.msk [vmem:[#allocation4 + $0x8] sm:$0xff] %vm635, %v626
          %638 = vst.msk [vmem:[#allocation4 + $0x10] sm:$0xff] %vm635, %v628
          %vm639 = vcmask 191656
          %640 = vst.msk [vmem:[#allocation4 + $0x18] sm:$0xf] %vm639, %v630
          %v641 = vld [vmem:[%s562 + $0x3] sm:$0xff]
          %v642 = vld [vmem:[%s562 + $0xb] sm:$0xff]
          %v643 = vld [vmem:[%s562 + $0x13] sm:$0xff]
          %v644 = vld [vmem:[%s562 + $0x1b] sm:$0xf]
          %649 = vrot.lane.b32.xlu0 %v641, 24
          %v650 = vpop.permute.xlu0 %649
          %651 = vrot.lane.b32.xlu0 %v642, 24
          %v652 = vpop.permute.xlu0 %651
          %653 = vrot.lane.b32.xlu0 %v643, 24
          %v654 = vpop.permute.xlu0 %653
          %655 = vrot.lane.b32.xlu0 %v644, 24
          %v656 = vpop.permute.xlu0 %655
          %vm661 = vcmask 220352
          %662 = vst.msk [vmem:[#allocation4] sm:$0xff] %vm661, %v650
          %663 = vst.msk [vmem:[#allocation4 + $0x8] sm:$0xff] %vm661, %v652
          %664 = vst.msk [vmem:[#allocation4 + $0x10] sm:$0xff] %vm661, %v654
          %vm665 = vcmask 216256
          %666 = vst.msk [vmem:[#allocation4 + $0x18] sm:$0xf] %vm665, %v656
          %v667 = vld [vmem:[%s562 + $0x4] sm:$0xff]
          %v668 = vld [vmem:[%s562 + $0xc] sm:$0xff]
          %v669 = vld [vmem:[%s562 + $0x14] sm:$0xff]
          %v670 = vld [vmem:[%s562 + $0x1c] sm:$0xf]
          %675 = vrot.lane.b32.xlu0 %v667, 27
          %v676 = vpop.permute.xlu0 %675
          %677 = vrot.lane.b32.xlu0 %v668, 27
          %v678 = vpop.permute.xlu0 %677
          %679 = vrot.lane.b32.xlu0 %v669, 27
          %v680 = vpop.permute.xlu0 %679
          %681 = vrot.lane.b32.xlu0 %v670, 27
          %v682 = vpop.permute.xlu0 %681
          %vm687 = vcmask 244952
          %688 = vst.msk [vmem:[#allocation4] sm:$0xff] %vm687, %v676
          %689 = vst.msk [vmem:[#allocation4 + $0x8] sm:$0xff] %vm687, %v678
          %690 = vst.msk [vmem:[#allocation4 + $0x10] sm:$0xff] %vm687, %v680
          %vm691 = vcmask 240856
          %692 = vst.msk [vmem:[#allocation4 + $0x18] sm:$0xf] %vm691, %v682
          %s693 = sadd.s32 %s443, 2
          %s694 = smul.u32 %s693, 32
          %s695 = scalar_lea.vmem %s383, %s694
          %v696 = vld [vmem:[%s695] sm:$0xff]
          %v697 = vld [vmem:[%s695 + $0x8] sm:$0xff]
          %v698 = vld [vmem:[%s695 + $0x10] sm:$0xff]
          %v699 = vld [vmem:[%s695 + $0x18] sm:$0xf]
          %704 = vrot.lane.b32.xlu0 %v696, 30
          %v705 = vpop.permute.xlu0 %704
          %706 = vrot.lane.b32.xlu0 %v697, 30
          %v707 = vpop.permute.xlu0 %706
          %708 = vrot.lane.b32.xlu0 %v698, 30
          %v709 = vpop.permute.xlu0 %708
          %710 = vrot.lane.b32.xlu0 %v699, 30
          %v711 = vpop.permute.xlu0 %710
          %vm716 = vcmask 269552
          %717 = vst.msk [vmem:[#allocation4] sm:$0xff] %vm716, %v705
          %718 = vst.msk [vmem:[#allocation4 + $0x8] sm:$0xff] %vm716, %v707
          %719 = vst.msk [vmem:[#allocation4 + $0x10] sm:$0xff] %vm716, %v709
          %vm720 = vcmask 265456
          %721 = vst.msk [vmem:[#allocation4 + $0x18] sm:$0xf] %vm720, %v711
          %v722 = vld [vmem:[%s695 + $0x1] sm:$0xff]
          %v723 = vld [vmem:[%s695 + $0x9] sm:$0xff]
          %v724 = vld [vmem:[%s695 + $0x11] sm:$0xff]
          %v725 = vld [vmem:[%s695 + $0x19] sm:$0xf]
          %730 = vrot.lane.b32.xlu0 %v722, 33
          %v731 = vpop.permute.xlu0 %730
          %732 = vrot.lane.b32.xlu0 %v723, 33
          %v733 = vpop.permute.xlu0 %732
          %734 = vrot.lane.b32.xlu0 %v724, 33
          %v735 = vpop.permute.xlu0 %734
          %736 = vrot.lane.b32.xlu0 %v725, 33
          %v737 = vpop.permute.xlu0 %736
          %vm742 = vcmask 294152
          %743 = vst.msk [vmem:[#allocation4] sm:$0xff] %vm742, %v731
          %744 = vst.msk [vmem:[#allocation4 + $0x8] sm:$0xff] %vm742, %v733
          %745 = vst.msk [vmem:[#allocation4 + $0x10] sm:$0xff] %vm742, %v735
          %vm746 = vcmask 290056
          %747 = vst.msk [vmem:[#allocation4 + $0x18] sm:$0xf] %vm746, %v737
          %v748 = vld [vmem:[%s695 + $0x2] sm:$0xff]
          %v749 = vld [vmem:[%s695 + $0xa] sm:$0xff]
          %v750 = vld [vmem:[%s695 + $0x12] sm:$0xff]
          %v751 = vld [vmem:[%s695 + $0x1a] sm:$0xf]
          %756 = vrot.lane.b32.xlu0 %v748, 36
          %v757 = vpop.permute.xlu0 %756
          %758 = vrot.lane.b32.xlu0 %v749, 36
          %v759 = vpop.permute.xlu0 %758
          %760 = vrot.lane.b32.xlu0 %v750, 36
          %v761 = vpop.permute.xlu0 %760
          %762 = vrot.lane.b32.xlu0 %v751, 36
          %v763 = vpop.permute.xlu0 %762
          %vm768 = vcmask 318752
          %769 = vst.msk [vmem:[#allocation4] sm:$0xff] %vm768, %v757
          %770 = vst.msk [vmem:[#allocation4 + $0x8] sm:$0xff] %vm768, %v759
          %771 = vst.msk [vmem:[#allocation4 + $0x10] sm:$0xff] %vm768, %v761
          %vm772 = vcmask 314656
          %773 = vst.msk [vmem:[#allocation4 + $0x18] sm:$0xf] %vm772, %v763
          %v774 = vld [vmem:[%s695 + $0x3] sm:$0xff]
          %v775 = vld [vmem:[%s695 + $0xb] sm:$0xff]
          %v776 = vld [vmem:[%s695 + $0x13] sm:$0xff]
          %v777 = vld [vmem:[%s695 + $0x1b] sm:$0xf]
          %782 = vrot.lane.b32.xlu0 %v774, 39
          %v783 = vpop.permute.xlu0 %782
          %784 = vrot.lane.b32.xlu0 %v775, 39
          %v785 = vpop.permute.xlu0 %784
          %786 = vrot.lane.b32.xlu0 %v776, 39
          %v787 = vpop.permute.xlu0 %786
          %788 = vrot.lane.b32.xlu0 %v777, 39
          %v789 = vpop.permute.xlu0 %788
          %vm794 = vcmask 343352
          %795 = vst.msk [vmem:[#allocation4] sm:$0xff] %vm794, %v783
          %796 = vst.msk [vmem:[#allocation4 + $0x8] sm:$0xff] %vm794, %v785
          %797 = vst.msk [vmem:[#allocation4 + $0x10] sm:$0xff] %vm794, %v787
          %vm798 = vcmask 339256
          %799 = vst.msk [vmem:[#allocation4 + $0x18] sm:$0xf] %vm798, %v789
          %v800 = vld [vmem:[%s695 + $0x4] sm:$0xff]
          %v801 = vld [vmem:[%s695 + $0xc] sm:$0xff]
          %v802 = vld [vmem:[%s695 + $0x14] sm:$0xff]
          %v803 = vld [vmem:[%s695 + $0x1c] sm:$0xf]
          %808 = vrot.lane.b32.xlu0 %v800, 42
          %v809 = vpop.permute.xlu0 %808
          %810 = vrot.lane.b32.xlu0 %v801, 42
          %v811 = vpop.permute.xlu0 %810
          %812 = vrot.lane.b32.xlu0 %v802, 42
          %v813 = vpop.permute.xlu0 %812
          %814 = vrot.lane.b32.xlu0 %v803, 42
          %v815 = vpop.permute.xlu0 %814
          %vm820 = vcmask 367952
          %821 = vst.msk [vmem:[#allocation4] sm:$0xff] %vm820, %v809
          %822 = vst.msk [vmem:[#allocation4 + $0x8] sm:$0xff] %vm820, %v811
          %823 = vst.msk [vmem:[#allocation4 + $0x10] sm:$0xff] %vm820, %v813
          %vm824 = vcmask 363856
          %825 = vst.msk [vmem:[#allocation4 + $0x18] sm:$0xf] %vm824, %v815
          %s826 = sadd.s32 %s443, 3
          %s827 = smul.u32 %s826, 32
          %s828 = scalar_lea.vmem %s383, %s827
          %v829 = vld [vmem:[%s828] sm:$0xff]
          %v830 = vld [vmem:[%s828 + $0x8] sm:$0xff]
          %v831 = vld [vmem:[%s828 + $0x10] sm:$0xff]
          %v832 = vld [vmem:[%s828 + $0x18] sm:$0xf]
          %837 = vrot.lane.b32.xlu0 %v829, 45
          %v838 = vpop.permute.xlu0 %837
          %839 = vrot.lane.b32.xlu0 %v830, 45
          %v840 = vpop.permute.xlu0 %839
          %841 = vrot.lane.b32.xlu0 %v831, 45
          %v842 = vpop.permute.xlu0 %841
          %843 = vrot.lane.b32.xlu0 %v832, 45
          %v844 = vpop.permute.xlu0 %843
          %vm849 = vcmask 392552
          %850 = vst.msk [vmem:[#allocation4] sm:$0xff] %vm849, %v838
          %851 = vst.msk [vmem:[#allocation4 + $0x8] sm:$0xff] %vm849, %v840
          %852 = vst.msk [vmem:[#allocation4 + $0x10] sm:$0xff] %vm849, %v842
          %vm853 = vcmask 388456
          %854 = vst.msk [vmem:[#allocation4 + $0x18] sm:$0xf] %vm853, %v844
          %v855 = vld [vmem:[%s828 + $0x1] sm:$0xff]
          %v856 = vld [vmem:[%s828 + $0x9] sm:$0xff]
          %v857 = vld [vmem:[%s828 + $0x11] sm:$0xff]
          %v858 = vld [vmem:[%s828 + $0x19] sm:$0xf]
          %863 = vrot.lane.b32.xlu0 %v855, 48
          %v864 = vpop.permute.xlu0 %863
          %865 = vrot.lane.b32.xlu0 %v856, 48
          %v866 = vpop.permute.xlu0 %865
          %867 = vrot.lane.b32.xlu0 %v857, 48
          %v868 = vpop.permute.xlu0 %867
          %869 = vrot.lane.b32.xlu0 %v858, 48
          %v870 = vpop.permute.xlu0 %869
          %vm875 = vcmask 417152
          %876 = vst.msk [vmem:[#allocation4] sm:$0xff] %vm875, %v864
          %877 = vst.msk [vmem:[#allocation4 + $0x8] sm:$0xff] %vm875, %v866
          %878 = vst.msk [vmem:[#allocation4 + $0x10] sm:$0xff] %vm875, %v868
          %vm879 = vcmask 413056
          %880 = vst.msk [vmem:[#allocation4 + $0x18] sm:$0xf] %vm879, %v870
          %v881 = vld [vmem:[%s828 + $0x2] sm:$0xff]
          %v882 = vld [vmem:[%s828 + $0xa] sm:$0xff]
          %v883 = vld [vmem:[%s828 + $0x12] sm:$0xff]
          %v884 = vld [vmem:[%s828 + $0x1a] sm:$0xf]
          %889 = vrot.lane.b32.xlu0 %v881, 51
          %v890 = vpop.permute.xlu0 %889
          %891 = vrot.lane.b32.xlu0 %v882, 51
          %v892 = vpop.permute.xlu0 %891
          %893 = vrot.lane.b32.xlu0 %v883, 51
          %v894 = vpop.permute.xlu0 %893
          %895 = vrot.lane.b32.xlu0 %v884, 51
          %v896 = vpop.permute.xlu0 %895
          %vm901 = vcmask 441752
          %902 = vst.msk [vmem:[#allocation4] sm:$0xff] %vm901, %v890
          %903 = vst.msk [vmem:[#allocation4 + $0x8] sm:$0xff] %vm901, %v892
          %904 = vst.msk [vmem:[#allocation4 + $0x10] sm:$0xff] %vm901, %v894
          %vm905 = vcmask 437656
          %906 = vst.msk [vmem:[#allocation4 + $0x18] sm:$0xf] %vm905, %v896
          %v907 = vld [vmem:[%s828 + $0x3] sm:$0xff]
          %v908 = vld [vmem:[%s828 + $0xb] sm:$0xff]
          %v909 = vld [vmem:[%s828 + $0x13] sm:$0xff]
          %v910 = vld [vmem:[%s828 + $0x1b] sm:$0xf]
          %915 = vrot.lane.b32.xlu0 %v907, 54
          %v916 = vpop.permute.xlu0 %915
          %917 = vrot.lane.b32.xlu0 %v908, 54
          %v918 = vpop.permute.xlu0 %917
          %919 = vrot.lane.b32.xlu0 %v909, 54
          %v920 = vpop.permute.xlu0 %919
          %921 = vrot.lane.b32.xlu0 %v910, 54
          %v922 = vpop.permute.xlu0 %921
          %vm927 = vcmask 466352
          %928 = vst.msk [vmem:[#allocation4] sm:$0xff] %vm927, %v916
          %929 = vst.msk [vmem:[#allocation4 + $0x8] sm:$0xff] %vm927, %v918
          %930 = vst.msk [vmem:[#allocation4 + $0x10] sm:$0xff] %vm927, %v920
          %vm931 = vcmask 462256
          %932 = vst.msk [vmem:[#allocation4 + $0x18] sm:$0xf] %vm931, %v922
          %v933 = vld [vmem:[%s828 + $0x4] sm:$0xff]
          %v934 = vld [vmem:[%s828 + $0xc] sm:$0xff]
          %v935 = vld [vmem:[%s828 + $0x14] sm:$0xff]
          %v936 = vld [vmem:[%s828 + $0x1c] sm:$0xf]
          %941 = vrot.lane.b32.xlu0 %v933, 57
          %v942 = vpop.permute.xlu0 %941
          %943 = vrot.lane.b32.xlu0 %v934, 57
          %v944 = vpop.permute.xlu0 %943
          %945 = vrot.lane.b32.xlu0 %v935, 57
          %v946 = vpop.permute.xlu0 %945
          %947 = vrot.lane.b32.xlu0 %v936, 57
          %v948 = vpop.permute.xlu0 %947
          %vm953 = vcmask 490952
          %954 = vst.msk [vmem:[#allocation4] sm:$0xff] %vm953, %v942
          %955 = vst.msk [vmem:[#allocation4 + $0x8] sm:$0xff] %vm953, %v944
          %956 = vst.msk [vmem:[#allocation4 + $0x10] sm:$0xff] %vm953, %v946
          %vm957 = vcmask 486856
          %958 = vst.msk [vmem:[#allocation4 + $0x18] sm:$0xf] %vm957, %v948
          %s959 = sadd.s32 %s443, 4
          %s960 = smul.u32 %s959, 32
          %s961 = scalar_lea.vmem %s383, %s960
          %v962 = vld [vmem:[%s961] sm:$0xff]
          %v963 = vld [vmem:[%s961 + $0x8] sm:$0xff]
          %v964 = vld [vmem:[%s961 + $0x10] sm:$0xff]
          %v965 = vld [vmem:[%s961 + $0x18] sm:$0xf]
          %970 = vrot.lane.b32.xlu0 %v962, 60
          %v971 = vpop.permute.xlu0 %970
          %972 = vrot.lane.b32.xlu0 %v963, 60
          %v973 = vpop.permute.xlu0 %972
          %974 = vrot.lane.b32.xlu0 %v964, 60
          %v975 = vpop.permute.xlu0 %974
          %976 = vrot.lane.b32.xlu0 %v965, 60
          %v977 = vpop.permute.xlu0 %976
          %vm982 = vcmask 515552
          %983 = vst.msk [vmem:[#allocation4] sm:$0xff] %vm982, %v971
          %984 = vst.msk [vmem:[#allocation4 + $0x8] sm:$0xff] %vm982, %v973
          %985 = vst.msk [vmem:[#allocation4 + $0x10] sm:$0xff] %vm982, %v975
          %vm986 = vcmask 511456
          %987 = vst.msk [vmem:[#allocation4 + $0x18] sm:$0xf] %vm986, %v977
          %v988 = vld [vmem:[%s961 + $0x1] sm:$0xff]
          %v989 = vld [vmem:[%s961 + $0x9] sm:$0xff]
          %v990 = vld [vmem:[%s961 + $0x11] sm:$0xff]
          %v991 = vld [vmem:[%s961 + $0x19] sm:$0xf]
          %996 = vrot.lane.b32.xlu0 %v988, 63
          %v997 = vpop.permute.xlu0 %996
          %998 = vrot.lane.b32.xlu0 %v989, 63
          %v999 = vpop.permute.xlu0 %998
          %1000 = vrot.lane.b32.xlu0 %v990, 63
          %v1001 = vpop.permute.xlu0 %1000
          %1002 = vrot.lane.b32.xlu0 %v991, 63
          %v1003 = vpop.permute.xlu0 %1002
          %vm1008 = vcmask 540152
          %1009 = vst.msk [vmem:[#allocation4] sm:$0xff] %vm1008, %v997
          %1010 = vst.msk [vmem:[#allocation4 + $0x8] sm:$0xff] %vm1008, %v999
          %1011 = vst.msk [vmem:[#allocation4 + $0x10] sm:$0xff] %vm1008, %v1001
          %vm1012 = vcmask 536056
          %1013 = vst.msk [vmem:[#allocation4 + $0x18] sm:$0xf] %vm1012, %v1003
          %v1014 = vld [vmem:[%s961 + $0x2] sm:$0xff]
          %v1015 = vld [vmem:[%s961 + $0xa] sm:$0xff]
          %v1016 = vld [vmem:[%s961 + $0x12] sm:$0xff]
          %v1017 = vld [vmem:[%s961 + $0x1a] sm:$0xf]
          %1022 = vrot.lane.b32.xlu0 %v1014, 66
          %v1023 = vpop.permute.xlu0 %1022
          %1024 = vrot.lane.b32.xlu0 %v1015, 66
          %v1025 = vpop.permute.xlu0 %1024
          %1026 = vrot.lane.b32.xlu0 %v1016, 66
          %v1027 = vpop.permute.xlu0 %1026
          %1028 = vrot.lane.b32.xlu0 %v1017, 66
          %v1029 = vpop.permute.xlu0 %1028
          %vm1034 = vcmask 564752
          %1035 = vst.msk [vmem:[#allocation4] sm:$0xff] %vm1034, %v1023
          %1036 = vst.msk [vmem:[#allocation4 + $0x8] sm:$0xff] %vm1034, %v1025
          %1037 = vst.msk [vmem:[#allocation4 + $0x10] sm:$0xff] %vm1034, %v1027
          %vm1038 = vcmask 560656
          %1039 = vst.msk [vmem:[#allocation4 + $0x18] sm:$0xf] %vm1038, %v1029
          %v1040 = vld [vmem:[%s961 + $0x3] sm:$0xff]
          %v1041 = vld [vmem:[%s961 + $0xb] sm:$0xff]
          %v1042 = vld [vmem:[%s961 + $0x13] sm:$0xff]
          %v1043 = vld [vmem:[%s961 + $0x1b] sm:$0xf]
          %1048 = vrot.lane.b32.xlu0 %v1040, 69
          %v1049 = vpop.permute.xlu0 %1048
          %1050 = vrot.lane.b32.xlu0 %v1041, 69
          %v1051 = vpop.permute.xlu0 %1050
          %1052 = vrot.lane.b32.xlu0 %v1042, 69
          %v1053 = vpop.permute.xlu0 %1052
          %1054 = vrot.lane.b32.xlu0 %v1043, 69
          %v1055 = vpop.permute.xlu0 %1054
          %vm1060 = vcmask 589352
          %1061 = vst.msk [vmem:[#allocation4] sm:$0xff] %vm1060, %v1049
          %1062 = vst.msk [vmem:[#allocation4 + $0x8] sm:$0xff] %vm1060, %v1051
          %1063 = vst.msk [vmem:[#allocation4 + $0x10] sm:$0xff] %vm1060, %v1053
          %vm1064 = vcmask 585256
          %1065 = vst.msk [vmem:[#allocation4 + $0x18] sm:$0xf] %vm1064, %v1055
          %v1066 = vld [vmem:[%s961 + $0x4] sm:$0xff]
          %v1067 = vld [vmem:[%s961 + $0xc] sm:$0xff]
          %v1068 = vld [vmem:[%s961 + $0x14] sm:$0xff]
          %v1069 = vld [vmem:[%s961 + $0x1c] sm:$0xf]
          %1074 = vrot.lane.b32.xlu0 %v1066, 72
          %v1075 = vpop.permute.xlu0 %1074
          %1076 = vrot.lane.b32.xlu0 %v1067, 72
          %v1077 = vpop.permute.xlu0 %1076
          %1078 = vrot.lane.b32.xlu0 %v1068, 72
          %v1079 = vpop.permute.xlu0 %1078
          %1080 = vrot.lane.b32.xlu0 %v1069, 72
          %v1081 = vpop.permute.xlu0 %1080
          %vm1086 = vcmask 613952
          %1087 = vst.msk [vmem:[#allocation4] sm:$0xff] %vm1086, %v1075
          %1088 = vst.msk [vmem:[#allocation4 + $0x8] sm:$0xff] %vm1086, %v1077
          %1089 = vst.msk [vmem:[#allocation4 + $0x10] sm:$0xff] %vm1086, %v1079
          %vm1090 = vcmask 609856
          %1091 = vst.msk [vmem:[#allocation4 + $0x18] sm:$0xf] %vm1090, %v1081
          %v1092 = vld [vmem:[#allocation4] sm:$0xff]
          %v1093 = vld [vmem:[#allocation4 + $0x8] sm:$0xff]
          %v1094 = vld [vmem:[#allocation4 + $0x10] sm:$0xff]
          %v1095 = vld [vmem:[#allocation4 + $0x18] sm:$0xf]
          %v1096 = vpack.c.bf16 %v1093, %v1092
          %v1097 = vpack.c.bf16 %v1095, %v1094
          %v1099 = vlaneseq
          %v1100 = vshrl.u32 %v1099, 7
          %v1101 = vsub.s32 0, %v1100
          %v1102 = vrot.slane %v395, %v1101
          %v1114 = vunpack.c.l.b16 %v385
          %v1115 = vunpack.c.l.b16 %v386
          %v1116 = vunpack.c.l.b16 %v387
          %v1117 = vunpack.c.l.b16 %v388
          %v1118 = vunpack.c.l.b16 %v389
          %v1119 = vunpack.c.l.b16 %v390
          %v1120 = vunpack.c.l.b16 %v391
          %v1121 = vunpack.c.l.b16 %v392
          %v1122 = vunpack.c.l.b16 %v393
          %v1123 = vunpack.c.l.b16 %v394
          %v1124 = vpack.c.b16 %v1115, %v1114
          %v1125 = vpack.c.b16 %v1117, %v1116
          %v1126 = vpack.c.b16 %v1119, %v1118
          %v1127 = vpack.c.b16 %v1121, %v1120
          %v1128 = vpack.c.b16 %v1123, %v1122
          %vm1133 = vcmask 613376
          %v1135 = vsel %vm1133, %v1096, 0
          %v1138 = vsel %vm1133, %v1097, 0
          %vm1140 = vcmask 1044480
          %vm1141 = vcmask 1045504
          %v1142 = vsel %vm1140, 4294967295, 65535
          %v1143 = vsel %vm1141, %v1142, 0
          %v1145 = vand.u32 %v1128, %v1143
          %1147 = vmatprep.subr.bf16.mxu0 0
          %1148 = vmatpush1.bf16.msra.mxu0 %v1124
          %1149 = vmatprep.subr.bf16.mxu0 0
          %1150 = vmatpush1.bf16.msra.mxu0 %v1125
          %1151 = vmatprep.subr.bf16.mxu0 0
          %1152 = vmatpush1.bf16.msra.mxu0 %v1126
          %1153 = vmatprep.subr.bf16.mxu0 0
          %1154 = vmatpush1.bf16.msra.mxu0 %v1127
          %1155 = vmatprep.subr.bf16.mxu0 0
          %1156 = vmatpush1.bf16.msra.mxu0 %v1145
          %1157 = vmatprep.subr.bf16.mxu0 0
          %1158 = vmatpush1.bf16.msra.mxu0 0
          %1159 = vmatprep.subr.bf16.mxu0 0
          %1160 = vmatpush1.bf16.msra.mxu0 0
          %1161 = vmatprep.subr.bf16.mxu0 0
          %1162 = vmatpush1.bf16.msra.mxu0 0
          %1163 = vmatprep.subr.bf16.mxu0 0
          %1164 = vmatpush1.bf16.msra.mxu0 0
          %1165 = vmatprep.subr.bf16.mxu0 0
          %1166 = vmatpush1.bf16.msra.mxu0 0
          %1167 = vmatprep.subr.bf16.mxu0 0
          %1168 = vmatpush1.bf16.msra.mxu0 0
          %1169 = vmatprep.subr.bf16.mxu0 0
          %1170 = vmatpush1.bf16.msra.mxu0 0
          %1171 = vmatprep.subr.bf16.mxu0 0
          %1172 = vmatpush1.bf16.msra.mxu0 0
          %1173 = vmatprep.subr.bf16.mxu0 0
          %1174 = vmatpush1.bf16.msra.mxu0 0
          %1175 = vmatprep.subr.bf16.mxu0 0
          %1176 = vmatpush1.bf16.msra.mxu0 0
          %1177 = vmatprep.subr.bf16.mxu0 0
          %1178 = vmatpush1.bf16.msra.mxu0 0
          %1179 = vmatprep.mubr.bf16.mxu0 0
          %1180 = vmatmul.mubr.bf16.gmra.mrb[0].mxu0 %v1135
          %v1181 = vpop.f32.mrb[0].mxu0
          %v1182 = vadd.f32 %v1102, %v1181
          %v1183 = vpop.f32.mrb[0].mxu0
          %v1184 = vpop.f32.mrb[0].mxu0
          %v1185 = vadd.f32 %v1102, %v1184
          %v1186 = vpop.f32.mrb[0].mxu0
          %1187 = vmatprep.mubr.bf16.mxu0 0
          %1188 = vmatmul.mubr.bf16.gmra.mrb[0].mxu0 %v1138
          %v1189 = vpop.f32.mrb[0].mxu0
          %v1190 = vadd.f32 %v1102, %v1189
          %v1191 = vpop.f32.mrb[0].mxu0
          %v1192 = vpop.f32.mrb[0].mxu0
          %v1193 = vadd.f32 %v1102, %v1192
          %v1194 = vpop.f32.mrb[0].mxu0
          %1195 = vdwg.mxu0
          %v1196 = vmax.f32 %v1182, 0.0
          %v1197 = vmax.f32 %v1185, 0.0
          %v1198 = vmax.f32 %v1190, 0.0
          %v1199 = vmax.f32 %v1193, 0.0
          %v1200 = vld [vmem:[%s562] sm:$0xff]
          %v1201 = vld [vmem:[%s562 + $0x8] sm:$0xff]
          %v1202 = vld [vmem:[%s562 + $0x10] sm:$0xff]
          %v1203 = vld [vmem:[%s562 + $0x18] sm:$0xf]
          %1204 = vst.msk [vmem:[#allocation4] sm:$0xff] %vm450, %v1200
          %1205 = vst.msk [vmem:[#allocation4 + $0x8] sm:$0xff] %vm450, %v1201
          %1206 = vst.msk [vmem:[#allocation4 + $0x10] sm:$0xff] %vm450, %v1202
          %1207 = vst.msk [vmem:[#allocation4 + $0x18] sm:$0xf] %vm454, %v1203
          %v1208 = vld [vmem:[%s562 + $0x1] sm:$0xff]
          %v1209 = vld [vmem:[%s562 + $0x9] sm:$0xff]
          %v1210 = vld [vmem:[%s562 + $0x11] sm:$0xff]
          %v1211 = vld [vmem:[%s562 + $0x19] sm:$0xf]
          %1216 = vrot.lane.b32.xlu0 %v1208, 3
          %v1217 = vpop.permute.xlu0 %1216
          %1218 = vrot.lane.b32.xlu0 %v1209, 3
          %v1219 = vpop.permute.xlu0 %1218
          %1220 = vrot.lane.b32.xlu0 %v1210, 3
          %v1221 = vpop.permute.xlu0 %1220
          %1222 = vrot.lane.b32.xlu0 %v1211, 3
          %v1223 = vpop.permute.xlu0 %1222
          %1228 = vst.msk [vmem:[#allocation4] sm:$0xff] %vm476, %v1217
          %1229 = vst.msk [vmem:[#allocation4 + $0x8] sm:$0xff] %vm476, %v1219
          %1230 = vst.msk [vmem:[#allocation4 + $0x10] sm:$0xff] %vm476, %v1221
          %1231 = vst.msk [vmem:[#allocation4 + $0x18] sm:$0xf] %vm480, %v1223
          %v1232 = vld [vmem:[%s562 + $0x2] sm:$0xff]
          %v1233 = vld [vmem:[%s562 + $0xa] sm:$0xff]
          %v1234 = vld [vmem:[%s562 + $0x12] sm:$0xff]
          %v1235 = vld [vmem:[%s562 + $0x1a] sm:$0xf]
          %1240 = vrot.lane.b32.xlu0 %v1232, 6
          %v1241 = vpop.permute.xlu0 %1240
          %1242 = vrot.lane.b32.xlu0 %v1233, 6
          %v1243 = vpop.permute.xlu0 %1242
          %1244 = vrot.lane.b32.xlu0 %v1234, 6
          %v1245 = vpop.permute.xlu0 %1244
          %1246 = vrot.lane.b32.xlu0 %v1235, 6
          %v1247 = vpop.permute.xlu0 %1246
          %1252 = vst.msk [vmem:[#allocation4] sm:$0xff] %vm502, %v1241
          %1253 = vst.msk [vmem:[#allocation4 + $0x8] sm:$0xff] %vm502, %v1243
          %1254 = vst.msk [vmem:[#allocation4 + $0x10] sm:$0xff] %vm502, %v1245
          %1255 = vst.msk [vmem:[#allocation4 + $0x18] sm:$0xf] %vm506, %v1247
          %v1256 = vld [vmem:[%s562 + $0x3] sm:$0xff]
          %v1257 = vld [vmem:[%s562 + $0xb] sm:$0xff]
          %v1258 = vld [vmem:[%s562 + $0x13] sm:$0xff]
          %v1259 = vld [vmem:[%s562 + $0x1b] sm:$0xf]
          %1264 = vrot.lane.b32.xlu0 %v1256, 9
          %v1265 = vpop.permute.xlu0 %1264
          %1266 = vrot.lane.b32.xlu0 %v1257, 9
          %v1267 = vpop.permute.xlu0 %1266
          %1268 = vrot.lane.b32.xlu0 %v1258, 9
          %v1269 = vpop.permute.xlu0 %1268
          %1270 = vrot.lane.b32.xlu0 %v1259, 9
          %v1271 = vpop.permute.xlu0 %1270
          %1276 = vst.msk [vmem:[#allocation4] sm:$0xff] %vm528, %v1265
          %1277 = vst.msk [vmem:[#allocation4 + $0x8] sm:$0xff] %vm528, %v1267
          %1278 = vst.msk [vmem:[#allocation4 + $0x10] sm:$0xff] %vm528, %v1269
          %1279 = vst.msk [vmem:[#allocation4 + $0x18] sm:$0xf] %vm532, %v1271
          %v1280 = vld [vmem:[%s562 + $0x4] sm:$0xff]
          %v1281 = vld [vmem:[%s562 + $0xc] sm:$0xff]
          %v1282 = vld [vmem:[%s562 + $0x14] sm:$0xff]
          %v1283 = vld [vmem:[%s562 + $0x1c] sm:$0xf]
          %1288 = vrot.lane.b32.xlu0 %v1280, 12
          %v1289 = vpop.permute.xlu0 %1288
          %1290 = vrot.lane.b32.xlu0 %v1281, 12
          %v1291 = vpop.permute.xlu0 %1290
          %1292 = vrot.lane.b32.xlu0 %v1282, 12
          %v1293 = vpop.permute.xlu0 %1292
          %1294 = vrot.lane.b32.xlu0 %v1283, 12
          %v1295 = vpop.permute.xlu0 %1294
          %1300 = vst.msk [vmem:[#allocation4] sm:$0xff] %vm554, %v1289
          %1301 = vst.msk [vmem:[#allocation4 + $0x8] sm:$0xff] %vm554, %v1291
          %1302 = vst.msk [vmem:[#allocation4 + $0x10] sm:$0xff] %vm554, %v1293
          %1303 = vst.msk [vmem:[#allocation4 + $0x18] sm:$0xf] %vm558, %v1295
          %v1304 = vld [vmem:[%s695] sm:$0xff]
          %v1305 = vld [vmem:[%s695 + $0x8] sm:$0xff]
          %v1306 = vld [vmem:[%s695 + $0x10] sm:$0xff]
          %v1307 = vld [vmem:[%s695 + $0x18] sm:$0xf]
          %1312 = vrot.lane.b32.xlu0 %v1304, 15
          %v1313 = vpop.permute.xlu0 %1312
          %1314 = vrot.lane.b32.xlu0 %v1305, 15
          %v1315 = vpop.permute.xlu0 %1314
          %1316 = vrot.lane.b32.xlu0 %v1306, 15
          %v1317 = vpop.permute.xlu0 %1316
          %1318 = vrot.lane.b32.xlu0 %v1307, 15
          %v1319 = vpop.permute.xlu0 %1318
          %1324 = vst.msk [vmem:[#allocation4] sm:$0xff] %vm583, %v1313
          %1325 = vst.msk [vmem:[#allocation4 + $0x8] sm:$0xff] %vm583, %v1315
          %1326 = vst.msk [vmem:[#allocation4 + $0x10] sm:$0xff] %vm583, %v1317
          %1327 = vst.msk [vmem:[#allocation4 + $0x18] sm:$0xf] %vm587, %v1319
          %v1328 = vld [vmem:[%s695 + $0x1] sm:$0xff]
          %v1329 = vld [vmem:[%s695 + $0x9] sm:$0xff]
          %v1330 = vld [vmem:[%s695 + $0x11] sm:$0xff]
          %v1331 = vld [vmem:[%s695 + $0x19] sm:$0xf]
          %1336 = vrot.lane.b32.xlu0 %v1328, 18
          %v1337 = vpop.permute.xlu0 %1336
          %1338 = vrot.lane.b32.xlu0 %v1329, 18
          %v1339 = vpop.permute.xlu0 %1338
          %1340 = vrot.lane.b32.xlu0 %v1330, 18
          %v1341 = vpop.permute.xlu0 %1340
          %1342 = vrot.lane.b32.xlu0 %v1331, 18
          %v1343 = vpop.permute.xlu0 %1342
          %1348 = vst.msk [vmem:[#allocation4] sm:$0xff] %vm609, %v1337
          %1349 = vst.msk [vmem:[#allocation4 + $0x8] sm:$0xff] %vm609, %v1339
          %1350 = vst.msk [vmem:[#allocation4 + $0x10] sm:$0xff] %vm609, %v1341
          %1351 = vst.msk [vmem:[#allocation4 + $0x18] sm:$0xf] %vm613, %v1343
          %v1352 = vld [vmem:[%s695 + $0x2] sm:$0xff]
          %v1353 = vld [vmem:[%s695 + $0xa] sm:$0xff]
          %v1354 = vld [vmem:[%s695 + $0x12] sm:$0xff]
          %v1355 = vld [vmem:[%s695 + $0x1a] sm:$0xf]
          %1360 = vrot.lane.b32.xlu0 %v1352, 21
          %v1361 = vpop.permute.xlu0 %1360
          %1362 = vrot.lane.b32.xlu0 %v1353, 21
          %v1363 = vpop.permute.xlu0 %1362
          %1364 = vrot.lane.b32.xlu0 %v1354, 21
          %v1365 = vpop.permute.xlu0 %1364
          %1366 = vrot.lane.b32.xlu0 %v1355, 21
          %v1367 = vpop.permute.xlu0 %1366
          %1372 = vst.msk [vmem:[#allocation4] sm:$0xff] %vm635, %v1361
          %1373 = vst.msk [vmem:[#allocation4 + $0x8] sm:$0xff] %vm635, %v1363
          %1374 = vst.msk [vmem:[#allocation4 + $0x10] sm:$0xff] %vm635, %v1365
          %1375 = vst.msk [vmem:[#allocation4 + $0x18] sm:$0xf] %vm639, %v1367
          %v1376 = vld [vmem:[%s695 + $0x3] sm:$0xff]
          %v1377 = vld [vmem:[%s695 + $0xb] sm:$0xff]
          %v1378 = vld [vmem:[%s695 + $0x13] sm:$0xff]
          %v1379 = vld [vmem:[%s695 + $0x1b] sm:$0xf]
          %1384 = vrot.lane.b32.xlu0 %v1376, 24
          %v1385 = vpop.permute.xlu0 %1384
          %1386 = vrot.lane.b32.xlu0 %v1377, 24
          %v1387 = vpop.permute.xlu0 %1386
          %1388 = vrot.lane.b32.xlu0 %v1378, 24
          %v1389 = vpop.permute.xlu0 %1388
          %1390 = vrot.lane.b32.xlu0 %v1379, 24
          %v1391 = vpop.permute.xlu0 %1390
          %1396 = vst.msk [vmem:[#allocation4] sm:$0xff] %vm661, %v1385
          %1397 = vst.msk [vmem:[#allocation4 + $0x8] sm:$0xff] %vm661, %v1387
          %1398 = vst.msk [vmem:[#allocation4 + $0x10] sm:$0xff] %vm661, %v1389
          %1399 = vst.msk [vmem:[#allocation4 + $0x18] sm:$0xf] %vm665, %v1391
          %v1400 = vld [vmem:[%s695 + $0x4] sm:$0xff]
          %v1401 = vld [vmem:[%s695 + $0xc] sm:$0xff]
          %v1402 = vld [vmem:[%s695 + $0x14] sm:$0xff]
          %v1403 = vld [vmem:[%s695 + $0x1c] sm:$0xf]
          %1408 = vrot.lane.b32.xlu0 %v1400, 27
          %v1409 = vpop.permute.xlu0 %1408
          %1410 = vrot.lane.b32.xlu0 %v1401, 27
          %v1411 = vpop.permute.xlu0 %1410
          %1412 = vrot.lane.b32.xlu0 %v1402, 27
          %v1413 = vpop.permute.xlu0 %1412
          %1414 = vrot.lane.b32.xlu0 %v1403, 27
          %v1415 = vpop.permute.xlu0 %1414
          %1420 = vst.msk [vmem:[#allocation4] sm:$0xff] %vm687, %v1409
          %1421 = vst.msk [vmem:[#allocation4 + $0x8] sm:$0xff] %vm687, %v1411
          %1422 = vst.msk [vmem:[#allocation4 + $0x10] sm:$0xff] %vm687, %v1413
          %1423 = vst.msk [vmem:[#allocation4 + $0x18] sm:$0xf] %vm691, %v1415
          %v1424 = vld [vmem:[%s828] sm:$0xff]
          %v1425 = vld [vmem:[%s828 + $0x8] sm:$0xff]
          %v1426 = vld [vmem:[%s828 + $0x10] sm:$0xff]
          %v1427 = vld [vmem:[%s828 + $0x18] sm:$0xf]
          %1432 = vrot.lane.b32.xlu0 %v1424, 30
          %v1433 = vpop.permute.xlu0 %1432
          %1434 = vrot.lane.b32.xlu0 %v1425, 30
          %v1435 = vpop.permute.xlu0 %1434
          %1436 = vrot.lane.b32.xlu0 %v1426, 30
          %v1437 = vpop.permute.xlu0 %1436
          %1438 = vrot.lane.b32.xlu0 %v1427, 30
          %v1439 = vpop.permute.xlu0 %1438
          %1444 = vst.msk [vmem:[#allocation4] sm:$0xff] %vm716, %v1433
          %1445 = vst.msk [vmem:[#allocation4 + $0x8] sm:$0xff] %vm716, %v1435
          %1446 = vst.msk [vmem:[#allocation4 + $0x10] sm:$0xff] %vm716, %v1437
          %1447 = vst.msk [vmem:[#allocation4 + $0x18] sm:$0xf] %vm720, %v1439
          %v1448 = vld [vmem:[%s828 + $0x1] sm:$0xff]
          %v1449 = vld [vmem:[%s828 + $0x9] sm:$0xff]
          %v1450 = vld [vmem:[%s828 + $0x11] sm:$0xff]
          %v1451 = vld [vmem:[%s828 + $0x19] sm:$0xf]
          %1456 = vrot.lane.b32.xlu0 %v1448, 33
          %v1457 = vpop.permute.xlu0 %1456
          %1458 = vrot.lane.b32.xlu0 %v1449, 33
          %v1459 = vpop.permute.xlu0 %1458
          %1460 = vrot.lane.b32.xlu0 %v1450, 33
          %v1461 = vpop.permute.xlu0 %1460
          %1462 = vrot.lane.b32.xlu0 %v1451, 33
          %v1463 = vpop.permute.xlu0 %1462
          %1468 = vst.msk [vmem:[#allocation4] sm:$0xff] %vm742, %v1457
          %1469 = vst.msk [vmem:[#allocation4 + $0x8] sm:$0xff] %vm742, %v1459
          %1470 = vst.msk [vmem:[#allocation4 + $0x10] sm:$0xff] %vm742, %v1461
          %1471 = vst.msk [vmem:[#allocation4 + $0x18] sm:$0xf] %vm746, %v1463
          %v1472 = vld [vmem:[%s828 + $0x2] sm:$0xff]
          %v1473 = vld [vmem:[%s828 + $0xa] sm:$0xff]
          %v1474 = vld [vmem:[%s828 + $0x12] sm:$0xff]
          %v1475 = vld [vmem:[%s828 + $0x1a] sm:$0xf]
          %1480 = vrot.lane.b32.xlu0 %v1472, 36
          %v1481 = vpop.permute.xlu0 %1480
          %1482 = vrot.lane.b32.xlu0 %v1473, 36
          %v1483 = vpop.permute.xlu0 %1482
          %1484 = vrot.lane.b32.xlu0 %v1474, 36
          %v1485 = vpop.permute.xlu0 %1484
          %1486 = vrot.lane.b32.xlu0 %v1475, 36
          %v1487 = vpop.permute.xlu0 %1486
          %1492 = vst.msk [vmem:[#allocation4] sm:$0xff] %vm768, %v1481
          %1493 = vst.msk [vmem:[#allocation4 + $0x8] sm:$0xff] %vm768, %v1483
          %1494 = vst.msk [vmem:[#allocation4 + $0x10] sm:$0xff] %vm768, %v1485
          %1495 = vst.msk [vmem:[#allocation4 + $0x18] sm:$0xf] %vm772, %v1487
          %v1496 = vld [vmem:[%s828 + $0x3] sm:$0xff]
          %v1497 = vld [vmem:[%s828 + $0xb] sm:$0xff]
          %v1498 = vld [vmem:[%s828 + $0x13] sm:$0xff]
          %v1499 = vld [vmem:[%s828 + $0x1b] sm:$0xf]
          %1504 = vrot.lane.b32.xlu0 %v1496, 39
          %v1505 = vpop.permute.xlu0 %1504
          %1506 = vrot.lane.b32.xlu0 %v1497, 39
          %v1507 = vpop.permute.xlu0 %1506
          %1508 = vrot.lane.b32.xlu0 %v1498, 39
          %v1509 = vpop.permute.xlu0 %1508
          %1510 = vrot.lane.b32.xlu0 %v1499, 39
          %v1511 = vpop.permute.xlu0 %1510
          %1516 = vst.msk [vmem:[#allocation4] sm:$0xff] %vm794, %v1505
          %1517 = vst.msk [vmem:[#allocation4 + $0x8] sm:$0xff] %vm794, %v1507
          %1518 = vst.msk [vmem:[#allocation4 + $0x10] sm:$0xff] %vm794, %v1509
          %1519 = vst.msk [vmem:[#allocation4 + $0x18] sm:$0xf] %vm798, %v1511
          %v1520 = vld [vmem:[%s828 + $0x4] sm:$0xff]
          %v1521 = vld [vmem:[%s828 + $0xc] sm:$0xff]
          %v1522 = vld [vmem:[%s828 + $0x14] sm:$0xff]
          %v1523 = vld [vmem:[%s828 + $0x1c] sm:$0xf]
          %1528 = vrot.lane.b32.xlu0 %v1520, 42
          %v1529 = vpop.permute.xlu0 %1528
          %1530 = vrot.lane.b32.xlu0 %v1521, 42
          %v1531 = vpop.permute.xlu0 %1530
          %1532 = vrot.lane.b32.xlu0 %v1522, 42
          %v1533 = vpop.permute.xlu0 %1532
          %1534 = vrot.lane.b32.xlu0 %v1523, 42
          %v1535 = vpop.permute.xlu0 %1534
          %1540 = vst.msk [vmem:[#allocation4] sm:$0xff] %vm820, %v1529
          %1541 = vst.msk [vmem:[#allocation4 + $0x8] sm:$0xff] %vm820, %v1531
          %1542 = vst.msk [vmem:[#allocation4 + $0x10] sm:$0xff] %vm820, %v1533
          %1543 = vst.msk [vmem:[#allocation4 + $0x18] sm:$0xf] %vm824, %v1535
          %v1544 = vld [vmem:[%s961] sm:$0xff]
          %v1545 = vld [vmem:[%s961 + $0x8] sm:$0xff]
          %v1546 = vld [vmem:[%s961 + $0x10] sm:$0xff]
          %v1547 = vld [vmem:[%s961 + $0x18] sm:$0xf]
          %1552 = vrot.lane.b32.xlu0 %v1544, 45
          %v1553 = vpop.permute.xlu0 %1552
          %1554 = vrot.lane.b32.xlu0 %v1545, 45
          %v1555 = vpop.permute.xlu0 %1554
          %1556 = vrot.lane.b32.xlu0 %v1546, 45
          %v1557 = vpop.permute.xlu0 %1556
          %1558 = vrot.lane.b32.xlu0 %v1547, 45
          %v1559 = vpop.permute.xlu0 %1558
          %1564 = vst.msk [vmem:[#allocation4] sm:$0xff] %vm849, %v1553
          %1565 = vst.msk [vmem:[#allocation4 + $0x8] sm:$0xff] %vm849, %v1555
          %1566 = vst.msk [vmem:[#allocation4 + $0x10] sm:$0xff] %vm849, %v1557
          %1567 = vst.msk [vmem:[#allocation4 + $0x18] sm:$0xf] %vm853, %v1559
          %v1568 = vld [vmem:[%s961 + $0x1] sm:$0xff]
          %v1569 = vld [vmem:[%s961 + $0x9] sm:$0xff]
          %v1570 = vld [vmem:[%s961 + $0x11] sm:$0xff]
          %v1571 = vld [vmem:[%s961 + $0x19] sm:$0xf]
          %1576 = vrot.lane.b32.xlu0 %v1568, 48
          %v1577 = vpop.permute.xlu0 %1576
          %1578 = vrot.lane.b32.xlu0 %v1569, 48
          %v1579 = vpop.permute.xlu0 %1578
          %1580 = vrot.lane.b32.xlu0 %v1570, 48
          %v1581 = vpop.permute.xlu0 %1580
          %1582 = vrot.lane.b32.xlu0 %v1571, 48
          %v1583 = vpop.permute.xlu0 %1582
          %1588 = vst.msk [vmem:[#allocation4] sm:$0xff] %vm875, %v1577
          %1589 = vst.msk [vmem:[#allocation4 + $0x8] sm:$0xff] %vm875, %v1579
          %1590 = vst.msk [vmem:[#allocation4 + $0x10] sm:$0xff] %vm875, %v1581
          %1591 = vst.msk [vmem:[#allocation4 + $0x18] sm:$0xf] %vm879, %v1583
          %v1592 = vld [vmem:[%s961 + $0x2] sm:$0xff]
          %v1593 = vld [vmem:[%s961 + $0xa] sm:$0xff]
          %v1594 = vld [vmem:[%s961 + $0x12] sm:$0xff]
          %v1595 = vld [vmem:[%s961 + $0x1a] sm:$0xf]
          %1600 = vrot.lane.b32.xlu0 %v1592, 51
          %v1601 = vpop.permute.xlu0 %1600
          %1602 = vrot.lane.b32.xlu0 %v1593, 51
          %v1603 = vpop.permute.xlu0 %1602
          %1604 = vrot.lane.b32.xlu0 %v1594, 51
          %v1605 = vpop.permute.xlu0 %1604
          %1606 = vrot.lane.b32.xlu0 %v1595, 51
          %v1607 = vpop.permute.xlu0 %1606
          %1612 = vst.msk [vmem:[#allocation4] sm:$0xff] %vm901, %v1601
          %1613 = vst.msk [vmem:[#allocation4 + $0x8] sm:$0xff] %vm901, %v1603
          %1614 = vst.msk [vmem:[#allocation4 + $0x10] sm:$0xff] %vm901, %v1605
          %1615 = vst.msk [vmem:[#allocation4 + $0x18] sm:$0xf] %vm905, %v1607
          %v1616 = vld [vmem:[%s961 + $0x3] sm:$0xff]
          %v1617 = vld [vmem:[%s961 + $0xb] sm:$0xff]
          %v1618 = vld [vmem:[%s961 + $0x13] sm:$0xff]
          %v1619 = vld [vmem:[%s961 + $0x1b] sm:$0xf]
          %1624 = vrot.lane.b32.xlu0 %v1616, 54
          %v1625 = vpop.permute.xlu0 %1624
          %1626 = vrot.lane.b32.xlu0 %v1617, 54
          %v1627 = vpop.permute.xlu0 %1626
          %1628 = vrot.lane.b32.xlu0 %v1618, 54
          %v1629 = vpop.permute.xlu0 %1628
          %1630 = vrot.lane.b32.xlu0 %v1619, 54
          %v1631 = vpop.permute.xlu0 %1630
          %1636 = vst.msk [vmem:[#allocation4] sm:$0xff] %vm927, %v1625
          %1637 = vst.msk [vmem:[#allocation4 + $0x8] sm:$0xff] %vm927, %v1627
          %1638 = vst.msk [vmem:[#allocation4 + $0x10] sm:$0xff] %vm927, %v1629
          %1639 = vst.msk [vmem:[#allocation4 + $0x18] sm:$0xf] %vm931, %v1631
          %v1640 = vld [vmem:[%s961 + $0x4] sm:$0xff]
          %v1641 = vld [vmem:[%s961 + $0xc] sm:$0xff]
          %v1642 = vld [vmem:[%s961 + $0x14] sm:$0xff]
          %v1643 = vld [vmem:[%s961 + $0x1c] sm:$0xf]
          %1648 = vrot.lane.b32.xlu0 %v1640, 57
          %v1649 = vpop.permute.xlu0 %1648
          %1650 = vrot.lane.b32.xlu0 %v1641, 57
          %v1651 = vpop.permute.xlu0 %1650
          %1652 = vrot.lane.b32.xlu0 %v1642, 57
          %v1653 = vpop.permute.xlu0 %1652
          %1654 = vrot.lane.b32.xlu0 %v1643, 57
          %v1655 = vpop.permute.xlu0 %1654
          %1660 = vst.msk [vmem:[#allocation4] sm:$0xff] %vm953, %v1649
          %1661 = vst.msk [vmem:[#allocation4 + $0x8] sm:$0xff] %vm953, %v1651
          %1662 = vst.msk [vmem:[#allocation4 + $0x10] sm:$0xff] %vm953, %v1653
          %1663 = vst.msk [vmem:[#allocation4 + $0x18] sm:$0xf] %vm957, %v1655
          %s1664 = sadd.s32 %s443, 5
          %s1665 = smul.u32 %s1664, 32
          %s1666 = scalar_lea.vmem %s383, %s1665
          %v1667 = vld [vmem:[%s1666] sm:$0xff]
          %v1668 = vld [vmem:[%s1666 + $0x8] sm:$0xff]
          %v1669 = vld [vmem:[%s1666 + $0x10] sm:$0xff]
          %v1670 = vld [vmem:[%s1666 + $0x18] sm:$0xf]
          %1675 = vrot.lane.b32.xlu0 %v1667, 60
          %v1676 = vpop.permute.xlu0 %1675
          %1677 = vrot.lane.b32.xlu0 %v1668, 60
          %v1678 = vpop.permute.xlu0 %1677
          %1679 = vrot.lane.b32.xlu0 %v1669, 60
          %v1680 = vpop.permute.xlu0 %1679
          %1681 = vrot.lane.b32.xlu0 %v1670, 60
          %v1682 = vpop.permute.xlu0 %1681
          %1687 = vst.msk [vmem:[#allocation4] sm:$0xff] %vm982, %v1676
          %1688 = vst.msk [vmem:[#allocation4 + $0x8] sm:$0xff] %vm982, %v1678
          %1689 = vst.msk [vmem:[#allocation4 + $0x10] sm:$0xff] %vm982, %v1680
          %1690 = vst.msk [vmem:[#allocation4 + $0x18] sm:$0xf] %vm986, %v1682
          %v1691 = vld [vmem:[%s1666 + $0x1] sm:$0xff]
          %v1692 = vld [vmem:[%s1666 + $0x9] sm:$0xff]
          %v1693 = vld [vmem:[%s1666 + $0x11] sm:$0xff]
          %v1694 = vld [vmem:[%s1666 + $0x19] sm:$0xf]
          %1699 = vrot.lane.b32.xlu0 %v1691, 63
          %v1700 = vpop.permute.xlu0 %1699
          %1701 = vrot.lane.b32.xlu0 %v1692, 63
          %v1702 = vpop.permute.xlu0 %1701
          %1703 = vrot.lane.b32.xlu0 %v1693, 63
          %v1704 = vpop.permute.xlu0 %1703
          %1705 = vrot.lane.b32.xlu0 %v1694, 63
          %v1706 = vpop.permute.xlu0 %1705
          %1711 = vst.msk [vmem:[#allocation4] sm:$0xff] %vm1008, %v1700
          %1712 = vst.msk [vmem:[#allocation4 + $0x8] sm:$0xff] %vm1008, %v1702
          %1713 = vst.msk [vmem:[#allocation4 + $0x10] sm:$0xff] %vm1008, %v1704
          %1714 = vst.msk [vmem:[#allocation4 + $0x18] sm:$0xf] %vm1012, %v1706
          %v1715 = vld [vmem:[%s1666 + $0x2] sm:$0xff]
          %v1716 = vld [vmem:[%s1666 + $0xa] sm:$0xff]
          %v1717 = vld [vmem:[%s1666 + $0x12] sm:$0xff]
          %v1718 = vld [vmem:[%s1666 + $0x1a] sm:$0xf]
          %1723 = vrot.lane.b32.xlu0 %v1715, 66
          %v1724 = vpop.permute.xlu0 %1723
          %1725 = vrot.lane.b32.xlu0 %v1716, 66
          %v1726 = vpop.permute.xlu0 %1725
          %1727 = vrot.lane.b32.xlu0 %v1717, 66
          %v1728 = vpop.permute.xlu0 %1727
          %1729 = vrot.lane.b32.xlu0 %v1718, 66
          %v1730 = vpop.permute.xlu0 %1729
          %1735 = vst.msk [vmem:[#allocation4] sm:$0xff] %vm1034, %v1724
          %1736 = vst.msk [vmem:[#allocation4 + $0x8] sm:$0xff] %vm1034, %v1726
          %1737 = vst.msk [vmem:[#allocation4 + $0x10] sm:$0xff] %vm1034, %v1728
          %1738 = vst.msk [vmem:[#allocation4 + $0x18] sm:$0xf] %vm1038, %v1730
          %v1739 = vld [vmem:[%s1666 + $0x3] sm:$0xff]
          %v1740 = vld [vmem:[%s1666 + $0xb] sm:$0xff]
          %v1741 = vld [vmem:[%s1666 + $0x13] sm:$0xff]
          %v1742 = vld [vmem:[%s1666 + $0x1b] sm:$0xf]
          %1747 = vrot.lane.b32.xlu0 %v1739, 69
          %v1748 = vpop.permute.xlu0 %1747
          %1749 = vrot.lane.b32.xlu0 %v1740, 69
          %v1750 = vpop.permute.xlu0 %1749
          %1751 = vrot.lane.b32.xlu0 %v1741, 69
          %v1752 = vpop.permute.xlu0 %1751
          %1753 = vrot.lane.b32.xlu0 %v1742, 69
          %v1754 = vpop.permute.xlu0 %1753
          %1759 = vst.msk [vmem:[#allocation4] sm:$0xff] %vm1060, %v1748
          %1760 = vst.msk [vmem:[#allocation4 + $0x8] sm:$0xff] %vm1060, %v1750
          %1761 = vst.msk [vmem:[#allocation4 + $0x10] sm:$0xff] %vm1060, %v1752
          %1762 = vst.msk [vmem:[#allocation4 + $0x18] sm:$0xf] %vm1064, %v1754
          %v1763 = vld [vmem:[%s1666 + $0x4] sm:$0xff]
          %v1764 = vld [vmem:[%s1666 + $0xc] sm:$0xff]
          %v1765 = vld [vmem:[%s1666 + $0x14] sm:$0xff]
          %v1766 = vld [vmem:[%s1666 + $0x1c] sm:$0xf]
          %1771 = vrot.lane.b32.xlu0 %v1763, 72
          %v1772 = vpop.permute.xlu0 %1771
          %1773 = vrot.lane.b32.xlu0 %v1764, 72
          %v1774 = vpop.permute.xlu0 %1773
          %1775 = vrot.lane.b32.xlu0 %v1765, 72
          %v1776 = vpop.permute.xlu0 %1775
          %1777 = vrot.lane.b32.xlu0 %v1766, 72
          %v1778 = vpop.permute.xlu0 %1777
          %1783 = vst.msk [vmem:[#allocation4] sm:$0xff] %vm1086, %v1772
          %1784 = vst.msk [vmem:[#allocation4 + $0x8] sm:$0xff] %vm1086, %v1774
          %1785 = vst.msk [vmem:[#allocation4 + $0x10] sm:$0xff] %vm1086, %v1776
          %1786 = vst.msk [vmem:[#allocation4 + $0x18] sm:$0xf] %vm1090, %v1778
          %v1787 = vld [vmem:[#allocation4] sm:$0xff]
          %v1788 = vld [vmem:[#allocation4 + $0x8] sm:$0xff]
          %v1789 = vld [vmem:[#allocation4 + $0x10] sm:$0xff]
          %v1790 = vld [vmem:[#allocation4 + $0x18] sm:$0xf]
          %v1791 = vpack.c.bf16 %v1788, %v1787
          %v1792 = vpack.c.bf16 %v1790, %v1789
          %v1794 = vsel %vm1133, %v1791, 0
          %v1797 = vsel %vm1133, %v1792, 0
          %1799 = vmatprep.subr.bf16.mxu0 0
          %1800 = vmatpush1.bf16.msra.mxu0 %v1124
          %1801 = vmatprep.subr.bf16.mxu0 0
          %1802 = vmatpush1.bf16.msra.mxu0 %v1125
          %1803 = vmatprep.subr.bf16.mxu0 0
          %1804 = vmatpush1.bf16.msra.mxu0 %v1126
          %1805 = vmatprep.subr.bf16.mxu0 0
          %1806 = vmatpush1.bf16.msra.mxu0 %v1127
          %1807 = vmatprep.subr.bf16.mxu0 0
          %1808 = vmatpush1.bf16.msra.mxu0 %v1145
          %1809 = vmatprep.subr.bf16.mxu0 0
          %1810 = vmatpush1.bf16.msra.mxu0 0
          %1811 = vmatprep.subr.bf16.mxu0 0
          %1812 = vmatpush1.bf16.msra.mxu0 0
          %1813 = vmatprep.subr.bf16.mxu0 0
          %1814 = vmatpush1.bf16.msra.mxu0 0
          %1815 = vmatprep.subr.bf16.mxu0 0
          %1816 = vmatpush1.bf16.msra.mxu0 0
          %1817 = vmatprep.subr.bf16.mxu0 0
          %1818 = vmatpush1.bf16.msra.mxu0 0
          %1819 = vmatprep.subr.bf16.mxu0 0
          %1820 = vmatpush1.bf16.msra.mxu0 0
          %1821 = vmatprep.subr.bf16.mxu0 0
          %1822 = vmatpush1.bf16.msra.mxu0 0
          %1823 = vmatprep.subr.bf16.mxu0 0
          %1824 = vmatpush1.bf16.msra.mxu0 0
          %1825 = vmatprep.subr.bf16.mxu0 0
          %1826 = vmatpush1.bf16.msra.mxu0 0
          %1827 = vmatprep.subr.bf16.mxu0 0
          %1828 = vmatpush1.bf16.msra.mxu0 0
          %1829 = vmatprep.subr.bf16.mxu0 0
          %1830 = vmatpush1.bf16.msra.mxu0 0
          %1831 = vmatprep.mubr.bf16.mxu0 0
          %1832 = vmatmul.mubr.bf16.gmra.mrb[0].mxu0 %v1794
          %v1833 = vpop.f32.mrb[0].mxu0
          %v1834 = vadd.f32 %v1102, %v1833
          %v1835 = vpop.f32.mrb[0].mxu0
          %v1836 = vpop.f32.mrb[0].mxu0
          %v1837 = vadd.f32 %v1102, %v1836
          %v1838 = vpop.f32.mrb[0].mxu0
          %1839 = vmatprep.mubr.bf16.mxu0 0
          %1840 = vmatmul.mubr.bf16.gmra.mrb[0].mxu0 %v1797
          %v1841 = vpop.f32.mrb[0].mxu0
          %v1842 = vadd.f32 %v1102, %v1841
          %v1843 = vpop.f32.mrb[0].mxu0
          %v1844 = vpop.f32.mrb[0].mxu0
          %v1845 = vadd.f32 %v1102, %v1844
          %v1846 = vpop.f32.mrb[0].mxu0
          %1847 = vdwg.mxu0
          %v1848 = vmax.f32 %v1834, 0.0
          %v1849 = vmax.f32 %v1837, 0.0
          %v1850 = vmax.f32 %v1842, 0.0
          %v1851 = vmax.f32 %v1845, 0.0
          %v1852 = vmax.f32 %v1196, %v1848
          %v1853 = vmax.f32 %v1197, %v1849
          %v1854 = vmax.f32 %v1198, %v1850
          %v1855 = vmax.f32 %v1199, %v1851
          %vm1856 = vcmask 228352
          %v1858 = vsel %vm1856, %v427, 0
          %v1861 = vsel %vm1856, %v428, 0
          %vm1863 = vcmask 1043456
          %v1865 = vsel %vm1863, %v1855, 0
          %1867 = vmatprep.subr.mxu0 0.0
          %1868 = vmatpush1.msra.mxu0 %v1852
          %1869 = vmatprep.subr.mxu0 0.0
          %1870 = vmatpush1.msra.mxu0 %v1853
          %1871 = vmatprep.subr.mxu0 0.0
          %1872 = vmatpush1.msra.mxu0 %v1854
          %1873 = vmatprep.subr.mxu0 0.0
          %1874 = vmatpush1.msra.mxu0 %v1865
          %1875 = vmatprep.subr.mxu0 0.0
          %1876 = vmatpush1.msra.mxu0 0.0
          %1877 = vmatprep.subr.mxu0 0.0
          %1878 = vmatpush1.msra.mxu0 0.0
          %1879 = vmatprep.subr.mxu0 0.0
          %1880 = vmatpush1.msra.mxu0 0.0
          %1881 = vmatprep.subr.mxu0 0.0
          %1882 = vmatpush1.msra.mxu0 0.0
          %1883 = vmatprep.subr.mxu0 0.0
          %1884 = vmatpush1.msra.mxu0 0.0
          %1885 = vmatprep.subr.mxu0 0.0
          %1886 = vmatpush1.msra.mxu0 0.0
          %1887 = vmatprep.subr.mxu0 0.0
          %1888 = vmatpush1.msra.mxu0 0.0
          %1889 = vmatprep.subr.mxu0 0.0
          %1890 = vmatpush1.msra.mxu0 0.0
          %1891 = vmatprep.subr.mxu0 0.0
          %1892 = vmatpush1.msra.mxu0 0.0
          %1893 = vmatprep.subr.mxu0 0.0
          %1894 = vmatpush1.msra.mxu0 0.0
          %1895 = vmatprep.subr.mxu0 0.0
          %1896 = vmatpush1.msra.mxu0 0.0
          %1897 = vmatprep.subr.mxu0 0.0
          %1898 = vmatpush1.msra.mxu0 0.0
          %1899 = vmatprep.subr.mxu0 0.0
          %1900 = vmatpush1.msra.mxu0 0.0
          %1901 = vmatprep.subr.mxu0 0.0
          %1902 = vmatpush1.msra.mxu0 0.0
          %1903 = vmatprep.subr.mxu0 0.0
          %1904 = vmatpush1.msra.mxu0 0.0
          %1905 = vmatprep.subr.mxu0 0.0
          %1906 = vmatpush1.msra.mxu0 0.0
          %1907 = vmatprep.subr.mxu0 0.0
          %1908 = vmatpush1.msra.mxu0 0.0
          %1909 = vmatprep.subr.mxu0 0.0
          %1910 = vmatpush1.msra.mxu0 0.0
          %1911 = vmatprep.subr.mxu0 0.0
          %1912 = vmatpush1.msra.mxu0 0.0
          %1913 = vmatprep.subr.mxu0 0.0
          %1914 = vmatpush1.msra.mxu0 0.0
          %1915 = vmatprep.subr.mxu0 0.0
          %1916 = vmatpush1.msra.mxu0 0.0
          %1917 = vmatprep.subr.mxu0 0.0
          %1918 = vmatpush1.msra.mxu0 0.0
          %1919 = vmatprep.subr.mxu0 0.0
          %1920 = vmatpush1.msra.mxu0 0.0
          %1921 = vmatprep.subr.mxu0 0.0
          %1922 = vmatpush1.msra.mxu0 0.0
          %1923 = vmatprep.subr.mxu0 0.0
          %1924 = vmatpush1.msra.mxu0 0.0
          %1925 = vmatprep.subr.mxu0 0.0
          %1926 = vmatpush1.msra.mxu0 0.0
          %1927 = vmatprep.subr.mxu0 0.0
          %1928 = vmatpush1.msra.mxu0 0.0
          %1929 = vmatprep.subr.mxu0 0.0
          %1930 = vmatpush1.msra.mxu0 0.0
          %1931 = vmatprep.mubr.f32.mxu0 0.0
          %1932 = vmatmul.mubr.f32.gmra.mrb[0].mxu0 %v1858
          %v1933 = vpop.f32.mrb[0].mxu0
          %v1934 = vadd.f32 0.0, %v1933
          %v1935 = vpop.f32.mrb[0].mxu0
          %1936 = vmatprep.mubr.f32.mxu0 0.0
          %1937 = vmatmul.mubr.f32.gmra.mrb[0].mxu0 %v1861
          %v1938 = vpop.f32.mrb[0].mxu0
          %v1939 = vadd.f32 0.0, %v1938
          %v1940 = vpop.f32.mrb[0].mxu0
          %1941 = vdwg.mxu0
          %v1943 = vsel %vm1856, %v435, 0
          %v1946 = vsel %vm1856, %v436, 0
          %1948 = vmatprep.subr.mxu0 0.0
          %1949 = vmatpush1.msra.mxu0 %v1852
          %1950 = vmatprep.subr.mxu0 0.0
          %1951 = vmatpush1.msra.mxu0 %v1853
          %1952 = vmatprep.subr.mxu0 0.0
          %1953 = vmatpush1.msra.mxu0 %v1854
          %1954 = vmatprep.subr.mxu0 0.0
          %1955 = vmatpush1.msra.mxu0 %v1865
          %1956 = vmatprep.subr.mxu0 0.0
          %1957 = vmatpush1.msra.mxu0 0.0
          %1958 = vmatprep.subr.mxu0 0.0
          %1959 = vmatpush1.msra.mxu0 0.0
          %1960 = vmatprep.subr.mxu0 0.0
          %1961 = vmatpush1.msra.mxu0 0.0
          %1962 = vmatprep.subr.mxu0 0.0
          %1963 = vmatpush1.msra.mxu0 0.0
          %1964 = vmatprep.subr.mxu0 0.0
          %1965 = vmatpush1.msra.mxu0 0.0
          %1966 = vmatprep.subr.mxu0 0.0
          %1967 = vmatpush1.msra.mxu0 0.0
          %1968 = vmatprep.subr.mxu0 0.0
          %1969 = vmatpush1.msra.mxu0 0.0
          %1970 = vmatprep.subr.mxu0 0.0
          %1971 = vmatpush1.msra.mxu0 0.0
          %1972 = vmatprep.subr.mxu0 0.0
          %1973 = vmatpush1.msra.mxu0 0.0
          %1974 = vmatprep.subr.mxu0 0.0
          %1975 = vmatpush1.msra.mxu0 0.0
          %1976 = vmatprep.subr.mxu0 0.0
          %1977 = vmatpush1.msra.mxu0 0.0
          %1978 = vmatprep.subr.mxu0 0.0
          %1979 = vmatpush1.msra.mxu0 0.0
          %1980 = vmatprep.subr.mxu0 0.0
          %1981 = vmatpush1.msra.mxu0 0.0
          %1982 = vmatprep.subr.mxu0 0.0
          %1983 = vmatpush1.msra.mxu0 0.0
          %1984 = vmatprep.subr.mxu0 0.0
          %1985 = vmatpush1.msra.mxu0 0.0
          %1986 = vmatprep.subr.mxu0 0.0
          %1987 = vmatpush1.msra.mxu0 0.0
          %1988 = vmatprep.subr.mxu0 0.0
          %1989 = vmatpush1.msra.mxu0 0.0
          %1990 = vmatprep.subr.mxu0 0.0
          %1991 = vmatpush1.msra.mxu0 0.0
          %1992 = vmatprep.subr.mxu0 0.0
          %1993 = vmatpush1.msra.mxu0 0.0
          %1994 = vmatprep.subr.mxu0 0.0
          %1995 = vmatpush1.msra.mxu0 0.0
          %1996 = vmatprep.subr.mxu0 0.0
          %1997 = vmatpush1.msra.mxu0 0.0
          %1998 = vmatprep.subr.mxu0 0.0
          %1999 = vmatpush1.msra.mxu0 0.0
          %2000 = vmatprep.subr.mxu0 0.0
          %2001 = vmatpush1.msra.mxu0 0.0
          %2002 = vmatprep.subr.mxu0 0.0
          %2003 = vmatpush1.msra.mxu0 0.0
          %2004 = vmatprep.subr.mxu0 0.0
          %2005 = vmatpush1.msra.mxu0 0.0
          %2006 = vmatprep.subr.mxu0 0.0
          %2007 = vmatpush1.msra.mxu0 0.0
          %2008 = vmatprep.subr.mxu0 0.0
          %2009 = vmatpush1.msra.mxu0 0.0
          %2010 = vmatprep.subr.mxu0 0.0
          %2011 = vmatpush1.msra.mxu0 0.0
          %2012 = vmatprep.mubr.f32.mxu0 0.0
          %2013 = vmatmul.mubr.f32.gmra.mrb[0].mxu0 %v1943
          %v2014 = vpop.f32.mrb[0].mxu0
          %v2015 = vadd.f32 0.0, %v2014
          %v2016 = vpop.f32.mrb[0].mxu0
          %2017 = vmatprep.mubr.f32.mxu0 0.0
          %2018 = vmatmul.mubr.f32.gmra.mrb[0].mxu0 %v1946
          %v2019 = vpop.f32.mrb[0].mxu0
          %v2020 = vadd.f32 0.0, %v2019
          %v2021 = vpop.f32.mrb[0].mxu0
          %2022 = vdwg.mxu0
          %v2023 = vmax.f32 %v1934, %v2015
          %v2024 = vmax.f32 %v1939, %v2020
          %s2025 = smul.u32 %s438, 16
          %s2026 = scalar_lea.vmem [#allocation2], %s2025
          %vm2027 = vcmask 48128
          %2028 = vst.msk [vmem:[%s2026] sm:$0xff] %vm2027, %v2023
          %vm2029 = vcmask 46080
          %2030 = vst.msk [vmem:[%s2026 + $0x8] sm:$0x3f] %vm2029, %v2024
        $region69: #{lenet_forward.1} parent=63 // loop_footer
          %s442 = sadd.s32 1, %s438
        $region70: #{lenet_forward.1} parent=63 // loop_footer_branch
          %437 = sbr.rel target = $region66
        $region71: #{lenet_forward.1} parent=63 // loop_exit
          _
        loop: start=0, step=1, limit=5
        $region72: #{lenet_forward.1} parent=63 // loop_pre_header
          _
        $region73: #{lenet_forward.1} parent=63 // loop_header
          %s2032 = sphi 0, %s2036
          %p2033 = scmp.ge.s32.totalorder %s2032, 5
        $region74: #{lenet_forward.1} parent=63 // loop_header_branch
          %2035 = sbr.rel (%p2033) target = $region78
        $region75: #{lenet_forward.1} parent=63 // loop_body
          %s2037 = smul.u32 %s2032, 2
          %s2038 = smul.u32 %s2037, 16
          %s2039 = scalar_lea.vmem [#allocation2], %s2038
          %v2040 = vld [vmem:[%s2039] sm:$0xff]
          %v2041 = vld [vmem:[%s2039 + $0x8] sm:$0x3]
          %vm2042 = vcmask 48128
          %2043 = vst.msk [vmem:[#allocation5] sm:$0xff] %vm2042, %v2040
          %vm2044 = vcmask 41984
          %2045 = vst.msk [vmem:[#allocation5 + $0x10] sm:$0x3] %vm2044, %v2041
          %v2046 = vld [vmem:[%s2039 + $0x1] sm:$0xff]
          %v2047 = vld [vmem:[%s2039 + $0x9] sm:$0x3]
          %2050 = vrot.lane.b32.xlu0 %v2046, 6
          %v2051 = vpop.permute.xlu0 %2050
          %2052 = vrot.lane.b32.xlu0 %v2047, 6
          %v2053 = vpop.permute.xlu0 %2052
          %vm2056 = vcmask 97328
          %2057 = vst.msk [vmem:[#allocation5] sm:$0xff] %vm2056, %v2051
          %vm2058 = vcmask 91184
          %2059 = vst.msk [vmem:[#allocation5 + $0x10] sm:$0x3] %vm2058, %v2053
          %v2060 = vld [vmem:[%s2039 + $0x2] sm:$0xff]
          %v2061 = vld [vmem:[%s2039 + $0xa] sm:$0x3]
          %2064 = vrot.lane.b32.xlu0 %v2060, 12
          %v2065 = vpop.permute.xlu0 %2064
          %2066 = vrot.lane.b32.xlu0 %v2061, 12
          %v2067 = vpop.permute.xlu0 %2066
          %vm2070 = vcmask 146528
          %2071 = vst.msk [vmem:[#allocation5] sm:$0xff] %vm2070, %v2065
          %vm2072 = vcmask 140384
          %2073 = vst.msk [vmem:[#allocation5 + $0x10] sm:$0x3] %vm2072, %v2067
          %v2074 = vld [vmem:[%s2039 + $0x3] sm:$0xff]
          %v2075 = vld [vmem:[%s2039 + $0xb] sm:$0x3]
          %2078 = vrot.lane.b32.xlu0 %v2074, 18
          %v2079 = vpop.permute.xlu0 %2078
          %2080 = vrot.lane.b32.xlu0 %v2075, 18
          %v2081 = vpop.permute.xlu0 %2080
          %vm2084 = vcmask 195728
          %2085 = vst.msk [vmem:[#allocation5] sm:$0xff] %vm2084, %v2079
          %vm2086 = vcmask 189584
          %2087 = vst.msk [vmem:[#allocation5 + $0x10] sm:$0x3] %vm2086, %v2081
          %v2088 = vld [vmem:[%s2039 + $0x4] sm:$0xff]
          %v2089 = vld [vmem:[%s2039 + $0xc] sm:$0x3]
          %2092 = vrot.lane.b32.xlu0 %v2088, 24
          %v2093 = vpop.permute.xlu0 %2092
          %2094 = vrot.lane.b32.xlu0 %v2089, 24
          %v2095 = vpop.permute.xlu0 %2094
          %vm2098 = vcmask 244928
          %2099 = vst.msk [vmem:[#allocation5] sm:$0xff] %vm2098, %v2093
          %vm2100 = vcmask 238784
          %2101 = vst.msk [vmem:[#allocation5 + $0x10] sm:$0x3] %vm2100, %v2095
          %s2102 = sadd.s32 %s2037, 1
          %s2103 = smul.u32 %s2102, 16
          %s2104 = scalar_lea.vmem [#allocation2], %s2103
          %v2105 = vld [vmem:[%s2104] sm:$0xff]
          %v2106 = vld [vmem:[%s2104 + $0x8] sm:$0x3]
          %2109 = vrot.lane.b32.xlu0 %v2105, 30
          %v2110 = vpop.permute.xlu0 %2109
          %2111 = vrot.lane.b32.xlu0 %v2106, 30
          %v2112 = vpop.permute.xlu0 %2111
          %vm2115 = vcmask 294128
          %2116 = vst.msk [vmem:[#allocation5] sm:$0xff] %vm2115, %v2110
          %vm2117 = vcmask 287984
          %2118 = vst.msk [vmem:[#allocation5 + $0x10] sm:$0x3] %vm2117, %v2112
          %v2119 = vld [vmem:[%s2104 + $0x1] sm:$0xff]
          %v2120 = vld [vmem:[%s2104 + $0x9] sm:$0x3]
          %2123 = vrot.lane.b32.xlu0 %v2119, 36
          %v2124 = vpop.permute.xlu0 %2123
          %2125 = vrot.lane.b32.xlu0 %v2120, 36
          %v2126 = vpop.permute.xlu0 %2125
          %vm2129 = vcmask 343328
          %2130 = vst.msk [vmem:[#allocation5] sm:$0xff] %vm2129, %v2124
          %vm2131 = vcmask 337184
          %2132 = vst.msk [vmem:[#allocation5 + $0x10] sm:$0x3] %vm2131, %v2126
          %v2133 = vld [vmem:[%s2104 + $0x2] sm:$0xff]
          %v2134 = vld [vmem:[%s2104 + $0xa] sm:$0x3]
          %2137 = vrot.lane.b32.xlu0 %v2133, 42
          %v2138 = vpop.permute.xlu0 %2137
          %2139 = vrot.lane.b32.xlu0 %v2134, 42
          %v2140 = vpop.permute.xlu0 %2139
          %vm2143 = vcmask 392528
          %2144 = vst.msk [vmem:[#allocation5] sm:$0xff] %vm2143, %v2138
          %vm2145 = vcmask 386384
          %2146 = vst.msk [vmem:[#allocation5 + $0x10] sm:$0x3] %vm2145, %v2140
          %v2147 = vld [vmem:[%s2104 + $0x3] sm:$0xff]
          %v2148 = vld [vmem:[%s2104 + $0xb] sm:$0x3]
          %2151 = vrot.lane.b32.xlu0 %v2147, 48
          %v2152 = vpop.permute.xlu0 %2151
          %2153 = vrot.lane.b32.xlu0 %v2148, 48
          %v2154 = vpop.permute.xlu0 %2153
          %vm2157 = vcmask 441728
          %2158 = vst.msk [vmem:[#allocation5] sm:$0xff] %vm2157, %v2152
          %vm2159 = vcmask 435584
          %2160 = vst.msk [vmem:[#allocation5 + $0x10] sm:$0x3] %vm2159, %v2154
          %v2161 = vld [vmem:[%s2104 + $0x4] sm:$0xff]
          %v2162 = vld [vmem:[%s2104 + $0xc] sm:$0x3]
          %2165 = vrot.lane.b32.xlu0 %v2161, 54
          %v2166 = vpop.permute.xlu0 %2165
          %2167 = vrot.lane.b32.xlu0 %v2162, 54
          %v2168 = vpop.permute.xlu0 %2167
          %vm2171 = vcmask 490928
          %2172 = vst.msk [vmem:[#allocation5] sm:$0xff] %vm2171, %v2166
          %vm2173 = vcmask 484784
          %2174 = vst.msk [vmem:[#allocation5 + $0x10] sm:$0x3] %vm2173, %v2168
          %s2175 = sadd.s32 %s2037, 2
          %s2176 = smul.u32 %s2175, 16
          %s2177 = scalar_lea.vmem [#allocation2], %s2176
          %v2178 = vld [vmem:[%s2177] sm:$0xff]
          %v2179 = vld [vmem:[%s2177 + $0x8] sm:$0x3]
          %2182 = vrot.lane.b32.xlu0 %v2178, 60
          %v2183 = vpop.permute.xlu0 %2182
          %2184 = vrot.lane.b32.xlu0 %v2179, 60
          %v2185 = vpop.permute.xlu0 %2184
          %vm2188 = vcmask 540128
          %2189 = vst.msk [vmem:[#allocation5] sm:$0xff] %vm2188, %v2183
          %vm2190 = vcmask 533984
          %2191 = vst.msk [vmem:[#allocation5 + $0x10] sm:$0x3] %vm2190, %v2185
          %v2192 = vld [vmem:[%s2177 + $0x1] sm:$0xff]
          %v2193 = vld [vmem:[%s2177 + $0x9] sm:$0x3]
          %2196 = vrot.lane.b32.xlu0 %v2192, 66
          %v2197 = vpop.permute.xlu0 %2196
          %2198 = vrot.lane.b32.xlu0 %v2193, 66
          %v2199 = vpop.permute.xlu0 %2198
          %vm2202 = vcmask 589328
          %2203 = vst.msk [vmem:[#allocation5] sm:$0xff] %vm2202, %v2197
          %vm2204 = vcmask 583184
          %2205 = vst.msk [vmem:[#allocation5 + $0x10] sm:$0x3] %vm2204, %v2199
          %v2206 = vld [vmem:[%s2177 + $0x2] sm:$0xff]
          %v2207 = vld [vmem:[%s2177 + $0xa] sm:$0x3]
          %2210 = vrot.lane.b32.xlu0 %v2206, 72
          %v2211 = vpop.permute.xlu0 %2210
          %2212 = vrot.lane.b32.xlu0 %v2207, 72
          %v2213 = vpop.permute.xlu0 %2212
          %vm2216 = vcmask 638528
          %2217 = vst.msk [vmem:[#allocation5] sm:$0xff] %vm2216, %v2211
          %vm2218 = vcmask 632384
          %2219 = vst.msk [vmem:[#allocation5 + $0x10] sm:$0x3] %vm2218, %v2213
          %v2220 = vld [vmem:[%s2177 + $0x3] sm:$0xff]
          %v2221 = vld [vmem:[%s2177 + $0xb] sm:$0x3]
          %2224 = vrot.lane.b32.xlu0 %v2220, 78
          %v2225 = vpop.permute.xlu0 %2224
          %2226 = vrot.lane.b32.xlu0 %v2221, 78
          %v2227 = vpop.permute.xlu0 %2226
          %vm2230 = vcmask 687728
          %2231 = vst.msk [vmem:[#allocation5] sm:$0xff] %vm2230, %v2225
          %vm2232 = vcmask 681584
          %2233 = vst.msk [vmem:[#allocation5 + $0x10] sm:$0x3] %vm2232, %v2227
          %v2234 = vld [vmem:[%s2177 + $0x4] sm:$0xff]
          %v2235 = vld [vmem:[%s2177 + $0xc] sm:$0x3]
          %2238 = vrot.lane.b32.xlu0 %v2234, 84
          %v2239 = vpop.permute.xlu0 %2238
          %2240 = vrot.lane.b32.xlu0 %v2235, 84
          %v2241 = vpop.permute.xlu0 %2240
          %vm2244 = vcmask 736928
          %2245 = vst.msk [vmem:[#allocation5] sm:$0xff] %vm2244, %v2239
          %vm2246 = vcmask 730784
          %2247 = vst.msk [vmem:[#allocation5 + $0x10] sm:$0x3] %vm2246, %v2241
          %s2248 = sadd.s32 %s2037, 3
          %s2249 = smul.u32 %s2248, 16
          %s2250 = scalar_lea.vmem [#allocation2], %s2249
          %v2251 = vld [vmem:[%s2250] sm:$0xff]
          %v2252 = vld [vmem:[%s2250 + $0x8] sm:$0x3]
          %2255 = vrot.lane.b32.xlu0 %v2251, 90
          %v2256 = vpop.permute.xlu0 %2255
          %2257 = vrot.lane.b32.xlu0 %v2252, 90
          %v2258 = vpop.permute.xlu0 %2257
          %vm2261 = vcmask 786128
          %2262 = vst.msk [vmem:[#allocation5] sm:$0xff] %vm2261, %v2256
          %vm2263 = vcmask 779984
          %2264 = vst.msk [vmem:[#allocation5 + $0x10] sm:$0x3] %vm2263, %v2258
          %v2265 = vld [vmem:[%s2250 + $0x1] sm:$0xff]
          %v2266 = vld [vmem:[%s2250 + $0x9] sm:$0x3]
          %2269 = vrot.lane.b32.xlu0 %v2265, 96
          %v2270 = vpop.permute.xlu0 %2269
          %2271 = vrot.lane.b32.xlu0 %v2266, 96
          %v2272 = vpop.permute.xlu0 %2271
          %vm2275 = vcmask 835328
          %2276 = vst.msk [vmem:[#allocation5] sm:$0xff] %vm2275, %v2270
          %vm2277 = vcmask 829184
          %2278 = vst.msk [vmem:[#allocation5 + $0x10] sm:$0x3] %vm2277, %v2272
          %v2279 = vld [vmem:[%s2250 + $0x2] sm:$0xff]
          %v2280 = vld [vmem:[%s2250 + $0xa] sm:$0x3]
          %2283 = vrot.lane.b32.xlu0 %v2279, 102
          %v2284 = vpop.permute.xlu0 %2283
          %2285 = vrot.lane.b32.xlu0 %v2280, 102
          %v2286 = vpop.permute.xlu0 %2285
          %vm2289 = vcmask 884528
          %2290 = vst.msk [vmem:[#allocation5] sm:$0xff] %vm2289, %v2284
          %vm2291 = vcmask 878384
          %2292 = vst.msk [vmem:[#allocation5 + $0x10] sm:$0x3] %vm2291, %v2286
          %v2293 = vld [vmem:[%s2250 + $0x3] sm:$0xff]
          %v2294 = vld [vmem:[%s2250 + $0xb] sm:$0x3]
          %2297 = vrot.lane.b32.xlu0 %v2293, 108
          %v2298 = vpop.permute.xlu0 %2297
          %2299 = vrot.lane.b32.xlu0 %v2294, 108
          %v2300 = vpop.permute.xlu0 %2299
          %vm2303 = vcmask 933728
          %2304 = vst.msk [vmem:[#allocation5] sm:$0xff] %vm2303, %v2298
          %vm2305 = vcmask 927584
          %2306 = vst.msk [vmem:[#allocation5 + $0x10] sm:$0x3] %vm2305, %v2300
          %v2307 = vld [vmem:[%s2250 + $0x4] sm:$0xff]
          %v2308 = vld [vmem:[%s2250 + $0xc] sm:$0x3]
          %2311 = vrot.lane.b32.xlu0 %v2307, 114
          %v2312 = vpop.permute.xlu0 %2311
          %2313 = vrot.lane.b32.xlu0 %v2308, 114
          %v2314 = vpop.permute.xlu0 %2313
          %vm2317 = vcmask 982928
          %2318 = vst.msk [vmem:[#allocation5] sm:$0xff] %vm2317, %v2312
          %vm2319 = vcmask 976784
          %2320 = vst.msk [vmem:[#allocation5 + $0x10] sm:$0x3] %vm2319, %v2314
          %s2321 = sadd.s32 %s2037, 4
          %s2322 = smul.u32 %s2321, 16
          %s2323 = scalar_lea.vmem [#allocation2], %s2322
          %v2324 = vld [vmem:[%s2323] sm:$0xff]
          %v2325 = vld [vmem:[%s2323 + $0x8] sm:$0x3]
          %2328 = vrot.lane.b32.xlu0 %v2324, 120
          %v2329 = vpop.permute.xlu0 %2328
          %2330 = vrot.lane.b32.xlu0 %v2325, 120
          %v2331 = vpop.permute.xlu0 %2330
          %vm2334 = vcmask 1032128
          %2335 = vst.msk [vmem:[#allocation5] sm:$0xff] %vm2334, %v2329
          %vm2336 = vcmask 1025984
          %2337 = vst.msk [vmem:[#allocation5 + $0x10] sm:$0x3] %vm2336, %v2331
          %v2338 = vld [vmem:[%s2323 + $0x1] sm:$0xff]
          %v2339 = vld [vmem:[%s2323 + $0x9] sm:$0x3]
          %2342 = vrot.lane.b32.xlu0 %v2338, 126
          %v2343 = vpop.permute.xlu0 %2342
          %2344 = vrot.lane.b32.xlu0 %v2339, 126
          %v2345 = vpop.permute.xlu0 %2344
          %vm2348 = vcmask 1048560
          %2349 = vst.msk [vmem:[#allocation5] sm:$0xff] %vm2348, %v2343
          %vm2350 = vcmask 31744
          %2351 = vst.msk [vmem:[#allocation5 + $0x8] sm:$0xff] %vm2350, %v2343
          %vm2352 = vcmask 1042416
          %2353 = vst.msk [vmem:[#allocation5 + $0x10] sm:$0x3] %vm2352, %v2345
          %vm2354 = vcmask 25600
          %2355 = vst.msk [vmem:[#allocation5 + $0x18] sm:$0x3] %vm2354, %v2345
          %v2356 = vld [vmem:[%s2323 + $0x2] sm:$0xff]
          %v2357 = vld [vmem:[%s2323 + $0xa] sm:$0x3]
          %2360 = vrot.lane.b32.xlu0 %v2356, 4
          %v2361 = vpop.permute.xlu0 %2360
          %2362 = vrot.lane.b32.xlu0 %v2357, 4
          %v2363 = vpop.permute.xlu0 %2362
          %vm2366 = vcmask 80928
          %2367 = vst.msk [vmem:[#allocation5 + $0x8] sm:$0xff] %vm2366, %v2361
          %vm2368 = vcmask 74784
          %2369 = vst.msk [vmem:[#allocation5 + $0x18] sm:$0x3] %vm2368, %v2363
          %v2370 = vld [vmem:[%s2323 + $0x3] sm:$0xff]
          %v2371 = vld [vmem:[%s2323 + $0xb] sm:$0x3]
          %2374 = vrot.lane.b32.xlu0 %v2370, 10
          %v2375 = vpop.permute.xlu0 %2374
          %2376 = vrot.lane.b32.xlu0 %v2371, 10
          %v2377 = vpop.permute.xlu0 %2376
          %vm2380 = vcmask 130128
          %2381 = vst.msk [vmem:[#allocation5 + $0x8] sm:$0xff] %vm2380, %v2375
          %vm2382 = vcmask 123984
          %2383 = vst.msk [vmem:[#allocation5 + $0x18] sm:$0x3] %vm2382, %v2377
          %v2384 = vld [vmem:[%s2323 + $0x4] sm:$0xff]
          %v2385 = vld [vmem:[%s2323 + $0xc] sm:$0x3]
          %2388 = vrot.lane.b32.xlu0 %v2384, 16
          %v2389 = vpop.permute.xlu0 %2388
          %2390 = vrot.lane.b32.xlu0 %v2385, 16
          %v2391 = vpop.permute.xlu0 %2390
          %vm2394 = vcmask 179328
          %2395 = vst.msk [vmem:[#allocation5 + $0x8] sm:$0xff] %vm2394, %v2389
          %vm2396 = vcmask 173184
          %2397 = vst.msk [vmem:[#allocation5 + $0x18] sm:$0x3] %vm2396, %v2391
          %v2398 = vld [vmem:[#allocation5] sm:$0xff]
          %v2399 = vld [vmem:[#allocation5 + $0x8] sm:$0xff]
          %v2400 = vld [vmem:[#allocation5 + $0x10] sm:$0x3]
          %v2401 = vld [vmem:[#allocation5 + $0x18] sm:$0x3]
          %v2402 = vpack.c.bf16 %v2400, %v2398
          %v2403 = vpack.c.bf16 %v2401, %v2399
          %v2405 = vlaneseq
          %v2406 = vshrl.u32 %v2405, 7
          %v2407 = vsub.s32 0, %v2406
          %v2408 = vrot.slane %v415, %v2407
          %v2429 = vunpack.c.l.b16 %v396
          %v2430 = vunpack.c.l.b16 %v397
          %v2431 = vunpack.c.l.b16 %v398
          %v2432 = vunpack.c.l.b16 %v399
          %v2433 = vunpack.c.l.b16 %v400
          %v2434 = vunpack.c.l.b16 %v401
          %v2435 = vunpack.c.l.b16 %v402
          %v2436 = vunpack.c.l.b16 %v403
          %v2437 = vunpack.c.l.b16 %v404
          %v2438 = vunpack.c.l.b16 %v405
          %v2439 = vunpack.c.l.b16 %v406
          %v2440 = vunpack.c.l.b16 %v407
          %v2441 = vunpack.c.l.b16 %v408
          %v2442 = vunpack.c.l.b16 %v409
          %v2443 = vunpack.c.l.b16 %v410
          %v2444 = vunpack.c.l.b16 %v411
          %v2445 = vunpack.c.l.b16 %v412
          %v2446 = vunpack.c.l.b16 %v413
          %v2447 = vunpack.c.l.b16 %v414
          %v2448 = vpack.c.b16 %v2430, %v2429
          %v2449 = vpack.c.b16 %v2432, %v2431
          %v2450 = vpack.c.b16 %v2434, %v2433
          %v2451 = vpack.c.b16 %v2436, %v2435
          %v2452 = vpack.c.b16 %v2438, %v2437
          %v2453 = vpack.c.b16 %v2440, %v2439
          %v2454 = vpack.c.b16 %v2442, %v2441
          %v2455 = vpack.c.b16 %v2444, %v2443
          %v2456 = vpack.c.b16 %v2446, %v2445
          %v2457 = vpack.c.b16 %v2447, %v2447
          %vm2467 = vcmask 179200
          %v2469 = vsel %vm2467, %v2403, 0
          %vm2471 = vcmask 1042432
          %v2473 = vsel %vm2471, %v2457, 0
          %2475 = vmatprep.subr.bf16.mxu0 0
          %2476 = vmatpush1.bf16.msra.mxu0 %v2448
          %2477 = vmatprep.subr.bf16.mxu0 0
          %2478 = vmatpush1.bf16.msra.mxu0 %v2449
          %2479 = vmatprep.subr.bf16.mxu0 0
          %2480 = vmatpush1.bf16.msra.mxu0 %v2450
          %2481 = vmatprep.subr.bf16.mxu0 0
          %2482 = vmatpush1.bf16.msra.mxu0 %v2451
          %2483 = vmatprep.subr.bf16.mxu0 0
          %2484 = vmatpush1.bf16.msra.mxu0 %v2452
          %2485 = vmatprep.subr.bf16.mxu0 0
          %2486 = vmatpush1.bf16.msra.mxu0 %v2453
          %2487 = vmatprep.subr.bf16.mxu0 0
          %2488 = vmatpush1.bf16.msra.mxu0 %v2454
          %2489 = vmatprep.subr.bf16.mxu0 0
          %2490 = vmatpush1.bf16.msra.mxu0 %v2455
          %2491 = vmatprep.subr.bf16.mxu0 0
          %2492 = vmatpush1.bf16.msra.mxu0 %v2456
          %2493 = vmatprep.subr.bf16.mxu0 0
          %2494 = vmatpush1.bf16.msra.mxu0 %v2473
          %2495 = vmatprep.subr.bf16.mxu0 0
          %2496 = vmatpush1.bf16.msra.mxu0 0
          %2497 = vmatprep.subr.bf16.mxu0 0
          %2498 = vmatpush1.bf16.msra.mxu0 0
          %2499 = vmatprep.subr.bf16.mxu0 0
          %2500 = vmatpush1.bf16.msra.mxu0 0
          %2501 = vmatprep.subr.bf16.mxu0 0
          %2502 = vmatpush1.bf16.msra.mxu0 0
          %2503 = vmatprep.subr.bf16.mxu0 0
          %2504 = vmatpush1.bf16.msra.mxu0 0
          %2505 = vmatprep.subr.bf16.mxu0 0
          %2506 = vmatpush1.bf16.msra.mxu0 0
          %2507 = vmatprep.mubr.bf16.mxu0 %v2469
          %2508 = vmatmul.mubr.bf16.gmra.mrb[0].mxu0 %v2402
          %v2509 = vpop.f32.mrb[0].mxu0
          %v2510 = vadd.f32 %v2408, %v2509
          %v2511 = vpop.f32.mrb[0].mxu0
          %v2512 = vpop.f32.mrb[0].mxu0
          %v2513 = vadd.f32 %v2408, %v2512
          %v2514 = vpop.f32.mrb[0].mxu0
          %2515 = vdwg.mxu0
          %v2516 = vmax.f32 %v2510, 0.0
          %v2517 = vmax.f32 %v2513, 0.0
          %v2518 = vld [vmem:[%s2104] sm:$0xff]
          %v2519 = vld [vmem:[%s2104 + $0x8] sm:$0x3]
          %2520 = vst.msk [vmem:[#allocation5] sm:$0xff] %vm2042, %v2518
          %2521 = vst.msk [vmem:[#allocation5 + $0x10] sm:$0x3] %vm2044, %v2519
          %v2522 = vld [vmem:[%s2104 + $0x1] sm:$0xff]
          %v2523 = vld [vmem:[%s2104 + $0x9] sm:$0x3]
          %2526 = vrot.lane.b32.xlu0 %v2522, 6
          %v2527 = vpop.permute.xlu0 %2526
          %2528 = vrot.lane.b32.xlu0 %v2523, 6
          %v2529 = vpop.permute.xlu0 %2528
          %2532 = vst.msk [vmem:[#allocation5] sm:$0xff] %vm2056, %v2527
          %2533 = vst.msk [vmem:[#allocation5 + $0x10] sm:$0x3] %vm2058, %v2529
          %v2534 = vld [vmem:[%s2104 + $0x2] sm:$0xff]
          %v2535 = vld [vmem:[%s2104 + $0xa] sm:$0x3]
          %2538 = vrot.lane.b32.xlu0 %v2534, 12
          %v2539 = vpop.permute.xlu0 %2538
          %2540 = vrot.lane.b32.xlu0 %v2535, 12
          %v2541 = vpop.permute.xlu0 %2540
          %2544 = vst.msk [vmem:[#allocation5] sm:$0xff] %vm2070, %v2539
          %2545 = vst.msk [vmem:[#allocation5 + $0x10] sm:$0x3] %vm2072, %v2541
          %v2546 = vld [vmem:[%s2104 + $0x3] sm:$0xff]
          %v2547 = vld [vmem:[%s2104 + $0xb] sm:$0x3]
          %2550 = vrot.lane.b32.xlu0 %v2546, 18
          %v2551 = vpop.permute.xlu0 %2550
          %2552 = vrot.lane.b32.xlu0 %v2547, 18
          %v2553 = vpop.permute.xlu0 %2552
          %2556 = vst.msk [vmem:[#allocation5] sm:$0xff] %vm2084, %v2551
          %2557 = vst.msk [vmem:[#allocation5 + $0x10] sm:$0x3] %vm2086, %v2553
          %v2558 = vld [vmem:[%s2104 + $0x4] sm:$0xff]
          %v2559 = vld [vmem:[%s2104 + $0xc] sm:$0x3]
          %2562 = vrot.lane.b32.xlu0 %v2558, 24
          %v2563 = vpop.permute.xlu0 %2562
          %2564 = vrot.lane.b32.xlu0 %v2559, 24
          %v2565 = vpop.permute.xlu0 %2564
          %2568 = vst.msk [vmem:[#allocation5] sm:$0xff] %vm2098, %v2563
          %2569 = vst.msk [vmem:[#allocation5 + $0x10] sm:$0x3] %vm2100, %v2565
          %v2570 = vld [vmem:[%s2177] sm:$0xff]
          %v2571 = vld [vmem:[%s2177 + $0x8] sm:$0x3]
          %2574 = vrot.lane.b32.xlu0 %v2570, 30
          %v2575 = vpop.permute.xlu0 %2574
          %2576 = vrot.lane.b32.xlu0 %v2571, 30
          %v2577 = vpop.permute.xlu0 %2576
          %2580 = vst.msk [vmem:[#allocation5] sm:$0xff] %vm2115, %v2575
          %2581 = vst.msk [vmem:[#allocation5 + $0x10] sm:$0x3] %vm2117, %v2577
          %v2582 = vld [vmem:[%s2177 + $0x1] sm:$0xff]
          %v2583 = vld [vmem:[%s2177 + $0x9] sm:$0x3]
          %2586 = vrot.lane.b32.xlu0 %v2582, 36
          %v2587 = vpop.permute.xlu0 %2586
          %2588 = vrot.lane.b32.xlu0 %v2583, 36
          %v2589 = vpop.permute.xlu0 %2588
          %2592 = vst.msk [vmem:[#allocation5] sm:$0xff] %vm2129, %v2587
          %2593 = vst.msk [vmem:[#allocation5 + $0x10] sm:$0x3] %vm2131, %v2589
          %v2594 = vld [vmem:[%s2177 + $0x2] sm:$0xff]
          %v2595 = vld [vmem:[%s2177 + $0xa] sm:$0x3]
          %2598 = vrot.lane.b32.xlu0 %v2594, 42
          %v2599 = vpop.permute.xlu0 %2598
          %2600 = vrot.lane.b32.xlu0 %v2595, 42
          %v2601 = vpop.permute.xlu0 %2600
          %2604 = vst.msk [vmem:[#allocation5] sm:$0xff] %vm2143, %v2599
          %2605 = vst.msk [vmem:[#allocation5 + $0x10] sm:$0x3] %vm2145, %v2601
          %v2606 = vld [vmem:[%s2177 + $0x3] sm:$0xff]
          %v2607 = vld [vmem:[%s2177 + $0xb] sm:$0x3]
          %2610 = vrot.lane.b32.xlu0 %v2606, 48
          %v2611 = vpop.permute.xlu0 %2610
          %2612 = vrot.lane.b32.xlu0 %v2607, 48
          %v2613 = vpop.permute.xlu0 %2612
          %2616 = vst.msk [vmem:[#allocation5] sm:$0xff] %vm2157, %v2611
          %2617 = vst.msk [vmem:[#allocation5 + $0x10] sm:$0x3] %vm2159, %v2613
          %v2618 = vld [vmem:[%s2177 + $0x4] sm:$0xff]
          %v2619 = vld [vmem:[%s2177 + $0xc] sm:$0x3]
          %2622 = vrot.lane.b32.xlu0 %v2618, 54
          %v2623 = vpop.permute.xlu0 %2622
          %2624 = vrot.lane.b32.xlu0 %v2619, 54
          %v2625 = vpop.permute.xlu0 %2624
          %2628 = vst.msk [vmem:[#allocation5] sm:$0xff] %vm2171, %v2623
          %2629 = vst.msk [vmem:[#allocation5 + $0x10] sm:$0x3] %vm2173, %v2625
          %v2630 = vld [vmem:[%s2250] sm:$0xff]
          %v2631 = vld [vmem:[%s2250 + $0x8] sm:$0x3]
          %2634 = vrot.lane.b32.xlu0 %v2630, 60
          %v2635 = vpop.permute.xlu0 %2634
          %2636 = vrot.lane.b32.xlu0 %v2631, 60
          %v2637 = vpop.permute.xlu0 %2636
          %2640 = vst.msk [vmem:[#allocation5] sm:$0xff] %vm2188, %v2635
          %2641 = vst.msk [vmem:[#allocation5 + $0x10] sm:$0x3] %vm2190, %v2637
          %v2642 = vld [vmem:[%s2250 + $0x1] sm:$0xff]
          %v2643 = vld [vmem:[%s2250 + $0x9] sm:$0x3]
          %2646 = vrot.lane.b32.xlu0 %v2642, 66
          %v2647 = vpop.permute.xlu0 %2646
          %2648 = vrot.lane.b32.xlu0 %v2643, 66
          %v2649 = vpop.permute.xlu0 %2648
          %2652 = vst.msk [vmem:[#allocation5] sm:$0xff] %vm2202, %v2647
          %2653 = vst.msk [vmem:[#allocation5 + $0x10] sm:$0x3] %vm2204, %v2649
          %v2654 = vld [vmem:[%s2250 + $0x2] sm:$0xff]
          %v2655 = vld [vmem:[%s2250 + $0xa] sm:$0x3]
          %2658 = vrot.lane.b32.xlu0 %v2654, 72
          %v2659 = vpop.permute.xlu0 %2658
          %2660 = vrot.lane.b32.xlu0 %v2655, 72
          %v2661 = vpop.permute.xlu0 %2660
          %2664 = vst.msk [vmem:[#allocation5] sm:$0xff] %vm2216, %v2659
          %2665 = vst.msk [vmem:[#allocation5 + $0x10] sm:$0x3] %vm2218, %v2661
          %v2666 = vld [vmem:[%s2250 + $0x3] sm:$0xff]
          %v2667 = vld [vmem:[%s2250 + $0xb] sm:$0x3]
          %2670 = vrot.lane.b32.xlu0 %v2666, 78
          %v2671 = vpop.permute.xlu0 %2670
          %2672 = vrot.lane.b32.xlu0 %v2667, 78
          %v2673 = vpop.permute.xlu0 %2672
          %2676 = vst.msk [vmem:[#allocation5] sm:$0xff] %vm2230, %v2671
          %2677 = vst.msk [vmem:[#allocation5 + $0x10] sm:$0x3] %vm2232, %v2673
          %v2678 = vld [vmem:[%s2250 + $0x4] sm:$0xff]
          %v2679 = vld [vmem:[%s2250 + $0xc] sm:$0x3]
          %2682 = vrot.lane.b32.xlu0 %v2678, 84
          %v2683 = vpop.permute.xlu0 %2682
          %2684 = vrot.lane.b32.xlu0 %v2679, 84
          %v2685 = vpop.permute.xlu0 %2684
          %2688 = vst.msk [vmem:[#allocation5] sm:$0xff] %vm2244, %v2683
          %2689 = vst.msk [vmem:[#allocation5 + $0x10] sm:$0x3] %vm2246, %v2685
          %v2690 = vld [vmem:[%s2323] sm:$0xff]
          %v2691 = vld [vmem:[%s2323 + $0x8] sm:$0x3]
          %2694 = vrot.lane.b32.xlu0 %v2690, 90
          %v2695 = vpop.permute.xlu0 %2694
          %2696 = vrot.lane.b32.xlu0 %v2691, 90
          %v2697 = vpop.permute.xlu0 %2696
          %2700 = vst.msk [vmem:[#allocation5] sm:$0xff] %vm2261, %v2695
          %2701 = vst.msk [vmem:[#allocation5 + $0x10] sm:$0x3] %vm2263, %v2697
          %v2702 = vld [vmem:[%s2323 + $0x1] sm:$0xff]
          %v2703 = vld [vmem:[%s2323 + $0x9] sm:$0x3]
          %2706 = vrot.lane.b32.xlu0 %v2702, 96
          %v2707 = vpop.permute.xlu0 %2706
          %2708 = vrot.lane.b32.xlu0 %v2703, 96
          %v2709 = vpop.permute.xlu0 %2708
          %2712 = vst.msk [vmem:[#allocation5] sm:$0xff] %vm2275, %v2707
          %2713 = vst.msk [vmem:[#allocation5 + $0x10] sm:$0x3] %vm2277, %v2709
          %v2714 = vld [vmem:[%s2323 + $0x2] sm:$0xff]
          %v2715 = vld [vmem:[%s2323 + $0xa] sm:$0x3]
          %2718 = vrot.lane.b32.xlu0 %v2714, 102
          %v2719 = vpop.permute.xlu0 %2718
          %2720 = vrot.lane.b32.xlu0 %v2715, 102
          %v2721 = vpop.permute.xlu0 %2720
          %2724 = vst.msk [vmem:[#allocation5] sm:$0xff] %vm2289, %v2719
          %2725 = vst.msk [vmem:[#allocation5 + $0x10] sm:$0x3] %vm2291, %v2721
          %v2726 = vld [vmem:[%s2323 + $0x3] sm:$0xff]
          %v2727 = vld [vmem:[%s2323 + $0xb] sm:$0x3]
          %2730 = vrot.lane.b32.xlu0 %v2726, 108
          %v2731 = vpop.permute.xlu0 %2730
          %2732 = vrot.lane.b32.xlu0 %v2727, 108
          %v2733 = vpop.permute.xlu0 %2732
          %2736 = vst.msk [vmem:[#allocation5] sm:$0xff] %vm2303, %v2731
          %2737 = vst.msk [vmem:[#allocation5 + $0x10] sm:$0x3] %vm2305, %v2733
          %v2738 = vld [vmem:[%s2323 + $0x4] sm:$0xff]
          %v2739 = vld [vmem:[%s2323 + $0xc] sm:$0x3]
          %2742 = vrot.lane.b32.xlu0 %v2738, 114
          %v2743 = vpop.permute.xlu0 %2742
          %2744 = vrot.lane.b32.xlu0 %v2739, 114
          %v2745 = vpop.permute.xlu0 %2744
          %2748 = vst.msk [vmem:[#allocation5] sm:$0xff] %vm2317, %v2743
          %2749 = vst.msk [vmem:[#allocation5 + $0x10] sm:$0x3] %vm2319, %v2745
          %s2750 = sadd.s32 %s2037, 5
          %s2751 = smul.u32 %s2750, 16
          %s2752 = scalar_lea.vmem [#allocation2], %s2751
          %v2753 = vld [vmem:[%s2752] sm:$0xff]
          %v2754 = vld [vmem:[%s2752 + $0x8] sm:$0x3]
          %2757 = vrot.lane.b32.xlu0 %v2753, 120
          %v2758 = vpop.permute.xlu0 %2757
          %2759 = vrot.lane.b32.xlu0 %v2754, 120
          %v2760 = vpop.permute.xlu0 %2759
          %2763 = vst.msk [vmem:[#allocation5] sm:$0xff] %vm2334, %v2758
          %2764 = vst.msk [vmem:[#allocation5 + $0x10] sm:$0x3] %vm2336, %v2760
          %v2765 = vld [vmem:[%s2752 + $0x1] sm:$0xff]
          %v2766 = vld [vmem:[%s2752 + $0x9] sm:$0x3]
          %2769 = vrot.lane.b32.xlu0 %v2765, 126
          %v2770 = vpop.permute.xlu0 %2769
          %2771 = vrot.lane.b32.xlu0 %v2766, 126
          %v2772 = vpop.permute.xlu0 %2771
          %2775 = vst.msk [vmem:[#allocation5] sm:$0xff] %vm2348, %v2770
          %2776 = vst.msk [vmem:[#allocation5 + $0x8] sm:$0xff] %vm2350, %v2770
          %2777 = vst.msk [vmem:[#allocation5 + $0x10] sm:$0x3] %vm2352, %v2772
          %2778 = vst.msk [vmem:[#allocation5 + $0x18] sm:$0x3] %vm2354, %v2772
          %v2779 = vld [vmem:[%s2752 + $0x2] sm:$0xff]
          %v2780 = vld [vmem:[%s2752 + $0xa] sm:$0x3]
          %2783 = vrot.lane.b32.xlu0 %v2779, 4
          %v2784 = vpop.permute.xlu0 %2783
          %2785 = vrot.lane.b32.xlu0 %v2780, 4
          %v2786 = vpop.permute.xlu0 %2785
          %2789 = vst.msk [vmem:[#allocation5 + $0x8] sm:$0xff] %vm2366, %v2784
          %2790 = vst.msk [vmem:[#allocation5 + $0x18] sm:$0x3] %vm2368, %v2786
          %v2791 = vld [vmem:[%s2752 + $0x3] sm:$0xff]
          %v2792 = vld [vmem:[%s2752 + $0xb] sm:$0x3]
          %2795 = vrot.lane.b32.xlu0 %v2791, 10
          %v2796 = vpop.permute.xlu0 %2795
          %2797 = vrot.lane.b32.xlu0 %v2792, 10
          %v2798 = vpop.permute.xlu0 %2797
          %2801 = vst.msk [vmem:[#allocation5 + $0x8] sm:$0xff] %vm2380, %v2796
          %2802 = vst.msk [vmem:[#allocation5 + $0x18] sm:$0x3] %vm2382, %v2798
          %v2803 = vld [vmem:[%s2752 + $0x4] sm:$0xff]
          %v2804 = vld [vmem:[%s2752 + $0xc] sm:$0x3]
          %2807 = vrot.lane.b32.xlu0 %v2803, 16
          %v2808 = vpop.permute.xlu0 %2807
          %2809 = vrot.lane.b32.xlu0 %v2804, 16
          %v2810 = vpop.permute.xlu0 %2809
          %2813 = vst.msk [vmem:[#allocation5 + $0x8] sm:$0xff] %vm2394, %v2808
          %2814 = vst.msk [vmem:[#allocation5 + $0x18] sm:$0x3] %vm2396, %v2810
          %v2815 = vld [vmem:[#allocation5] sm:$0xff]
          %v2816 = vld [vmem:[#allocation5 + $0x8] sm:$0xff]
          %v2817 = vld [vmem:[#allocation5 + $0x10] sm:$0x3]
          %v2818 = vld [vmem:[#allocation5 + $0x18] sm:$0x3]
          %v2819 = vpack.c.bf16 %v2817, %v2815
          %v2820 = vpack.c.bf16 %v2818, %v2816
          %v2822 = vsel %vm2467, %v2820, 0
          %2824 = vmatprep.subr.bf16.mxu0 0
          %2825 = vmatpush1.bf16.msra.mxu0 %v2448
          %2826 = vmatprep.subr.bf16.mxu0 0
          %2827 = vmatpush1.bf16.msra.mxu0 %v2449
          %2828 = vmatprep.subr.bf16.mxu0 0
          %2829 = vmatpush1.bf16.msra.mxu0 %v2450
          %2830 = vmatprep.subr.bf16.mxu0 0
          %2831 = vmatpush1.bf16.msra.mxu0 %v2451
          %2832 = vmatprep.subr.bf16.mxu0 0
          %2833 = vmatpush1.bf16.msra.mxu0 %v2452
          %2834 = vmatprep.subr.bf16.mxu0 0
          %2835 = vmatpush1.bf16.msra.mxu0 %v2453
          %2836 = vmatprep.subr.bf16.mxu0 0
          %2837 = vmatpush1.bf16.msra.mxu0 %v2454
          %2838 = vmatprep.subr.bf16.mxu0 0
          %2839 = vmatpush1.bf16.msra.mxu0 %v2455
          %2840 = vmatprep.subr.bf16.mxu0 0
          %2841 = vmatpush1.bf16.msra.mxu0 %v2456
          %2842 = vmatprep.subr.bf16.mxu0 0
          %2843 = vmatpush1.bf16.msra.mxu0 %v2473
          %2844 = vmatprep.subr.bf16.mxu0 0
          %2845 = vmatpush1.bf16.msra.mxu0 0
          %2846 = vmatprep.subr.bf16.mxu0 0
          %2847 = vmatpush1.bf16.msra.mxu0 0
          %2848 = vmatprep.subr.bf16.mxu0 0
          %2849 = vmatpush1.bf16.msra.mxu0 0
          %2850 = vmatprep.subr.bf16.mxu0 0
          %2851 = vmatpush1.bf16.msra.mxu0 0
          %2852 = vmatprep.subr.bf16.mxu0 0
          %2853 = vmatpush1.bf16.msra.mxu0 0
          %2854 = vmatprep.subr.bf16.mxu0 0
          %2855 = vmatpush1.bf16.msra.mxu0 0
          %2856 = vmatprep.mubr.bf16.mxu0 %v2822
          %2857 = vmatmul.mubr.bf16.gmra.mrb[0].mxu0 %v2819
          %v2858 = vpop.f32.mrb[0].mxu0
          %v2859 = vadd.f32 %v2408, %v2858
          %v2860 = vpop.f32.mrb[0].mxu0
          %v2861 = vpop.f32.mrb[0].mxu0
          %v2862 = vadd.f32 %v2408, %v2861
          %v2863 = vpop.f32.mrb[0].mxu0
          %2864 = vdwg.mxu0
          %v2865 = vmax.f32 %v2859, 0.0
          %v2866 = vmax.f32 %v2862, 0.0
          %v2867 = vmax.f32 %v2516, %v2865
          %v2868 = vmax.f32 %v2517, %v2866
          %vm2869 = vcmask 80896
          %v2871 = vsel %vm2869, %v427, 0
          %vm2873 = vcmask 1041408
          %v2875 = vsel %vm2873, %v2868, 0
          %2877 = vmatprep.subr.mxu0 0.0
          %2878 = vmatpush1.msra.mxu0 %v2867
          %2879 = vmatprep.subr.mxu0 0.0
          %2880 = vmatpush1.msra.mxu0 %v2875
          %2881 = vmatprep.subr.mxu0 0.0
          %2882 = vmatpush1.msra.mxu0 0.0
          %2883 = vmatprep.subr.mxu0 0.0
          %2884 = vmatpush1.msra.mxu0 0.0
          %2885 = vmatprep.subr.mxu0 0.0
          %2886 = vmatpush1.msra.mxu0 0.0
          %2887 = vmatprep.subr.mxu0 0.0
          %2888 = vmatpush1.msra.mxu0 0.0
          %2889 = vmatprep.subr.mxu0 0.0
          %2890 = vmatpush1.msra.mxu0 0.0
          %2891 = vmatprep.subr.mxu0 0.0
          %2892 = vmatpush1.msra.mxu0 0.0
          %2893 = vmatprep.subr.mxu0 0.0
          %2894 = vmatpush1.msra.mxu0 0.0
          %2895 = vmatprep.subr.mxu0 0.0
          %2896 = vmatpush1.msra.mxu0 0.0
          %2897 = vmatprep.subr.mxu0 0.0
          %2898 = vmatpush1.msra.mxu0 0.0
          %2899 = vmatprep.subr.mxu0 0.0
          %2900 = vmatpush1.msra.mxu0 0.0
          %2901 = vmatprep.subr.mxu0 0.0
          %2902 = vmatpush1.msra.mxu0 0.0
          %2903 = vmatprep.subr.mxu0 0.0
          %2904 = vmatpush1.msra.mxu0 0.0
          %2905 = vmatprep.subr.mxu0 0.0
          %2906 = vmatpush1.msra.mxu0 0.0
          %2907 = vmatprep.subr.mxu0 0.0
          %2908 = vmatpush1.msra.mxu0 0.0
          %2909 = vmatprep.subr.mxu0 0.0
          %2910 = vmatpush1.msra.mxu0 0.0
          %2911 = vmatprep.subr.mxu0 0.0
          %2912 = vmatpush1.msra.mxu0 0.0
          %2913 = vmatprep.subr.mxu0 0.0
          %2914 = vmatpush1.msra.mxu0 0.0
          %2915 = vmatprep.subr.mxu0 0.0
          %2916 = vmatpush1.msra.mxu0 0.0
          %2917 = vmatprep.subr.mxu0 0.0
          %2918 = vmatpush1.msra.mxu0 0.0
          %2919 = vmatprep.subr.mxu0 0.0
          %2920 = vmatpush1.msra.mxu0 0.0
          %2921 = vmatprep.subr.mxu0 0.0
          %2922 = vmatpush1.msra.mxu0 0.0
          %2923 = vmatprep.subr.mxu0 0.0
          %2924 = vmatpush1.msra.mxu0 0.0
          %2925 = vmatprep.subr.mxu0 0.0
          %2926 = vmatpush1.msra.mxu0 0.0
          %2927 = vmatprep.subr.mxu0 0.0
          %2928 = vmatpush1.msra.mxu0 0.0
          %2929 = vmatprep.subr.mxu0 0.0
          %2930 = vmatpush1.msra.mxu0 0.0
          %2931 = vmatprep.subr.mxu0 0.0
          %2932 = vmatpush1.msra.mxu0 0.0
          %2933 = vmatprep.subr.mxu0 0.0
          %2934 = vmatpush1.msra.mxu0 0.0
          %2935 = vmatprep.subr.mxu0 0.0
          %2936 = vmatpush1.msra.mxu0 0.0
          %2937 = vmatprep.subr.mxu0 0.0
          %2938 = vmatpush1.msra.mxu0 0.0
          %2939 = vmatprep.subr.mxu0 0.0
          %2940 = vmatpush1.msra.mxu0 0.0
          %2941 = vmatprep.mubr.f32.mxu0 0.0
          %2942 = vmatmul.mubr.f32.gmra.mrb[0].mxu0 %v2871
          %v2943 = vpop.f32.mrb[0].mxu0
          %v2944 = vadd.f32 0.0, %v2943
          %v2945 = vpop.f32.mrb[0].mxu0
          %2946 = vdwg.mxu0
          %v2948 = vsel %vm2869, %v435, 0
          %2950 = vmatprep.subr.mxu0 0.0
          %2951 = vmatpush1.msra.mxu0 %v2867
          %2952 = vmatprep.subr.mxu0 0.0
          %2953 = vmatpush1.msra.mxu0 %v2875
          %2954 = vmatprep.subr.mxu0 0.0
          %2955 = vmatpush1.msra.mxu0 0.0
          %2956 = vmatprep.subr.mxu0 0.0
          %2957 = vmatpush1.msra.mxu0 0.0
          %2958 = vmatprep.subr.mxu0 0.0
          %2959 = vmatpush1.msra.mxu0 0.0
          %2960 = vmatprep.subr.mxu0 0.0
          %2961 = vmatpush1.msra.mxu0 0.0
          %2962 = vmatprep.subr.mxu0 0.0
          %2963 = vmatpush1.msra.mxu0 0.0
          %2964 = vmatprep.subr.mxu0 0.0
          %2965 = vmatpush1.msra.mxu0 0.0
          %2966 = vmatprep.subr.mxu0 0.0
          %2967 = vmatpush1.msra.mxu0 0.0
          %2968 = vmatprep.subr.mxu0 0.0
          %2969 = vmatpush1.msra.mxu0 0.0
          %2970 = vmatprep.subr.mxu0 0.0
          %2971 = vmatpush1.msra.mxu0 0.0
          %2972 = vmatprep.subr.mxu0 0.0
          %2973 = vmatpush1.msra.mxu0 0.0
          %2974 = vmatprep.subr.mxu0 0.0
          %2975 = vmatpush1.msra.mxu0 0.0
          %2976 = vmatprep.subr.mxu0 0.0
          %2977 = vmatpush1.msra.mxu0 0.0
          %2978 = vmatprep.subr.mxu0 0.0
          %2979 = vmatpush1.msra.mxu0 0.0
          %2980 = vmatprep.subr.mxu0 0.0
          %2981 = vmatpush1.msra.mxu0 0.0
          %2982 = vmatprep.subr.mxu0 0.0
          %2983 = vmatpush1.msra.mxu0 0.0
          %2984 = vmatprep.subr.mxu0 0.0
          %2985 = vmatpush1.msra.mxu0 0.0
          %2986 = vmatprep.subr.mxu0 0.0
          %2987 = vmatpush1.msra.mxu0 0.0
          %2988 = vmatprep.subr.mxu0 0.0
          %2989 = vmatpush1.msra.mxu0 0.0
          %2990 = vmatprep.subr.mxu0 0.0
          %2991 = vmatpush1.msra.mxu0 0.0
          %2992 = vmatprep.subr.mxu0 0.0
          %2993 = vmatpush1.msra.mxu0 0.0
          %2994 = vmatprep.subr.mxu0 0.0
          %2995 = vmatpush1.msra.mxu0 0.0
          %2996 = vmatprep.subr.mxu0 0.0
          %2997 = vmatpush1.msra.mxu0 0.0
          %2998 = vmatprep.subr.mxu0 0.0
          %2999 = vmatpush1.msra.mxu0 0.0
          %3000 = vmatprep.subr.mxu0 0.0
          %3001 = vmatpush1.msra.mxu0 0.0
          %3002 = vmatprep.subr.mxu0 0.0
          %3003 = vmatpush1.msra.mxu0 0.0
          %3004 = vmatprep.subr.mxu0 0.0
          %3005 = vmatpush1.msra.mxu0 0.0
          %3006 = vmatprep.subr.mxu0 0.0
          %3007 = vmatpush1.msra.mxu0 0.0
          %3008 = vmatprep.subr.mxu0 0.0
          %3009 = vmatpush1.msra.mxu0 0.0
          %3010 = vmatprep.subr.mxu0 0.0
          %3011 = vmatpush1.msra.mxu0 0.0
          %3012 = vmatprep.subr.mxu0 0.0
          %3013 = vmatpush1.msra.mxu0 0.0
          %3014 = vmatprep.mubr.f32.mxu0 0.0
          %3015 = vmatmul.mubr.f32.gmra.mrb[0].mxu0 %v2948
          %v3016 = vpop.f32.mrb[0].mxu0
          %v3017 = vadd.f32 0.0, %v3016
          %v3018 = vpop.f32.mrb[0].mxu0
          %3019 = vdwg.mxu0
          %v3020 = vmax.f32 %v2944, %v3017
          %s3021 = smul.u32 %s2032, 8
          %s3022 = scalar_lea.vmem [#allocation3], %s3021
          %vm3023 = vcmask 126976
          %3024 = vst.msk [vmem:[%s3022] sm:$0x1f] %vm3023, %v3020
        $region76: #{lenet_forward.1} parent=63 // loop_footer
          %s2036 = sadd.s32 1, %s2032
        $region77: #{lenet_forward.1} parent=63 // loop_footer_branch
          %2031 = sbr.rel target = $region73
        $region78: #{lenet_forward.1} parent=63 // loop_exit
          _
        %v3025 = vld [vmem:[#allocation3] sm:$0x1]
        %v3026 = vlaneseq
        %vm3027 = vcmp.ge.s32.totalorder %v3026, 0
        %vm3028 = vcmp.lt.s32.totalorder %v3026, 16
        %vm3029 = vmand %vm3027, %vm3028
        %3030 = vst.msk [vmem:[#allocation6] sm:$0x1] %vm3029, %v3025
        %v3031 = vld [vmem:[#allocation3 + $0x1] sm:$0x1]
        %v3034 = vunpack.c.l.s4 1966171168
        %v3035 = vunpack.c.0.s8 %v3034
        %v3036 = vlaneseq
        %v3037 = vshrl.u32 %v3036, 7
        %v3038 = vsub.s32 %v3035, %v3037
        %v3039 = vrot.slane %v3031, %v3038
        %v3041 = vunpack.c.l.s4 1966171168
        %v3042 = vunpack.c.0.s8 %v3041
        %v3043 = vlaneseq
        %v3044 = vshrl.u32 %v3043, 7
        %v3045 = vsub.s32 %v3042, %v3044
        %v3046 = vrot.slane %v3039, %v3045
        %3047 = vrot.lane.b32.xlu0 %v3046, 16
        %v3048 = vpop.permute.xlu0 %3047
        %vm3050 = vcmp.ge.s32.totalorder %v3026, 16
        %vm3051 = vcmp.lt.s32.totalorder %v3026, 32
        %vm3052 = vmand %vm3050, %vm3051
        %3053 = vst.msk [vmem:[#allocation6] sm:$0x1] %vm3052, %v3048
        %v3054 = vld [vmem:[#allocation3 + $0x2] sm:$0x1]
        %v3057 = vunpack.c.l.s4 1966171168
        %v3058 = vunpack.c.0.s8 %v3057
        %v3059 = vlaneseq
        %v3060 = vshrl.u32 %v3059, 7
        %v3061 = vsub.s32 %v3058, %v3060
        %v3062 = vrot.slane %v3054, %v3061
        %v3064 = vunpack.c.l.s4 1966171168
        %v3065 = vunpack.c.0.s8 %v3064
        %v3066 = vlaneseq
        %v3067 = vshrl.u32 %v3066, 7
        %v3068 = vsub.s32 %v3065, %v3067
        %v3069 = vrot.slane %v3062, %v3068
        %3070 = vrot.lane.b32.xlu0 %v3069, 32
        %v3071 = vpop.permute.xlu0 %3070
        %vm3073 = vcmp.ge.s32.totalorder %v3026, 32
        %vm3074 = vcmp.lt.s32.totalorder %v3026, 48
        %vm3075 = vmand %vm3073, %vm3074
        %3076 = vst.msk [vmem:[#allocation6] sm:$0x1] %vm3075, %v3071
        %v3077 = vld [vmem:[#allocation3 + $0x3] sm:$0x1]
        %v3080 = vunpack.c.l.s4 1966171168
        %v3081 = vunpack.c.0.s8 %v3080
        %v3082 = vlaneseq
        %v3083 = vshrl.u32 %v3082, 7
        %v3084 = vsub.s32 %v3081, %v3083
        %v3085 = vrot.slane %v3077, %v3084
        %v3087 = vunpack.c.l.s4 1966171168
        %v3088 = vunpack.c.0.s8 %v3087
        %v3089 = vlaneseq
        %v3090 = vshrl.u32 %v3089, 7
        %v3091 = vsub.s32 %v3088, %v3090
        %v3092 = vrot.slane %v3085, %v3091
        %3093 = vrot.lane.b32.xlu0 %v3092, 48
        %v3094 = vpop.permute.xlu0 %3093
        %vm3096 = vcmp.ge.s32.totalorder %v3026, 48
        %vm3097 = vcmp.lt.s32.totalorder %v3026, 64
        %vm3098 = vmand %vm3096, %vm3097
        %3099 = vst.msk [vmem:[#allocation6] sm:$0x1] %vm3098, %v3094
        %v3100 = vld [vmem:[#allocation3 + $0x4] sm:$0x1]
        %v3103 = vunpack.c.l.s4 1966171168
        %v3104 = vunpack.c.0.s8 %v3103
        %v3105 = vlaneseq
        %v3106 = vshrl.u32 %v3105, 7
        %v3107 = vsub.s32 %v3104, %v3106
        %v3108 = vrot.slane %v3100, %v3107
        %v3110 = vunpack.c.l.s4 1966171168
        %v3111 = vunpack.c.0.s8 %v3110
        %v3112 = vlaneseq
        %v3113 = vshrl.u32 %v3112, 7
        %v3114 = vsub.s32 %v3111, %v3113
        %v3115 = vrot.slane %v3108, %v3114
        %3116 = vrot.lane.b32.xlu0 %v3115, 64
        %v3117 = vpop.permute.xlu0 %3116
        %vm3119 = vcmp.ge.s32.totalorder %v3026, 64
        %vm3120 = vcmp.lt.s32.totalorder %v3026, 80
        %vm3121 = vmand %vm3119, %vm3120
        %3122 = vst.msk [vmem:[#allocation6] sm:$0x1] %vm3121, %v3117
        %s3123 = scalar_lea.vmem [#allocation3], 8
        %v3124 = vld [vmem:[%s3123] sm:$0x1]
        %v3127 = vunpack.c.l.s4 1966171168
        %v3128 = vunpack.c.0.s8 %v3127
        %v3129 = vlaneseq
        %v3130 = vshrl.u32 %v3129, 7
        %v3131 = vsub.s32 %v3128, %v3130
        %v3132 = vrot.slane %v3124, %v3131
        %v3134 = vunpack.c.l.s4 1966171168
        %v3135 = vunpack.c.0.s8 %v3134
        %v3136 = vlaneseq
        %v3137 = vshrl.u32 %v3136, 7
        %v3138 = vsub.s32 %v3135, %v3137
        %v3139 = vrot.slane %v3132, %v3138
        %3140 = vrot.lane.b32.xlu0 %v3139, 80
        %v3141 = vpop.permute.xlu0 %3140
        %vm3143 = vcmp.ge.s32.totalorder %v3026, 80
        %vm3144 = vcmp.lt.s32.totalorder %v3026, 96
        %vm3145 = vmand %vm3143, %vm3144
        %3146 = vst.msk [vmem:[#allocation6] sm:$0x1] %vm3145, %v3141
        %v3147 = vld [vmem:[%s3123 + $0x1] sm:$0x1]
        %v3150 = vunpack.c.l.s4 1966171168
        %v3151 = vunpack.c.0.s8 %v3150
        %v3152 = vlaneseq
        %v3153 = vshrl.u32 %v3152, 7
        %v3154 = vsub.s32 %v3151, %v3153
        %v3155 = vrot.slane %v3147, %v3154
        %v3157 = vunpack.c.l.s4 1966171168
        %v3158 = vunpack.c.0.s8 %v3157
        %v3159 = vlaneseq
        %v3160 = vshrl.u32 %v3159, 7
        %v3161 = vsub.s32 %v3158, %v3160
        %v3162 = vrot.slane %v3155, %v3161
        %3163 = vrot.lane.b32.xlu0 %v3162, 96
        %v3164 = vpop.permute.xlu0 %3163
        %vm3166 = vcmp.ge.s32.totalorder %v3026, 96
        %vm3167 = vcmp.lt.s32.totalorder %v3026, 112
        %vm3168 = vmand %vm3166, %vm3167
        %3169 = vst.msk [vmem:[#allocation6] sm:$0x1] %vm3168, %v3164
        %v3170 = vld [vmem:[%s3123 + $0x2] sm:$0x1]
        %v3173 = vunpack.c.l.s4 1966171168
        %v3174 = vunpack.c.0.s8 %v3173
        %v3175 = vlaneseq
        %v3176 = vshrl.u32 %v3175, 7
        %v3177 = vsub.s32 %v3174, %v3176
        %v3178 = vrot.slane %v3170, %v3177
        %v3180 = vunpack.c.l.s4 1966171168
        %v3181 = vunpack.c.0.s8 %v3180
        %v3182 = vlaneseq
        %v3183 = vshrl.u32 %v3182, 7
        %v3184 = vsub.s32 %v3181, %v3183
        %v3185 = vrot.slane %v3178, %v3184
        %3186 = vrot.lane.b32.xlu0 %v3185, 112
        %v3187 = vpop.permute.xlu0 %3186
        %vm3189 = vcmp.ge.s32.totalorder %v3026, 112
        %vm3190 = vcmp.lt.s32.totalorder %v3026, 128
        %vm3191 = vmand %vm3189, %vm3190
        %3192 = vst.msk [vmem:[#allocation6] sm:$0x1] %vm3191, %v3187
        %v3193 = vld [vmem:[%s3123 + $0x3] sm:$0x1]
        %3194 = vst.msk [vmem:[#allocation6 + $0x1] sm:$0x1] %vm3029, %v3193
        %v3195 = vld [vmem:[%s3123 + $0x4] sm:$0x1]
        %v3198 = vunpack.c.l.s4 1966171168
        %v3199 = vunpack.c.0.s8 %v3198
        %v3200 = vlaneseq
        %v3201 = vshrl.u32 %v3200, 7
        %v3202 = vsub.s32 %v3199, %v3201
        %v3203 = vrot.slane %v3195, %v3202
        %v3205 = vunpack.c.l.s4 1966171168
        %v3206 = vunpack.c.0.s8 %v3205
        %v3207 = vlaneseq
        %v3208 = vshrl.u32 %v3207, 7
        %v3209 = vsub.s32 %v3206, %v3208
        %v3210 = vrot.slane %v3203, %v3209
        %3211 = vrot.lane.b32.xlu0 %v3210, 16
        %v3212 = vpop.permute.xlu0 %3211
        %3214 = vst.msk [vmem:[#allocation6 + $0x1] sm:$0x1] %vm3052, %v3212
        %s3215 = scalar_lea.vmem [#allocation3], 16
        %v3216 = vld [vmem:[%s3215] sm:$0x1]
        %v3219 = vunpack.c.l.s4 1966171168
        %v3220 = vunpack.c.0.s8 %v3219
        %v3221 = vlaneseq
        %v3222 = vshrl.u32 %v3221, 7
        %v3223 = vsub.s32 %v3220, %v3222
        %v3224 = vrot.slane %v3216, %v3223
        %v3226 = vunpack.c.l.s4 1966171168
        %v3227 = vunpack.c.0.s8 %v3226
        %v3228 = vlaneseq
        %v3229 = vshrl.u32 %v3228, 7
        %v3230 = vsub.s32 %v3227, %v3229
        %v3231 = vrot.slane %v3224, %v3230
        %3232 = vrot.lane.b32.xlu0 %v3231, 32
        %v3233 = vpop.permute.xlu0 %3232
        %3235 = vst.msk [vmem:[#allocation6 + $0x1] sm:$0x1] %vm3075, %v3233
        %v3236 = vld [vmem:[%s3215 + $0x1] sm:$0x1]
        %v3239 = vunpack.c.l.s4 1966171168
        %v3240 = vunpack.c.0.s8 %v3239
        %v3241 = vlaneseq
        %v3242 = vshrl.u32 %v3241, 7
        %v3243 = vsub.s32 %v3240, %v3242
        %v3244 = vrot.slane %v3236, %v3243
        %v3246 = vunpack.c.l.s4 1966171168
        %v3247 = vunpack.c.0.s8 %v3246
        %v3248 = vlaneseq
        %v3249 = vshrl.u32 %v3248, 7
        %v3250 = vsub.s32 %v3247, %v3249
        %v3251 = vrot.slane %v3244, %v3250
        %3252 = vrot.lane.b32.xlu0 %v3251, 48
        %v3253 = vpop.permute.xlu0 %3252
        %3255 = vst.msk [vmem:[#allocation6 + $0x1] sm:$0x1] %vm3098, %v3253
        %v3256 = vld [vmem:[%s3215 + $0x2] sm:$0x1]
        %v3259 = vunpack.c.l.s4 1966171168
        %v3260 = vunpack.c.0.s8 %v3259
        %v3261 = vlaneseq
        %v3262 = vshrl.u32 %v3261, 7
        %v3263 = vsub.s32 %v3260, %v3262
        %v3264 = vrot.slane %v3256, %v3263
        %v3266 = vunpack.c.l.s4 1966171168
        %v3267 = vunpack.c.0.s8 %v3266
        %v3268 = vlaneseq
        %v3269 = vshrl.u32 %v3268, 7
        %v3270 = vsub.s32 %v3267, %v3269
        %v3271 = vrot.slane %v3264, %v3270
        %3272 = vrot.lane.b32.xlu0 %v3271, 64
        %v3273 = vpop.permute.xlu0 %3272
        %3275 = vst.msk [vmem:[#allocation6 + $0x1] sm:$0x1] %vm3121, %v3273
        %v3276 = vld [vmem:[%s3215 + $0x3] sm:$0x1]
        %v3279 = vunpack.c.l.s4 1966171168
        %v3280 = vunpack.c.0.s8 %v3279
        %v3281 = vlaneseq
        %v3282 = vshrl.u32 %v3281, 7
        %v3283 = vsub.s32 %v3280, %v3282
        %v3284 = vrot.slane %v3276, %v3283
        %v3286 = vunpack.c.l.s4 1966171168
        %v3287 = vunpack.c.0.s8 %v3286
        %v3288 = vlaneseq
        %v3289 = vshrl.u32 %v3288, 7
        %v3290 = vsub.s32 %v3287, %v3289
        %v3291 = vrot.slane %v3284, %v3290
        %3292 = vrot.lane.b32.xlu0 %v3291, 80
        %v3293 = vpop.permute.xlu0 %3292
        %3295 = vst.msk [vmem:[#allocation6 + $0x1] sm:$0x1] %vm3145, %v3293
        %v3296 = vld [vmem:[%s3215 + $0x4] sm:$0x1]
        %v3299 = vunpack.c.l.s4 1966171168
        %v3300 = vunpack.c.0.s8 %v3299
        %v3301 = vlaneseq
        %v3302 = vshrl.u32 %v3301, 7
        %v3303 = vsub.s32 %v3300, %v3302
        %v3304 = vrot.slane %v3296, %v3303
        %v3306 = vunpack.c.l.s4 1966171168
        %v3307 = vunpack.c.0.s8 %v3306
        %v3308 = vlaneseq
        %v3309 = vshrl.u32 %v3308, 7
        %v3310 = vsub.s32 %v3307, %v3309
        %v3311 = vrot.slane %v3304, %v3310
        %3312 = vrot.lane.b32.xlu0 %v3311, 96
        %v3313 = vpop.permute.xlu0 %3312
        %3315 = vst.msk [vmem:[#allocation6 + $0x1] sm:$0x1] %vm3168, %v3313
        %s3316 = scalar_lea.vmem [#allocation3], 24
        %v3317 = vld [vmem:[%s3316] sm:$0x1]
        %v3320 = vunpack.c.l.s4 1966171168
        %v3321 = vunpack.c.0.s8 %v3320
        %v3322 = vlaneseq
        %v3323 = vshrl.u32 %v3322, 7
        %v3324 = vsub.s32 %v3321, %v3323
        %v3325 = vrot.slane %v3317, %v3324
        %v3327 = vunpack.c.l.s4 1966171168
        %v3328 = vunpack.c.0.s8 %v3327
        %v3329 = vlaneseq
        %v3330 = vshrl.u32 %v3329, 7
        %v3331 = vsub.s32 %v3328, %v3330
        %v3332 = vrot.slane %v3325, %v3331
        %3333 = vrot.lane.b32.xlu0 %v3332, 112
        %v3334 = vpop.permute.xlu0 %3333
        %3336 = vst.msk [vmem:[#allocation6 + $0x1] sm:$0x1] %vm3191, %v3334
        %v3337 = vld [vmem:[%s3316 + $0x1] sm:$0x1]
        %3338 = vst.msk [vmem:[#allocation6 + $0x2] sm:$0x1] %vm3029, %v3337
        %v3339 = vld [vmem:[%s3316 + $0x2] sm:$0x1]
        %v3342 = vunpack.c.l.s4 1966171168
        %v3343 = vunpack.c.0.s8 %v3342
        %v3344 = vlaneseq
        %v3345 = vshrl.u32 %v3344, 7
        %v3346 = vsub.s32 %v3343, %v3345
        %v3347 = vrot.slane %v3339, %v3346
        %v3349 = vunpack.c.l.s4 1966171168
        %v3350 = vunpack.c.0.s8 %v3349
        %v3351 = vlaneseq
        %v3352 = vshrl.u32 %v3351, 7
        %v3353 = vsub.s32 %v3350, %v3352
        %v3354 = vrot.slane %v3347, %v3353
        %3355 = vrot.lane.b32.xlu0 %v3354, 16
        %v3356 = vpop.permute.xlu0 %3355
        %3358 = vst.msk [vmem:[#allocation6 + $0x2] sm:$0x1] %vm3052, %v3356
        %v3359 = vld [vmem:[%s3316 + $0x3] sm:$0x1]
        %v3362 = vunpack.c.l.s4 1966171168
        %v3363 = vunpack.c.0.s8 %v3362
        %v3364 = vlaneseq
        %v3365 = vshrl.u32 %v3364, 7
        %v3366 = vsub.s32 %v3363, %v3365
        %v3367 = vrot.slane %v3359, %v3366
        %v3369 = vunpack.c.l.s4 1966171168
        %v3370 = vunpack.c.0.s8 %v3369
        %v3371 = vlaneseq
        %v3372 = vshrl.u32 %v3371, 7
        %v3373 = vsub.s32 %v3370, %v3372
        %v3374 = vrot.slane %v3367, %v3373
        %3375 = vrot.lane.b32.xlu0 %v3374, 32
        %v3376 = vpop.permute.xlu0 %3375
        %3378 = vst.msk [vmem:[#allocation6 + $0x2] sm:$0x1] %vm3075, %v3376
        %v3379 = vld [vmem:[%s3316 + $0x4] sm:$0x1]
        %v3382 = vunpack.c.l.s4 1966171168
        %v3383 = vunpack.c.0.s8 %v3382
        %v3384 = vlaneseq
        %v3385 = vshrl.u32 %v3384, 7
        %v3386 = vsub.s32 %v3383, %v3385
        %v3387 = vrot.slane %v3379, %v3386
        %v3389 = vunpack.c.l.s4 1966171168
        %v3390 = vunpack.c.0.s8 %v3389
        %v3391 = vlaneseq
        %v3392 = vshrl.u32 %v3391, 7
        %v3393 = vsub.s32 %v3390, %v3392
        %v3394 = vrot.slane %v3387, %v3393
        %3395 = vrot.lane.b32.xlu0 %v3394, 48
        %v3396 = vpop.permute.xlu0 %3395
        %3398 = vst.msk [vmem:[#allocation6 + $0x2] sm:$0x1] %vm3098, %v3396
        %s3399 = scalar_lea.vmem [#allocation3], 32
        %v3400 = vld [vmem:[%s3399] sm:$0x1]
        %v3403 = vunpack.c.l.s4 1966171168
        %v3404 = vunpack.c.0.s8 %v3403
        %v3405 = vlaneseq
        %v3406 = vshrl.u32 %v3405, 7
        %v3407 = vsub.s32 %v3404, %v3406
        %v3408 = vrot.slane %v3400, %v3407
        %v3410 = vunpack.c.l.s4 1966171168
        %v3411 = vunpack.c.0.s8 %v3410
        %v3412 = vlaneseq
        %v3413 = vshrl.u32 %v3412, 7
        %v3414 = vsub.s32 %v3411, %v3413
        %v3415 = vrot.slane %v3408, %v3414
        %3416 = vrot.lane.b32.xlu0 %v3415, 64
        %v3417 = vpop.permute.xlu0 %3416
        %3419 = vst.msk [vmem:[#allocation6 + $0x2] sm:$0x1] %vm3121, %v3417
        %v3420 = vld [vmem:[%s3399 + $0x1] sm:$0x1]
        %v3423 = vunpack.c.l.s4 1966171168
        %v3424 = vunpack.c.0.s8 %v3423
        %v3425 = vlaneseq
        %v3426 = vshrl.u32 %v3425, 7
        %v3427 = vsub.s32 %v3424, %v3426
        %v3428 = vrot.slane %v3420, %v3427
        %v3430 = vunpack.c.l.s4 1966171168
        %v3431 = vunpack.c.0.s8 %v3430
        %v3432 = vlaneseq
        %v3433 = vshrl.u32 %v3432, 7
        %v3434 = vsub.s32 %v3431, %v3433
        %v3435 = vrot.slane %v3428, %v3434
        %3436 = vrot.lane.b32.xlu0 %v3435, 80
        %v3437 = vpop.permute.xlu0 %3436
        %3439 = vst.msk [vmem:[#allocation6 + $0x2] sm:$0x1] %vm3145, %v3437
        %v3440 = vld [vmem:[%s3399 + $0x2] sm:$0x1]
        %v3443 = vunpack.c.l.s4 1966171168
        %v3444 = vunpack.c.0.s8 %v3443
        %v3445 = vlaneseq
        %v3446 = vshrl.u32 %v3445, 7
        %v3447 = vsub.s32 %v3444, %v3446
        %v3448 = vrot.slane %v3440, %v3447
        %v3450 = vunpack.c.l.s4 1966171168
        %v3451 = vunpack.c.0.s8 %v3450
        %v3452 = vlaneseq
        %v3453 = vshrl.u32 %v3452, 7
        %v3454 = vsub.s32 %v3451, %v3453
        %v3455 = vrot.slane %v3448, %v3454
        %3456 = vrot.lane.b32.xlu0 %v3455, 96
        %v3457 = vpop.permute.xlu0 %3456
        %3459 = vst.msk [vmem:[#allocation6 + $0x2] sm:$0x1] %vm3168, %v3457
        %v3460 = vld [vmem:[%s3399 + $0x3] sm:$0x1]
        %v3463 = vunpack.c.l.s4 1966171168
        %v3464 = vunpack.c.0.s8 %v3463
        %v3465 = vlaneseq
        %v3466 = vshrl.u32 %v3465, 7
        %v3467 = vsub.s32 %v3464, %v3466
        %v3468 = vrot.slane %v3460, %v3467
        %v3470 = vunpack.c.l.s4 1966171168
        %v3471 = vunpack.c.0.s8 %v3470
        %v3472 = vlaneseq
        %v3473 = vshrl.u32 %v3472, 7
        %v3474 = vsub.s32 %v3471, %v3473
        %v3475 = vrot.slane %v3468, %v3474
        %3476 = vrot.lane.b32.xlu0 %v3475, 112
        %v3477 = vpop.permute.xlu0 %3476
        %3479 = vst.msk [vmem:[#allocation6 + $0x2] sm:$0x1] %vm3191, %v3477
        %v3480 = vld [vmem:[%s3399 + $0x4] sm:$0x1]
        %3481 = vst.msk [vmem:[#allocation6 + $0x3] sm:$0x1] %vm3029, %v3480
        %v3482 = vld [vmem:[#allocation6] sm:$0xf]
        %v3484 = vlaneseq
        %v3485 = vshrl.u32 %v3484, 7
        %v3486 = vsub.s32 0, %v3485
        %v3487 = vrot.slane %v3482, %v3486
        %v3488 = vlaneseq
        %v3489 = vshrl.u32 %v3488, 7
        %v3490 = vsub.s32 1, %v3489
        %v3491 = vrot.slane %v3482, %v3490
        %v3492 = vlaneseq
        %v3493 = vshrl.u32 %v3492, 7
        %v3494 = vsub.s32 2, %v3493
        %v3495 = vrot.slane %v3482, %v3494
        %v3496 = vlaneseq
        %v3497 = vshrl.u32 %v3496, 7
        %v3498 = vsub.s32 3, %v3497
        %v3499 = vrot.slane %v3482, %v3498
        %v3504 = vpack.c.bf16 %v3487, %v3487
        %v3505 = vpack.c.bf16 %v3491, %v3491
        %v3506 = vpack.c.bf16 %v3495, %v3495
        %v3507 = vpack.c.bf16 %v3499, %v3499
        %v3508 = vld [vmem:[%s5] sm:$0xf]
        %v3509 = vld [vmem:[%s5 + $0x4] sm:$0xf]
        %v3510 = vld [vmem:[%s5 + $0x8] sm:$0xf]
        %v3511 = vld [vmem:[%s5 + $0xc] sm:$0xf]
        %v3512 = vld [vmem:[%s5 + $0x10] sm:$0xf]
        %v3513 = vld [vmem:[%s5 + $0x14] sm:$0xf]
        %v3514 = vld [vmem:[%s5 + $0x18] sm:$0xf]
        %v3515 = vld [vmem:[%s5 + $0x1c] sm:$0xf]
        %v3516 = vld [vmem:[%s5 + $0x20] sm:$0xf]
        %v3517 = vld [vmem:[%s5 + $0x24] sm:$0xf]
        %v3518 = vld [vmem:[%s5 + $0x28] sm:$0xf]
        %v3519 = vld [vmem:[%s5 + $0x2c] sm:$0xf]
        %v3520 = vld [vmem:[%s5 + $0x30] sm:$0xf]
        %v3521 = vld [vmem:[%s5 + $0x34] sm:$0xf]
        %v3522 = vld [vmem:[%s5 + $0x38] sm:$0xf]
        %v3523 = vld [vmem:[%s5 + $0x3c] sm:$0xf]
        %v3524 = vld [vmem:[%s5 + $0x40] sm:$0xf]
        %v3525 = vld [vmem:[%s5 + $0x44] sm:$0xf]
        %v3526 = vld [vmem:[%s5 + $0x48] sm:$0xf]
        %v3527 = vld [vmem:[%s5 + $0x4c] sm:$0xf]
        %v3528 = vld [vmem:[%s5 + $0x50] sm:$0xf]
        %v3529 = vld [vmem:[%s5 + $0x54] sm:$0xf]
        %v3530 = vld [vmem:[%s5 + $0x58] sm:$0xf]
        %v3531 = vld [vmem:[%s5 + $0x5c] sm:$0xf]
        %v3532 = vld [vmem:[%s5 + $0x60] sm:$0xf]
        %v3533 = vld [vmem:[%s5 + $0x64] sm:$0xf]
        %v3534 = vld [vmem:[%s5 + $0x68] sm:$0xf]
        %v3535 = vld [vmem:[%s5 + $0x6c] sm:$0xf]
        %v3536 = vld [vmem:[%s5 + $0x70] sm:$0xf]
        %v3537 = vld [vmem:[%s5 + $0x74] sm:$0xf]
        %v3538 = vld [vmem:[%s5 + $0x78] sm:$0xf]
        %v3539 = vld [vmem:[%s5 + $0x7c] sm:$0xf]
        %v3540 = vld [vmem:[%s5 + $0x80] sm:$0xf]
        %v3541 = vld [vmem:[%s5 + $0x84] sm:$0xf]
        %v3542 = vld [vmem:[%s5 + $0x88] sm:$0xf]
        %v3543 = vld [vmem:[%s5 + $0x8c] sm:$0xf]
        %v3544 = vld [vmem:[%s5 + $0x90] sm:$0xf]
        %v3545 = vld [vmem:[%s5 + $0x94] sm:$0xf]
        %v3546 = vld [vmem:[%s5 + $0x98] sm:$0xf]
        %v3547 = vld [vmem:[%s5 + $0x9c] sm:$0xf]
        %v3548 = vld [vmem:[%s5 + $0xa0] sm:$0xf]
        %v3549 = vld [vmem:[%s5 + $0xa4] sm:$0xf]
        %v3550 = vld [vmem:[%s5 + $0xa8] sm:$0xf]
        %v3551 = vld [vmem:[%s5 + $0xac] sm:$0xf]
        %v3552 = vld [vmem:[%s5 + $0xb0] sm:$0xf]
        %v3553 = vld [vmem:[%s5 + $0xb4] sm:$0xf]
        %v3554 = vld [vmem:[%s5 + $0xb8] sm:$0xf]
        %v3555 = vld [vmem:[%s5 + $0xbc] sm:$0xf]
        %v3556 = vld [vmem:[%s5 + $0xc0] sm:$0xf]
        %v3557 = vld [vmem:[%s5 + $0xc4] sm:$0xf]
        %v3558 = vld [vmem:[%s6] sm:$0x1]
        %v3609 = vunpack.c.l.b16 %v3508
        %v3610 = vunpack.c.l.b16 %v3509
        %v3611 = vunpack.c.l.b16 %v3510
        %v3612 = vunpack.c.l.b16 %v3511
        %v3613 = vunpack.c.l.b16 %v3512
        %v3614 = vunpack.c.l.b16 %v3513
        %v3615 = vunpack.c.l.b16 %v3514
        %v3616 = vunpack.c.l.b16 %v3515
        %v3617 = vunpack.c.l.b16 %v3516
        %v3618 = vunpack.c.l.b16 %v3517
        %v3619 = vunpack.c.l.b16 %v3518
        %v3620 = vunpack.c.l.b16 %v3519
        %v3621 = vunpack.c.l.b16 %v3520
        %v3622 = vunpack.c.l.b16 %v3521
        %v3623 = vunpack.c.l.b16 %v3522
        %v3624 = vunpack.c.l.b16 %v3523
        %v3625 = vunpack.c.l.b16 %v3524
        %v3626 = vunpack.c.l.b16 %v3525
        %v3627 = vunpack.c.l.b16 %v3526
        %v3628 = vunpack.c.l.b16 %v3527
        %v3629 = vunpack.c.l.b16 %v3528
        %v3630 = vunpack.c.l.b16 %v3529
        %v3631 = vunpack.c.l.b16 %v3530
        %v3632 = vunpack.c.l.b16 %v3531
        %v3633 = vunpack.c.l.b16 %v3532
        %v3634 = vunpack.c.l.b16 %v3533
        %v3635 = vunpack.c.l.b16 %v3534
        %v3636 = vunpack.c.l.b16 %v3535
        %v3637 = vunpack.c.l.b16 %v3536
        %v3638 = vunpack.c.l.b16 %v3537
        %v3639 = vunpack.c.l.b16 %v3538
        %v3640 = vunpack.c.l.b16 %v3539
        %v3641 = vunpack.c.l.b16 %v3540
        %v3642 = vunpack.c.l.b16 %v3541
        %v3643 = vunpack.c.l.b16 %v3542
        %v3644 = vunpack.c.l.b16 %v3543
        %v3645 = vunpack.c.l.b16 %v3544
        %v3646 = vunpack.c.l.b16 %v3545
        %v3647 = vunpack.c.l.b16 %v3546
        %v3648 = vunpack.c.l.b16 %v3547
        %v3649 = vunpack.c.l.b16 %v3548
        %v3650 = vunpack.c.l.b16 %v3549
        %v3651 = vunpack.c.l.b16 %v3550
        %v3652 = vunpack.c.l.b16 %v3551
        %v3653 = vunpack.c.l.b16 %v3552
        %v3654 = vunpack.c.l.b16 %v3553
        %v3655 = vunpack.c.l.b16 %v3554
        %v3656 = vunpack.c.l.b16 %v3555
        %v3657 = vunpack.c.l.b16 %v3556
        %v3658 = vunpack.c.l.b16 %v3557
        %v3659 = vpack.c.b16 %v3610, %v3609
        %v3660 = vpack.c.b16 %v3612, %v3611
        %v3661 = vpack.c.b16 %v3614, %v3613
        %v3662 = vpack.c.b16 %v3616, %v3615
        %v3663 = vpack.c.b16 %v3618, %v3617
        %v3664 = vpack.c.b16 %v3620, %v3619
        %v3665 = vpack.c.b16 %v3622, %v3621
        %v3666 = vpack.c.b16 %v3624, %v3623
        %v3667 = vpack.c.b16 %v3626, %v3625
        %v3668 = vpack.c.b16 %v3628, %v3627
        %v3669 = vpack.c.b16 %v3630, %v3629
        %v3670 = vpack.c.b16 %v3632, %v3631
        %v3671 = vpack.c.b16 %v3634, %v3633
        %v3672 = vpack.c.b16 %v3636, %v3635
        %v3673 = vpack.c.b16 %v3638, %v3637
        %v3674 = vpack.c.b16 %v3640, %v3639
        %v3675 = vpack.c.b16 %v3642, %v3641
        %v3676 = vpack.c.b16 %v3644, %v3643
        %v3677 = vpack.c.b16 %v3646, %v3645
        %v3678 = vpack.c.b16 %v3648, %v3647
        %v3679 = vpack.c.b16 %v3650, %v3649
        %v3680 = vpack.c.b16 %v3652, %v3651
        %v3681 = vpack.c.b16 %v3654, %v3653
        %v3682 = vpack.c.b16 %v3656, %v3655
        %v3683 = vpack.c.b16 %v3658, %v3657
        %vm3709 = vcmask 130048
        %v3711 = vsel %vm3709, %v3507, 0
        %3713 = vmatprep.subr.bf16.mxu0 0
        %3714 = vmatpush1.bf16.msra.mxu0 %v3659
        %3715 = vmatprep.subr.bf16.mxu0 0
        %3716 = vmatpush1.bf16.msra.mxu0 %v3660
        %3717 = vmatprep.subr.bf16.mxu0 0
        %3718 = vmatpush1.bf16.msra.mxu0 %v3661
        %3719 = vmatprep.subr.bf16.mxu0 0
        %3720 = vmatpush1.bf16.msra.mxu0 %v3662
        %3721 = vmatprep.subr.bf16.mxu0 0
        %3722 = vmatpush1.bf16.msra.mxu0 %v3663
        %3723 = vmatprep.subr.bf16.mxu0 0
        %3724 = vmatpush1.bf16.msra.mxu0 %v3664
        %3725 = vmatprep.subr.bf16.mxu0 0
        %3726 = vmatpush1.bf16.msra.mxu0 %v3665
        %3727 = vmatprep.subr.bf16.mxu0 0
        %3728 = vmatpush1.bf16.msra.mxu0 %v3666
        %3729 = vmatprep.subr.bf16.mxu0 0
        %3730 = vmatpush1.bf16.msra.mxu0 %v3667
        %3731 = vmatprep.subr.bf16.mxu0 0
        %3732 = vmatpush1.bf16.msra.mxu0 %v3668
        %3733 = vmatprep.subr.bf16.mxu0 0
        %3734 = vmatpush1.bf16.msra.mxu0 %v3669
        %3735 = vmatprep.subr.bf16.mxu0 0
        %3736 = vmatpush1.bf16.msra.mxu0 %v3670
        %3737 = vmatprep.subr.bf16.mxu0 0
        %3738 = vmatpush1.bf16.msra.mxu0 %v3671
        %3739 = vmatprep.subr.bf16.mxu0 0
        %3740 = vmatpush1.bf16.msra.mxu0 %v3672
        %3741 = vmatprep.subr.bf16.mxu0 0
        %3742 = vmatpush1.bf16.msra.mxu0 %v3673
        %3743 = vmatprep.subr.bf16.mxu0 0
        %3744 = vmatpush1.bf16.msra.mxu0 %v3674
        %3745 = vmatprep.mubr.bf16.mxu0 %v3505
        %3746 = vmatmul.mubr.bf16.gmra.mrb[0].mxu0 %v3504
        %v3747 = vpop.f32.mrb[0].mxu0
        %v3748 = vadd.f32 %v3558, %v3747
        %v3749 = vpop.f32.mrb[0].mxu0
        %v3750 = vpop.f32.mrb[0].mxu0
        %v3751 = vpop.f32.mrb[0].mxu0
        %3752 = vdwg.mxu0
        %3753 = vmatprep.subr.bf16.mxu0 0
        %3754 = vmatpush1.bf16.msra.mxu0 %v3675
        %3755 = vmatprep.subr.bf16.mxu0 0
        %3756 = vmatpush1.bf16.msra.mxu0 %v3676
        %3757 = vmatprep.subr.bf16.mxu0 0
        %3758 = vmatpush1.bf16.msra.mxu0 %v3677
        %3759 = vmatprep.subr.bf16.mxu0 0
        %3760 = vmatpush1.bf16.msra.mxu0 %v3678
        %3761 = vmatprep.subr.bf16.mxu0 0
        %3762 = vmatpush1.bf16.msra.mxu0 %v3679
        %3763 = vmatprep.subr.bf16.mxu0 0
        %3764 = vmatpush1.bf16.msra.mxu0 %v3680
        %3765 = vmatprep.subr.bf16.mxu0 0
        %3766 = vmatpush1.bf16.msra.mxu0 %v3681
        %3767 = vmatprep.subr.bf16.mxu0 0
        %3768 = vmatpush1.bf16.msra.mxu0 %v3682
        %3769 = vmatprep.subr.bf16.mxu0 0
        %3770 = vmatpush1.bf16.msra.mxu0 %v3683
        %3771 = vmatprep.subr.bf16.mxu0 0
        %3772 = vmatpush1.bf16.msra.mxu0 0
        %3773 = vmatprep.subr.bf16.mxu0 0
        %3774 = vmatpush1.bf16.msra.mxu0 0
        %3775 = vmatprep.subr.bf16.mxu0 0
        %3776 = vmatpush1.bf16.msra.mxu0 0
        %3777 = vmatprep.subr.bf16.mxu0 0
        %3778 = vmatpush1.bf16.msra.mxu0 0
        %3779 = vmatprep.subr.bf16.mxu0 0
        %3780 = vmatpush1.bf16.msra.mxu0 0
        %3781 = vmatprep.subr.bf16.mxu0 0
        %3782 = vmatpush1.bf16.msra.mxu0 0
        %3783 = vmatprep.subr.bf16.mxu0 0
        %3784 = vmatpush1.bf16.msra.mxu0 0
        %3785 = vmatprep.mubr.bf16.mxu0 %v3711
        %3786 = vmatmul.mubr.bf16.gmra.mrb[0].mxu0 %v3506
        %v3787 = vpop.f32.mrb[0].mxu0
        %v3788 = vadd.f32 %v3748, %v3787
        %v3789 = vpop.f32.mrb[0].mxu0
        %v3790 = vpop.f32.mrb[0].mxu0
        %v3791 = vpop.f32.mrb[0].mxu0
        %3792 = vdwg.mxu0
        %v3793 = vmax.f32 %v3788, 0.0
        %v3794 = vpack.c.bf16 %v3793, %v3793
        %v3795 = vld [vmem:[%s7] sm:$0xf]
        %v3796 = vld [vmem:[%s7 + $0x4] sm:$0xf]
        %v3797 = vld [vmem:[%s7 + $0x8] sm:$0xf]
        %v3798 = vld [vmem:[%s7 + $0xc] sm:$0xf]
        %v3799 = vld [vmem:[%s7 + $0x10] sm:$0xf]
        %v3800 = vld [vmem:[%s7 + $0x14] sm:$0xf]
        %v3801 = vld [vmem:[%s7 + $0x18] sm:$0xf]
        %v3802 = vld [vmem:[%s7 + $0x1c] sm:$0xf]
        %v3803 = vld [vmem:[%s7 + $0x20] sm:$0xf]
        %v3804 = vld [vmem:[%s7 + $0x24] sm:$0xf]
        %v3805 = vld [vmem:[%s7 + $0x28] sm:$0xf]
        %v3806 = vld [vmem:[%s7 + $0x2c] sm:$0xf]
        %v3807 = vld [vmem:[%s7 + $0x30] sm:$0xf]
        %v3808 = vld [vmem:[%s7 + $0x34] sm:$0xf]
        %v3809 = vld [vmem:[%s7 + $0x38] sm:$0xf]
        %v3810 = vld [vmem:[%s7 + $0x3c] sm:$0xf]
        %v3811 = vld [vmem:[%s8] sm:$0x1]
        %v3828 = vunpack.c.l.b16 %v3795
        %v3829 = vunpack.c.l.b16 %v3796
        %v3830 = vunpack.c.l.b16 %v3797
        %v3831 = vunpack.c.l.b16 %v3798
        %v3832 = vunpack.c.l.b16 %v3799
        %v3833 = vunpack.c.l.b16 %v3800
        %v3834 = vunpack.c.l.b16 %v3801
        %v3835 = vunpack.c.l.b16 %v3802
        %v3836 = vunpack.c.l.b16 %v3803
        %v3837 = vunpack.c.l.b16 %v3804
        %v3838 = vunpack.c.l.b16 %v3805
        %v3839 = vunpack.c.l.b16 %v3806
        %v3840 = vunpack.c.l.b16 %v3807
        %v3841 = vunpack.c.l.b16 %v3808
        %v3842 = vunpack.c.l.b16 %v3809
        %v3843 = vunpack.c.l.b16 %v3810
        %v3844 = vpack.c.b16 %v3829, %v3828
        %v3845 = vpack.c.b16 %v3831, %v3830
        %v3846 = vpack.c.b16 %v3833, %v3832
        %v3847 = vpack.c.b16 %v3835, %v3834
        %v3848 = vpack.c.b16 %v3837, %v3836
        %v3849 = vpack.c.b16 %v3839, %v3838
        %v3850 = vpack.c.b16 %v3841, %v3840
        %v3851 = vpack.c.b16 %v3843, %v3842
        %3860 = vmatprep.subr.bf16.mxu0 0
        %3861 = vmatpush1.bf16.msra.mxu0 %v3844
        %3862 = vmatprep.subr.bf16.mxu0 0
        %3863 = vmatpush1.bf16.msra.mxu0 %v3845
        %3864 = vmatprep.subr.bf16.mxu0 0
        %3865 = vmatpush1.bf16.msra.mxu0 %v3846
        %3866 = vmatprep.subr.bf16.mxu0 0
        %3867 = vmatpush1.bf16.msra.mxu0 %v3847
        %3868 = vmatprep.subr.bf16.mxu0 0
        %3869 = vmatpush1.bf16.msra.mxu0 %v3848
        %3870 = vmatprep.subr.bf16.mxu0 0
        %3871 = vmatpush1.bf16.msra.mxu0 %v3849
        %3872 = vmatprep.subr.bf16.mxu0 0
        %3873 = vmatpush1.bf16.msra.mxu0 %v3850
        %3874 = vmatprep.subr.bf16.mxu0 0
        %3875 = vmatpush1.bf16.msra.mxu0 %v3851
        %3876 = vmatprep.subr.bf16.mxu0 0
        %3877 = vmatpush1.bf16.msra.mxu0 0
        %3878 = vmatprep.subr.bf16.mxu0 0
        %3879 = vmatpush1.bf16.msra.mxu0 0
        %3880 = vmatprep.subr.bf16.mxu0 0
        %3881 = vmatpush1.bf16.msra.mxu0 0
        %3882 = vmatprep.subr.bf16.mxu0 0
        %3883 = vmatpush1.bf16.msra.mxu0 0
        %3884 = vmatprep.subr.bf16.mxu0 0
        %3885 = vmatpush1.bf16.msra.mxu0 0
        %3886 = vmatprep.subr.bf16.mxu0 0
        %3887 = vmatpush1.bf16.msra.mxu0 0
        %3888 = vmatprep.subr.bf16.mxu0 0
        %3889 = vmatpush1.bf16.msra.mxu0 0
        %3890 = vmatprep.subr.bf16.mxu0 0
        %3891 = vmatpush1.bf16.msra.mxu0 0
        %3892 = vmatprep.mubr.bf16.mxu0 0
        %3893 = vmatmul.mubr.bf16.gmra.mrb[0].mxu0 %v3794
        %v3894 = vpop.f32.mrb[0].mxu0
        %v3895 = vadd.f32 %v3811, %v3894
        %v3896 = vpop.f32.mrb[0].mxu0
        %v3897 = vpop.f32.mrb[0].mxu0
        %v3898 = vpop.f32.mrb[0].mxu0
        %3899 = vdwg.mxu0
        %v3900 = vmax.f32 %v3895, 0.0
        %v3901 = vpack.c.bf16 %v3900, %v3900
        %v3902 = vld [vmem:[%s9] sm:$0xf]
        %v3903 = vld [vmem:[%s9 + $0x4] sm:$0xf]
        %v3904 = vld [vmem:[%s9 + $0x8] sm:$0xf]
        %v3905 = vld [vmem:[%s9 + $0xc] sm:$0xf]
        %v3906 = vld [vmem:[%s9 + $0x10] sm:$0xf]
        %v3907 = vld [vmem:[%s9 + $0x14] sm:$0xf]
        %v3908 = vld [vmem:[%s9 + $0x18] sm:$0xf]
        %v3909 = vld [vmem:[%s9 + $0x1c] sm:$0xf]
        %v3910 = vld [vmem:[%s9 + $0x20] sm:$0xf]
        %v3911 = vld [vmem:[%s9 + $0x24] sm:$0xf]
        %v3912 = vld [vmem:[%s9 + $0x28] sm:$0xf]
        %v3913 = vld [vmem:[%s9 + $0x2c] sm:$0xf]
        %v3914 = vld [vmem:[%s9 + $0x30] sm:$0xf]
        %v3915 = vld [vmem:[%s9 + $0x34] sm:$0xf]
        %v3916 = vld [vmem:[%s9 + $0x38] sm:$0xf]
        %v3917 = vld [vmem:[%s9 + $0x3c] sm:$0xf]
        %v3918 = vld [vmem:[%s10] sm:$0x1]
        %v3935 = vunpack.c.l.b16 %v3902
        %v3936 = vunpack.c.l.b16 %v3903
        %v3937 = vunpack.c.l.b16 %v3904
        %v3938 = vunpack.c.l.b16 %v3905
        %v3939 = vunpack.c.l.b16 %v3906
        %v3940 = vunpack.c.l.b16 %v3907
        %v3941 = vunpack.c.l.b16 %v3908
        %v3942 = vunpack.c.l.b16 %v3909
        %v3943 = vunpack.c.l.b16 %v3910
        %v3944 = vunpack.c.l.b16 %v3911
        %v3945 = vunpack.c.l.b16 %v3912
        %v3946 = vunpack.c.l.b16 %v3913
        %v3947 = vunpack.c.l.b16 %v3914
        %v3948 = vunpack.c.l.b16 %v3915
        %v3949 = vunpack.c.l.b16 %v3916
        %v3950 = vunpack.c.l.b16 %v3917
        %v3951 = vpack.c.b16 %v3936, %v3935
        %v3952 = vpack.c.b16 %v3938, %v3937
        %v3953 = vpack.c.b16 %v3940, %v3939
        %v3954 = vpack.c.b16 %v3942, %v3941
        %v3955 = vpack.c.b16 %v3944, %v3943
        %v3956 = vpack.c.b16 %v3946, %v3945
        %v3957 = vpack.c.b16 %v3948, %v3947
        %v3958 = vpack.c.b16 %v3950, %v3949
        %3967 = vmatprep.subr.bf16.mxu0 0
        %3968 = vmatpush1.bf16.msra.mxu0 %v3951
        %3969 = vmatprep.subr.bf16.mxu0 0
        %3970 = vmatpush1.bf16.msra.mxu0 %v3952
        %3971 = vmatprep.subr.bf16.mxu0 0
        %3972 = vmatpush1.bf16.msra.mxu0 %v3953
        %3973 = vmatprep.subr.bf16.mxu0 0
        %3974 = vmatpush1.bf16.msra.mxu0 %v3954
        %3975 = vmatprep.subr.bf16.mxu0 0
        %3976 = vmatpush1.bf16.msra.mxu0 %v3955
        %3977 = vmatprep.subr.bf16.mxu0 0
        %3978 = vmatpush1.bf16.msra.mxu0 %v3956
        %3979 = vmatprep.subr.bf16.mxu0 0
        %3980 = vmatpush1.bf16.msra.mxu0 %v3957
        %3981 = vmatprep.subr.bf16.mxu0 0
        %3982 = vmatpush1.bf16.msra.mxu0 %v3958
        %3983 = vmatprep.subr.bf16.mxu0 0
        %3984 = vmatpush1.bf16.msra.mxu0 0
        %3985 = vmatprep.subr.bf16.mxu0 0
        %3986 = vmatpush1.bf16.msra.mxu0 0
        %3987 = vmatprep.subr.bf16.mxu0 0
        %3988 = vmatpush1.bf16.msra.mxu0 0
        %3989 = vmatprep.subr.bf16.mxu0 0
        %3990 = vmatpush1.bf16.msra.mxu0 0
        %3991 = vmatprep.subr.bf16.mxu0 0
        %3992 = vmatpush1.bf16.msra.mxu0 0
        %3993 = vmatprep.subr.bf16.mxu0 0
        %3994 = vmatpush1.bf16.msra.mxu0 0
        %3995 = vmatprep.subr.bf16.mxu0 0
        %3996 = vmatpush1.bf16.msra.mxu0 0
        %3997 = vmatprep.subr.bf16.mxu0 0
        %3998 = vmatpush1.bf16.msra.mxu0 0
        %3999 = vmatprep.mubr.bf16.mxu0 0
        %4000 = vmatmul.mubr.bf16.gmra.mrb[0].mxu0 %v3901
        %v4001 = vpop.f32.mrb[0].mxu0
        %v4002 = vadd.f32 %v3918, %v4001
        %v4003 = vpop.f32.mrb[0].mxu0
        %v4004 = vpop.f32.mrb[0].mxu0
        %v4005 = vpop.f32.mrb[0].mxu0
        %4006 = vdwg.mxu0
        %v4007 = vmax.f32 %v4002, 0.0
        %vm4008 = vcmask 73728
        %4009 = vst.msk [vmem:[%s378] sm:$0x1] %vm4008, %v4007
        %s4010 = sand.u32 %s269, 1
        %s4011 = scalar_lea.sflag [#allocation8], %s4010
        %s4012 = sand.u32 %s269, 1
        %s4013 = scalar_lea.vmem [#allocation7], %s4012
        // Predicated region
        $region79: #{lenet_forward.1} parent=63 // pred_check
          %p4014 = pneg %p279
        $region80: #{lenet_forward.1} parent=63 // pred_check_branch
          %4016 = sbr.rel (%p4014) target = $region82
        $region81: #{lenet_forward.1} parent=63 // pred_region
          %s4018 = ssub.s32 16, 16
          %4019 = vsyncadd %s4011, %s4018
          %s4020 = smul.addr %s25, 16
          %s4021 = scalar_lea.hbm %s11, %s4020
          %s4023 = sshll.u32 %s4013, 4
          %s4024 = int_to_ptr.vmem [resolvable:$true] %s4023
          %4026 = dma.vmem_to_hbm [thread:$0]  %s4024, 16, %s4021, %s4011
        $region82: #{lenet_forward.1} parent=63 // pred_fallthru
          _
      $region64: #{lenet_forward.1} parent=5 // pred_fallthru
        _
      %p4027 = scmp.le.s32.totalorder 2, %s20
      // Predicated region
      $region83: #{lenet_forward.1} parent=5 // pred_check
        %p4028 = pneg %p4027
      $region84: #{lenet_forward.1} parent=5 // pred_check_branch
        %4030 = sbr.rel (%p4028) target = $region86
      $region85: #{lenet_forward.1} parent=5 // pred_region
        %s4031 = ssub.s32 %s20, 2
        // Predicated region
        $region87: #{lenet_forward.1} parent=85 // pred_check
          %p4032 = pneg %p285
        $region88: #{lenet_forward.1} parent=85 // pred_check_branch
          %4034 = sbr.rel (%p4032) target = $region90
        $region89: #{lenet_forward.1} parent=85 // pred_region
          %s4035 = sand.u32 %s270, 1
          %s4036 = scalar_lea.sflag [#allocation8], %s4035
          %s4037 = sand.u32 %s270, 1
          %s4038 = scalar_lea.vmem [#allocation7], %s4037
          %4039 = dma.done %s4036, 16
        $region90: #{lenet_forward.1} parent=85 // pred_fallthru
          _
      $region86: #{lenet_forward.1} parent=5 // pred_fallthru
        _
    $region6: #{lenet_forward.1} parent=1 // loop_footer
      %s24 = sadd.s32 1, %s20
    $region7: #{lenet_forward.1} parent=1 // loop_footer_branch
      %19 = sbr.rel target = $region3
    $region8: #{lenet_forward.1} parent=1 // loop_exit
      _
    %4040 = vsyncpa [#allocation8], 1
    %s4041 = scalar_lea.sflag [#allocation8], 1
    %4042 = vsyncpa %s4041, 1

</llo_original>
